<compile_context>
chip_gen: v6e
topology: v6e:2x2x1
jax: 0.10.0
libtpu: 0.0.40
codegen_flags: <defaults>
</compile_context>

<pallas_src>
import numpy as np
import jax
import jax.numpy as jnp
from jax.experimental import pallas as pl
from jax.experimental.pallas import tpu as pltpu


def _gaussian_1d(window_size: int, sigma: float) -> np.ndarray:
    """Replicates gaussian(window_size, sigma) in float32 (normalized)."""
    xs = np.arange(window_size)
    g = np.exp(-((xs - window_size // 2) ** 2) / float(2 * sigma ** 2)).astype(np.float32)
    return (g / g.sum()).astype(np.float32)


def _round_up(a: int, m: int) -> int:
    return -(-a // m) * m


def _make_ssim_kernel(WS: int, H: int, W: int, P: int, K: int, g1d: np.ndarray):
    """Kernel over one block of K*P unpadded planes per grid step.

    Inside the kernel the planes are packed K-per-row into a zero-padded,
    lane-dense slab of shape (P, Hp, K*Wp), convolved separably with the
    Gaussian window, and the block's sum(ssim_map) is written to its own
    (1, 1, 1) output block.
    """
    pad = WS // 2
    Hp = H + 2 * pad
    Wp = W + 2 * pad            # per-plane padded width == segment stride
    Lp = K * Wp                 # packed slab width
    Lh = Lp - (WS - 1)          # width after the horizontal pass
    C1 = 0.01 ** 2
    C2 = 0.03 ** 2
    taps = [float(t) for t in g1d]   # exact: taps[k] == taps[WS-1-k]

    def kernel(x1_ref, x2_ref, out_ref, x1p, x2p, h_scr):
        # ---- in-kernel zero padding + lane-dense packing --------------------
        # Zero every step (cheap) so megacore-split steps never see stale
        # borders; the interior is fully overwritten below.
        x1p[...] = jnp.zeros_like(x1p)
        x2p[...] = jnp.zeros_like(x2p)
        for r in range(P):
            for k in range(K):
                src = r * K + k
                c0 = k * Wp + pad
                x1p[r, pad:pad + H, c0:c0 + W] = x1_ref[src]
                x2p[r, pad:pad + H, c0:c0 + W] = x2_ref[src]

        x1v = x1p[...]
        x2v = x2p[...]

        def sep_conv(plane):
            # Horizontal (lane) pass with symmetric tap pairing.
            h = taps[pad] * plane[:, :, pad:pad + Lh]
            for kj in range(pad):
                h = h + taps[kj] * (plane[:, :, kj:kj + Lh]
                                    + plane[:, :, WS - 1 - kj:WS - 1 - kj + Lh])
            # Stage in VMEM scratch; vertical taps become sublane-offset
            # ref loads (cheap addressing, bounded live ranges).
            h_scr[...] = h
            v = taps[pad] * h_scr[:, pad:pad + H, :]
            for ki in range(pad):
                v = v + taps[ki] * (h_scr[:, ki:ki + H, :]
                                    + h_scr[:, WS - 1 - ki:WS - 1 - ki + H, :])
            return v                                   # (P, H, Lh)

        # Five moment planes, convolved separately (no concat/slice copies);
        # product planes hoisted (computed once on the padded slabs).
        mu1 = sep_conv(x1v)
        mu2 = sep_conv(x2v)
        e11 = sep_conv(x1v * x1v)
        e22 = sep_conv(x2v * x2v)
        e12 = sep_conv(x1v * x2v)

        mu1_sq = mu1 * mu1
        mu2_sq = mu2 * mu2
        mu1_mu2 = mu1 * mu2
        sigma1_sq = e11 - mu1_sq
        sigma2_sq = e22 - mu2_sq
        sigma12 = e12 - mu1_mu2

        num = (2.0 * mu1_mu2 + C1) * (2.0 * sigma12 + C2)
        den = (mu1_sq + mu2_sq + C1) * (sigma1_sq + sigma2_sq + C2)
        # den >= C1*C2 > 0 everywhere (Cauchy-Schwarz with non-negative
        # Gaussian weights), so the exact EUP reciprocal is safe.
        ssim_map = num * pl.reciprocal(den, approx=False)

        if K > 1:
            # Mask out the inter-plane garbage columns of the packed layout:
            # plane k's valid outputs live at slab columns [k*Wp, k*Wp + W).
            lane = jax.lax.broadcasted_iota(jnp.int32, (1, 1, Lh), 2)
            mask = lane < W
            for k in range(1, K):
                mask = jnp.logical_or(mask,
                                      (lane >= k * Wp) & (lane < k * Wp + W))
            ssim_map = jnp.where(mask, ssim_map, 0.0)

        out_ref[...] = jnp.sum(ssim_map).reshape(1, 1, 1)

    return kernel


def ssim_loss(img1, img2, window_size=11, size_average=True, loss_weight=1.0):
    """Pallas implementation of SSIMLoss.forward (size_average=True path)."""
    assert img1.shape == img2.shape and img1.ndim == 4
    assert window_size % 2 == 1
    if not size_average:
        # TODO(synk): size_average=False (per-image mean) branch not implemented.
        raise NotImplementedError("SSIMLoss Pallas kernel: size_average=False not implemented")

    N, C, H, W = img1.shape
    NC = N * C
    WS = window_size
    pad = WS // 2
    Hp, Wp = H + 2 * pad, W + 2 * pad

    img1 = img1.astype(jnp.float32)
    img2 = img2.astype(jnp.float32)
    # Leading-dim merge only: free metadata reshape, no HBM pass (padding and
    # lane packing now happen inside the kernel).
    x1 = img1.reshape(NC, H, W)
    x2 = img2.reshape(NC, H, W)

    # --- K: planes packed side-by-side along the lane axis --------------------
    k_cap = max(1, 128 // Wp)
    K = max(d for d in range(1, NC + 1) if NC % d == 0 and d <= k_cap)
    R = NC // K                       # slab rows total
    Lp = K * Wp
    Lh = Lp - (WS - 1)

    # --- P: slab rows per grid step, padded-tile-aware VMEM accounting --------
    def vmem_bytes(p):
        in_block = 2 * 2 * (K * p) * _round_up(H, 8) * _round_up(W, 128) * 4   # 2 inputs x 2 buffers
        pad_scr = 2 * p * _round_up(Hp, 8) * _round_up(Lp, 128) * 4            # x1p, x2p
        h_buf = p * _round_up(Hp, 8) * _round_up(Lh, 128) * 4                  # h_scr
        live = 10 * p * _round_up(H, 8) * _round_up(Lh, 128) * 4               # moment planes + temps
        return in_block + pad_scr + h_buf + live

    budget = 24 * 1024 * 1024          # headroom under the 32 MiB scoped limit (v7x-safe)
    divisors = [d for d in range(1, R + 1)
                if R % d == 0 and vmem_bytes(d) <= budget and d * K <= 256]
    if not divisors:
        # TODO(synk): spatial (H/W halo) tiling for very large images; P=1 may spill there.
        divisors = [1]
    P = max(divisors)

    # Split into >= 2 grid steps only on 2-TensorCore parts (v7x); on 1-TC
    # v5e/v6e the split would just add per-step overhead.
    dev_kind = str(getattr(jax.devices()[0], "device_kind", "") or "")
    if "v7" in dev_kind.lower() and P == R and R >= 2:
        P = max(d for d in divisors if d <= R // 2)
    G = R // P

    g1d = _gaussian_1d(WS, 1.5)
    kernel = _make_ssim_kernel(WS, H, W, P, K, g1d)

    partials = pl.pallas_call(
        kernel,
        out_shape=jax.ShapeDtypeStruct((G, 1, 1), jnp.float32),
        grid=(G,),
        in_specs=[
            pl.BlockSpec((K * P, H, W), lambda i: (i, 0, 0)),
            pl.BlockSpec((K * P, H, W), lambda i: (i, 0, 0)),
        ],
        out_specs=pl.BlockSpec((1, 1, 1), lambda i: (i, 0, 0)),
        scratch_shapes=[
            pltpu.VMEM((P, Hp, Lp), jnp.float32),   # padded/packed x1
            pltpu.VMEM((P, Hp, Lp), jnp.float32),   # padded/packed x2
            pltpu.VMEM((P, Hp, Lh), jnp.float32),   # staged horizontal result
        ],
        compiler_params=pltpu.CompilerParams(
            dimension_semantics=("parallel",),
            vmem_limit_bytes=32 * 1024 * 1024),
    )(x1, x2)

    mean_ssim = jnp.sum(partials) / float(NC * H * W)
    return loss_weight * (1.0 - mean_ssim)


def _ssim_loss_ref(img1, img2, window_size=11, loss_weight=1.0):
    """Pure-JAX reference (mirrors the PyTorch _ssim) for validation."""
    N, C, H, W = img1.shape
    pad = window_size // 2
    g = _gaussian_1d(window_size, 1.5)
    w2d = jnp.asarray(np.outer(g, g).astype(np.float32))
    window = jnp.broadcast_to(w2d, (C, 1, window_size, window_size))

    def conv(x):
        return jax.lax.conv_general_dilated(
            x, window, window_strides=(1, 1), padding=[(pad, pad), (pad, pad)],
            dimension_numbers=("NCHW", "OIHW", "NCHW"), feature_group_count=C)

    mu1 = conv(img1)
    mu2 = conv(img2)
    mu1_sq, mu2_sq, mu1_mu2 = mu1 * mu1, mu2 * mu2, mu1 * mu2
    sigma1_sq = conv(img1 * img1) - mu1_sq
    sigma2_sq = conv(img2 * img2) - mu2_sq
    sigma12 = conv(img1 * img2) - mu1_mu2
    C1, C2 = 0.01 ** 2, 0.03 ** 2
    ssim_map = ((2 * mu1_mu2 + C1) * (2 * sigma12 + C2) /
                ((mu1_sq + mu2_sq + C1) * (sigma1_sq + sigma2_sq + C2)))
    return loss_weight * (1.0 - ssim_map.mean())


if __name__ == "__main__":
    key = jax.random.PRNGKey(0)
    k1, k2 = jax.random.split(key)
    # Small shapes consistent with the module's NCHW inputs.
    img1 = jax.random.uniform(k1, (2, 4, 16, 16), dtype=jnp.float32)
    img2 = jax.random.uniform(k2, (2, 4, 16, 16), dtype=jnp.float32)

    loss = ssim_loss(img1, img2, window_size=11, size_average=True, loss_weight=1.0)
    loss = jax.block_until_ready(loss)

    ref = jax.block_until_ready(_ssim_loss_ref(img1, img2))
    np.testing.assert_allclose(np.asarray(loss), np.asarray(ref), rtol=1e-4, atol=1e-5)

    print("KERNEL_OK")
</pallas_src>

<mosaic_0001>
module attributes {stable_mosaic.version = 11 : i64} {
  func.func @kernel(%arg0: i32, %arg1: memref<8x16x16xf32, #tpu.memory_space<vmem>>, %arg2: memref<8x16x16xf32, #tpu.memory_space<vmem>>, %arg3: memref<1x1x1xf32, #tpu.memory_space<vmem>>, %arg4: memref<2x26x104xf32, #tpu.memory_space<vmem>>, %arg5: memref<2x26x104xf32, #tpu.memory_space<vmem>>, %arg6: memref<2x26x94xf32, #tpu.memory_space<vmem>>) attributes {dimension_semantics = [#tpu.dimension_semantics<parallel>], iteration_bounds = array<i64: 1>, scalar_prefetch = 0 : i64, scratch_operands = 3 : i64, tpu.core_type = #tpu.core_type<tc>, window_params = [{transform_indices = @transform_0, window_bounds = array<i64: 8, 16, 16>}, {transform_indices = @transform_1, window_bounds = array<i64: 8, 16, 16>}, {transform_indices = @transform_2, window_bounds = array<i64: 1, 1, 1>}]} {
    %cst = arith.constant 0.000000e+00 : f32
    %0 = vector.broadcast %cst : f32 to vector<2x26x104xf32>
    %c0 = arith.constant 0 : index
    %c0_0 = arith.constant 0 : index
    %c0_1 = arith.constant 0 : index
    %1 = vector.load %arg4[%c0, %c0_0, %c0_1] : memref<2x26x104xf32, #tpu.memory_space<vmem>>, vector<2x26x104xf32>
    tpu.vector_store %arg4[%c0, %c0_0, %c0_1], %0 {strides = array<i32>} : memref<2x26x104xf32, #tpu.memory_space<vmem>>, vector<2x26x104xf32>,
    %cst_2 = arith.constant 0.000000e+00 : f32
    %2 = vector.broadcast %cst_2 : f32 to vector<2x26x104xf32>
    %c0_3 = arith.constant 0 : index
    %c0_4 = arith.constant 0 : index
    %c0_5 = arith.constant 0 : index
    %3 = vector.load %arg5[%c0_3, %c0_4, %c0_5] : memref<2x26x104xf32, #tpu.memory_space<vmem>>, vector<2x26x104xf32>
    tpu.vector_store %arg5[%c0_3, %c0_4, %c0_5], %2 {strides = array<i32>} : memref<2x26x104xf32, #tpu.memory_space<vmem>>, vector<2x26x104xf32>,
    %c0_6 = arith.constant 0 : index
    %c0_7 = arith.constant 0 : index
    %c0_8 = arith.constant 0 : index
    %4 = vector.load %arg1[%c0_6, %c0_7, %c0_8] : memref<8x16x16xf32, #tpu.memory_space<vmem>>, vector<1x16x16xf32>
    %5 = vector.shape_cast %4 : vector<1x16x16xf32> to vector<16x16xf32>
    %c0_9 = arith.constant 0 : index
    %c5 = arith.constant 5 : index
    %c5_10 = arith.constant 5 : index
    %6 = vector.load %arg4[%c0_9, %c5, %c5_10] : memref<2x26x104xf32, #tpu.memory_space<vmem>>, vector<1x16x16xf32>
    %7 = vector.shape_cast %6 : vector<1x16x16xf32> to vector<16x16xf32>
    %8 = vector.shape_cast %5 : vector<16x16xf32> to vector<1x16x16xf32>
    tpu.vector_store %arg4[%c0_9, %c5, %c5_10], %8 {strides = array<i32>} : memref<2x26x104xf32, #tpu.memory_space<vmem>>, vector<1x16x16xf32>,
    %c0_11 = arith.constant 0 : index
    %c0_12 = arith.constant 0 : index
    %c0_13 = arith.constant 0 : index
    %9 = vector.load %arg2[%c0_11, %c0_12, %c0_13] : memref<8x16x16xf32, #tpu.memory_space<vmem>>, vector<1x16x16xf32>
    %10 = vector.shape_cast %9 : vector<1x16x16xf32> to vector<16x16xf32>
    %c0_14 = arith.constant 0 : index
    %c5_15 = arith.constant 5 : index
    %c5_16 = arith.constant 5 : index
    %11 = vector.load %arg5[%c0_14, %c5_15, %c5_16] : memref<2x26x104xf32, #tpu.memory_space<vmem>>, vector<1x16x16xf32>
    %12 = vector.shape_cast %11 : vector<1x16x16xf32> to vector<16x16xf32>
    %13 = vector.shape_cast %10 : vector<16x16xf32> to vector<1x16x16xf32>
    tpu.vector_store %arg5[%c0_14, %c5_15, %c5_16], %13 {strides = array<i32>} : memref<2x26x104xf32, #tpu.memory_space<vmem>>, vector<1x16x16xf32>,
    %c1 = arith.constant 1 : index
    %c0_17 = arith.constant 0 : index
    %c0_18 = arith.constant 0 : index
    %14 = vector.load %arg1[%c1, %c0_17, %c0_18] : memref<8x16x16xf32, #tpu.memory_space<vmem>>, vector<1x16x16xf32>
    %15 = vector.shape_cast %14 : vector<1x16x16xf32> to vector<16x16xf32>
    %c0_19 = arith.constant 0 : index
    %c5_20 = arith.constant 5 : index
    %c31 = arith.constant 31 : index
    %16 = vector.load %arg4[%c0_19, %c5_20, %c31] : memref<2x26x104xf32, #tpu.memory_space<vmem>>, vector<1x16x16xf32>
    %17 = vector.shape_cast %16 : vector<1x16x16xf32> to vector<16x16xf32>
    %18 = vector.shape_cast %15 : vector<16x16xf32> to vector<1x16x16xf32>
    tpu.vector_store %arg4[%c0_19, %c5_20, %c31], %18 {strides = array<i32>} : memref<2x26x104xf32, #tpu.memory_space<vmem>>, vector<1x16x16xf32>,
    %c1_21 = arith.constant 1 : index
    %c0_22 = arith.constant 0 : index
    %c0_23 = arith.constant 0 : index
    %19 = vector.load %arg2[%c1_21, %c0_22, %c0_23] : memref<8x16x16xf32, #tpu.memory_space<vmem>>, vector<1x16x16xf32>
    %20 = vector.shape_cast %19 : vector<1x16x16xf32> to vector<16x16xf32>
    %c0_24 = arith.constant 0 : index
    %c5_25 = arith.constant 5 : index
    %c31_26 = arith.constant 31 : index
    %21 = vector.load %arg5[%c0_24, %c5_25, %c31_26] : memref<2x26x104xf32, #tpu.memory_space<vmem>>, vector<1x16x16xf32>
    %22 = vector.shape_cast %21 : vector<1x16x16xf32> to vector<16x16xf32>
    %23 = vector.shape_cast %20 : vector<16x16xf32> to vector<1x16x16xf32>
    tpu.vector_store %arg5[%c0_24, %c5_25, %c31_26], %23 {strides = array<i32>} : memref<2x26x104xf32, #tpu.memory_space<vmem>>, vector<1x16x16xf32>,
    %c2 = arith.constant 2 : index
    %c0_27 = arith.constant 0 : index
    %c0_28 = arith.constant 0 : index
    %24 = vector.load %arg1[%c2, %c0_27, %c0_28] : memref<8x16x16xf32, #tpu.memory_space<vmem>>, vector<1x16x16xf32>
    %25 = vector.shape_cast %24 : vector<1x16x16xf32> to vector<16x16xf32>
    %c0_29 = arith.constant 0 : index
    %c5_30 = arith.constant 5 : index
    %c57 = arith.constant 57 : index
    %26 = vector.load %arg4[%c0_29, %c5_30, %c57] : memref<2x26x104xf32, #tpu.memory_space<vmem>>, vector<1x16x16xf32>
    %27 = vector.shape_cast %26 : vector<1x16x16xf32> to vector<16x16xf32>
    %28 = vector.shape_cast %25 : vector<16x16xf32> to vector<1x16x16xf32>
    tpu.vector_store %arg4[%c0_29, %c5_30, %c57], %28 {strides = array<i32>} : memref<2x26x104xf32, #tpu.memory_space<vmem>>, vector<1x16x16xf32>,
    %c2_31 = arith.constant 2 : index
    %c0_32 = arith.constant 0 : index
    %c0_33 = arith.constant 0 : index
    %29 = vector.load %arg2[%c2_31, %c0_32, %c0_33] : memref<8x16x16xf32, #tpu.memory_space<vmem>>, vector<1x16x16xf32>
    %30 = vector.shape_cast %29 : vector<1x16x16xf32> to vector<16x16xf32>
    %c0_34 = arith.constant 0 : index
    %c5_35 = arith.constant 5 : index
    %c57_36 = arith.constant 57 : index
    %31 = vector.load %arg5[%c0_34, %c5_35, %c57_36] : memref<2x26x104xf32, #tpu.memory_space<vmem>>, vector<1x16x16xf32>
    %32 = vector.shape_cast %31 : vector<1x16x16xf32> to vector<16x16xf32>
    %33 = vector.shape_cast %30 : vector<16x16xf32> to vector<1x16x16xf32>
    tpu.vector_store %arg5[%c0_34, %c5_35, %c57_36], %33 {strides = array<i32>} : memref<2x26x104xf32, #tpu.memory_space<vmem>>, vector<1x16x16xf32>,
    %c3 = arith.constant 3 : index
    %c0_37 = arith.constant 0 : index
    %c0_38 = arith.constant 0 : index
    %34 = vector.load %arg1[%c3, %c0_37, %c0_38] : memref<8x16x16xf32, #tpu.memory_space<vmem>>, vector<1x16x16xf32>
    %35 = vector.shape_cast %34 : vector<1x16x16xf32> to vector<16x16xf32>
    %c0_39 = arith.constant 0 : index
    %c5_40 = arith.constant 5 : index
    %c83 = arith.constant 83 : index
    %36 = vector.load %arg4[%c0_39, %c5_40, %c83] : memref<2x26x104xf32, #tpu.memory_space<vmem>>, vector<1x16x16xf32>
    %37 = vector.shape_cast %36 : vector<1x16x16xf32> to vector<16x16xf32>
    %38 = vector.shape_cast %35 : vector<16x16xf32> to vector<1x16x16xf32>
    tpu.vector_store %arg4[%c0_39, %c5_40, %c83], %38 {strides = array<i32>} : memref<2x26x104xf32, #tpu.memory_space<vmem>>, vector<1x16x16xf32>,
    %c3_41 = arith.constant 3 : index
    %c0_42 = arith.constant 0 : index
    %c0_43 = arith.constant 0 : index
    %39 = vector.load %arg2[%c3_41, %c0_42, %c0_43] : memref<8x16x16xf32, #tpu.memory_space<vmem>>, vector<1x16x16xf32>
    %40 = vector.shape_cast %39 : vector<1x16x16xf32> to vector<16x16xf32>
    %c0_44 = arith.constant 0 : index
    %c5_45 = arith.constant 5 : index
    %c83_46 = arith.constant 83 : index
    %41 = vector.load %arg5[%c0_44, %c5_45, %c83_46] : memref<2x26x104xf32, #tpu.memory_space<vmem>>, vector<1x16x16xf32>
    %42 = vector.shape_cast %41 : vector<1x16x16xf32> to vector<16x16xf32>
    %43 = vector.shape_cast %40 : vector<16x16xf32> to vector<1x16x16xf32>
    tpu.vector_store %arg5[%c0_44, %c5_45, %c83_46], %43 {strides = array<i32>} : memref<2x26x104xf32, #tpu.memory_space<vmem>>, vector<1x16x16xf32>,
    %c4 = arith.constant 4 : index
    %c0_47 = arith.constant 0 : index
    %c0_48 = arith.constant 0 : index
    %44 = vector.load %arg1[%c4, %c0_47, %c0_48] : memref<8x16x16xf32, #tpu.memory_space<vmem>>, vector<1x16x16xf32>
    %45 = vector.shape_cast %44 : vector<1x16x16xf32> to vector<16x16xf32>
    %c1_49 = arith.constant 1 : index
    %c5_50 = arith.constant 5 : index
    %c5_51 = arith.constant 5 : index
    %46 = vector.load %arg4[%c1_49, %c5_50, %c5_51] : memref<2x26x104xf32, #tpu.memory_space<vmem>>, vector<1x16x16xf32>
    %47 = vector.shape_cast %46 : vector<1x16x16xf32> to vector<16x16xf32>
    %48 = vector.shape_cast %45 : vector<16x16xf32> to vector<1x16x16xf32>
    tpu.vector_store %arg4[%c1_49, %c5_50, %c5_51], %48 {strides = array<i32>} : memref<2x26x104xf32, #tpu.memory_space<vmem>>, vector<1x16x16xf32>,
    %c4_52 = arith.constant 4 : index
    %c0_53 = arith.constant 0 : index
    %c0_54 = arith.constant 0 : index
    %49 = vector.load %arg2[%c4_52, %c0_53, %c0_54] : memref<8x16x16xf32, #tpu.memory_space<vmem>>, vector<1x16x16xf32>
    %50 = vector.shape_cast %49 : vector<1x16x16xf32> to vector<16x16xf32>
    %c1_55 = arith.constant 1 : index
    %c5_56 = arith.constant 5 : index
    %c5_57 = arith.constant 5 : index
    %51 = vector.load %arg5[%c1_55, %c5_56, %c5_57] : memref<2x26x104xf32, #tpu.memory_space<vmem>>, vector<1x16x16xf32>
    %52 = vector.shape_cast %51 : vector<1x16x16xf32> to vector<16x16xf32>
    %53 = vector.shape_cast %50 : vector<16x16xf32> to vector<1x16x16xf32>
    tpu.vector_store %arg5[%c1_55, %c5_56, %c5_57], %53 {strides = array<i32>} : memref<2x26x104xf32, #tpu.memory_space<vmem>>, vector<1x16x16xf32>,
    %c5_58 = arith.constant 5 : index
    %c0_59 = arith.constant 0 : index
    %c0_60 = arith.constant 0 : index
    %54 = vector.load %arg1[%c5_58, %c0_59, %c0_60] : memref<8x16x16xf32, #tpu.memory_space<vmem>>, vector<1x16x16xf32>
    %55 = vector.shape_cast %54 : vector<1x16x16xf32> to vector<16x16xf32>
    %c1_61 = arith.constant 1 : index
    %c5_62 = arith.constant 5 : index
    %c31_63 = arith.constant 31 : index
    %56 = vector.load %arg4[%c1_61, %c5_62, %c31_63] : memref<2x26x104xf32, #tpu.memory_space<vmem>>, vector<1x16x16xf32>
    %57 = vector.shape_cast %56 : vector<1x16x16xf32> to vector<16x16xf32>
    %58 = vector.shape_cast %55 : vector<16x16xf32> to vector<1x16x16xf32>
    tpu.vector_store %arg4[%c1_61, %c5_62, %c31_63], %58 {strides = array<i32>} : memref<2x26x104xf32, #tpu.memory_space<vmem>>, vector<1x16x16xf32>,
    %c5_64 = arith.constant 5 : index
    %c0_65 = arith.constant 0 : index
    %c0_66 = arith.constant 0 : index
    %59 = vector.load %arg2[%c5_64, %c0_65, %c0_66] : memref<8x16x16xf32, #tpu.memory_space<vmem>>, vector<1x16x16xf32>
    %60 = vector.shape_cast %59 : vector<1x16x16xf32> to vector<16x16xf32>
    %c1_67 = arith.constant 1 : index
    %c5_68 = arith.constant 5 : index
    %c31_69 = arith.constant 31 : index
    %61 = vector.load %arg5[%c1_67, %c5_68, %c31_69] : memref<2x26x104xf32, #tpu.memory_space<vmem>>, vector<1x16x16xf32>
    %62 = vector.shape_cast %61 : vector<1x16x16xf32> to vector<16x16xf32>
    %63 = vector.shape_cast %60 : vector<16x16xf32> to vector<1x16x16xf32>
    tpu.vector_store %arg5[%c1_67, %c5_68, %c31_69], %63 {strides = array<i32>} : memref<2x26x104xf32, #tpu.memory_space<vmem>>, vector<1x16x16xf32>,
    %c6 = arith.constant 6 : index
    %c0_70 = arith.constant 0 : index
    %c0_71 = arith.constant 0 : index
    %64 = vector.load %arg1[%c6, %c0_70, %c0_71] : memref<8x16x16xf32, #tpu.memory_space<vmem>>, vector<1x16x16xf32>
    %65 = vector.shape_cast %64 : vector<1x16x16xf32> to vector<16x16xf32>
    %c1_72 = arith.constant 1 : index
    %c5_73 = arith.constant 5 : index
    %c57_74 = arith.constant 57 : index
    %66 = vector.load %arg4[%c1_72, %c5_73, %c57_74] : memref<2x26x104xf32, #tpu.memory_space<vmem>>, vector<1x16x16xf32>
    %67 = vector.shape_cast %66 : vector<1x16x16xf32> to vector<16x16xf32>
    %68 = vector.shape_cast %65 : vector<16x16xf32> to vector<1x16x16xf32>
    tpu.vector_store %arg4[%c1_72, %c5_73, %c57_74], %68 {strides = array<i32>} : memref<2x26x104xf32, #tpu.memory_space<vmem>>, vector<1x16x16xf32>,
    %c6_75 = arith.constant 6 : index
    %c0_76 = arith.constant 0 : index
    %c0_77 = arith.constant 0 : index
    %69 = vector.load %arg2[%c6_75, %c0_76, %c0_77] : memref<8x16x16xf32, #tpu.memory_space<vmem>>, vector<1x16x16xf32>
    %70 = vector.shape_cast %69 : vector<1x16x16xf32> to vector<16x16xf32>
    %c1_78 = arith.constant 1 : index
    %c5_79 = arith.constant 5 : index
    %c57_80 = arith.constant 57 : index
    %71 = vector.load %arg5[%c1_78, %c5_79, %c57_80] : memref<2x26x104xf32, #tpu.memory_space<vmem>>, vector<1x16x16xf32>
    %72 = vector.shape_cast %71 : vector<1x16x16xf32> to vector<16x16xf32>
    %73 = vector.shape_cast %70 : vector<16x16xf32> to vector<1x16x16xf32>
    tpu.vector_store %arg5[%c1_78, %c5_79, %c57_80], %73 {strides = array<i32>} : memref<2x26x104xf32, #tpu.memory_space<vmem>>, vector<1x16x16xf32>,
    %c7 = arith.constant 7 : index
    %c0_81 = arith.constant 0 : index
    %c0_82 = arith.constant 0 : index
    %74 = vector.load %arg1[%c7, %c0_81, %c0_82] : memref<8x16x16xf32, #tpu.memory_space<vmem>>, vector<1x16x16xf32>
    %75 = vector.shape_cast %74 : vector<1x16x16xf32> to vector<16x16xf32>
    %c1_83 = arith.constant 1 : index
    %c5_84 = arith.constant 5 : index
    %c83_85 = arith.constant 83 : index
    %76 = vector.load %arg4[%c1_83, %c5_84, %c83_85] : memref<2x26x104xf32, #tpu.memory_space<vmem>>, vector<1x16x16xf32>
    %77 = vector.shape_cast %76 : vector<1x16x16xf32> to vector<16x16xf32>
    %78 = vector.shape_cast %75 : vector<16x16xf32> to vector<1x16x16xf32>
    tpu.vector_store %arg4[%c1_83, %c5_84, %c83_85], %78 {strides = array<i32>} : memref<2x26x104xf32, #tpu.memory_space<vmem>>, vector<1x16x16xf32>,
    %c7_86 = arith.constant 7 : index
    %c0_87 = arith.constant 0 : index
    %c0_88 = arith.constant 0 : index
    %79 = vector.load %arg2[%c7_86, %c0_87, %c0_88] : memref<8x16x16xf32, #tpu.memory_space<vmem>>, vector<1x16x16xf32>
    %80 = vector.shape_cast %79 : vector<1x16x16xf32> to vector<16x16xf32>
    %c1_89 = arith.constant 1 : index
    %c5_90 = arith.constant 5 : index
    %c83_91 = arith.constant 83 : index
    %81 = vector.load %arg5[%c1_89, %c5_90, %c83_91] : memref<2x26x104xf32, #tpu.memory_space<vmem>>, vector<1x16x16xf32>
    %82 = vector.shape_cast %81 : vector<1x16x16xf32> to vector<16x16xf32>
    %83 = vector.shape_cast %80 : vector<16x16xf32> to vector<1x16x16xf32>
    tpu.vector_store %arg5[%c1_89, %c5_90, %c83_91], %83 {strides = array<i32>} : memref<2x26x104xf32, #tpu.memory_space<vmem>>, vector<1x16x16xf32>,
    %c0_92 = arith.constant 0 : index
    %c0_93 = arith.constant 0 : index
    %c0_94 = arith.constant 0 : index
    %84 = vector.load %arg4[%c0_92, %c0_93, %c0_94] : memref<2x26x104xf32, #tpu.memory_space<vmem>>, vector<2x26x104xf32>
    %c0_95 = arith.constant 0 : index
    %c0_96 = arith.constant 0 : index
    %c0_97 = arith.constant 0 : index
    %85 = vector.load %arg5[%c0_95, %c0_96, %c0_97] : memref<2x26x104xf32, #tpu.memory_space<vmem>>, vector<2x26x104xf32>
    %86 = vector.extract_strided_slice %84 {offsets = [0, 0, 5], sizes = [2, 26, 94], strides = [1, 1, 1]} : vector<2x26x104xf32> to vector<2x26x94xf32>
    %cst_98 = arith.constant 0.266011745 : f32
    %87 = vector.broadcast %cst_98 : f32 to vector<2x26x94xf32>
    %88 = arith.mulf %87, %86 : vector<2x26x94xf32>
    %89 = vector.extract_strided_slice %84 {offsets = [0, 0, 0], sizes = [2, 26, 94], strides = [1, 1, 1]} : vector<2x26x104xf32> to vector<2x26x94xf32>
    %90 = vector.extract_strided_slice %84 {offsets = [0, 0, 10], sizes = [2, 26, 94], strides = [1, 1, 1]} : vector<2x26x104xf32> to vector<2x26x94xf32>
    %91 = arith.addf %89, %90 : vector<2x26x94xf32>
    %cst_99 = arith.constant 0.00102838024 : f32
    %92 = vector.broadcast %cst_99 : f32 to vector<2x26x94xf32>
    %93 = arith.mulf %92, %91 : vector<2x26x94xf32>
    %94 = arith.addf %88, %93 : vector<2x26x94xf32>
    %95 = vector.extract_strided_slice %84 {offsets = [0, 0, 1], sizes = [2, 26, 94], strides = [1, 1, 1]} : vector<2x26x104xf32> to vector<2x26x94xf32>
    %96 = vector.extract_strided_slice %84 {offsets = [0, 0, 9], sizes = [2, 26, 94], strides = [1, 1, 1]} : vector<2x26x104xf32> to vector<2x26x94xf32>
    %97 = arith.addf %95, %96 : vector<2x26x94xf32>
    %cst_100 = arith.constant 0.00759875868 : f32
    %98 = vector.broadcast %cst_100 : f32 to vector<2x26x94xf32>
    %99 = arith.mulf %98, %97 : vector<2x26x94xf32>
    %100 = arith.addf %94, %99 : vector<2x26x94xf32>
    %101 = vector.extract_strided_slice %84 {offsets = [0, 0, 2], sizes = [2, 26, 94], strides = [1, 1, 1]} : vector<2x26x104xf32> to vector<2x26x94xf32>
    %102 = vector.extract_strided_slice %84 {offsets = [0, 0, 8], sizes = [2, 26, 94], strides = [1, 1, 1]} : vector<2x26x104xf32> to vector<2x26x94xf32>
    %103 = arith.addf %101, %102 : vector<2x26x94xf32>
    %cst_101 = arith.constant 0.0360007733 : f32
    %104 = vector.broadcast %cst_101 : f32 to vector<2x26x94xf32>
    %105 = arith.mulf %104, %103 : vector<2x26x94xf32>
    %106 = arith.addf %100, %105 : vector<2x26x94xf32>
    %107 = vector.extract_strided_slice %84 {offsets = [0, 0, 3], sizes = [2, 26, 94], strides = [1, 1, 1]} : vector<2x26x104xf32> to vector<2x26x94xf32>
    %108 = vector.extract_strided_slice %84 {offsets = [0, 0, 7], sizes = [2, 26, 94], strides = [1, 1, 1]} : vector<2x26x104xf32> to vector<2x26x94xf32>
    %109 = arith.addf %107, %108 : vector<2x26x94xf32>
    %cst_102 = arith.constant 0.109360695 : f32
    %110 = vector.broadcast %cst_102 : f32 to vector<2x26x94xf32>
    %111 = arith.mulf %110, %109 : vector<2x26x94xf32>
    %112 = arith.addf %106, %111 : vector<2x26x94xf32>
    %113 = vector.extract_strided_slice %84 {offsets = [0, 0, 4], sizes = [2, 26, 94], strides = [1, 1, 1]} : vector<2x26x104xf32> to vector<2x26x94xf32>
    %114 = vector.extract_strided_slice %84 {offsets = [0, 0, 6], sizes = [2, 26, 94], strides = [1, 1, 1]} : vector<2x26x104xf32> to vector<2x26x94xf32>
    %115 = arith.addf %113, %114 : vector<2x26x94xf32>
    %cst_103 = arith.constant 0.213005543 : f32
    %116 = vector.broadcast %cst_103 : f32 to vector<2x26x94xf32>
    %117 = arith.mulf %116, %115 : vector<2x26x94xf32>
    %118 = arith.addf %112, %117 : vector<2x26x94xf32>
    %c0_104 = arith.constant 0 : index
    %c0_105 = arith.constant 0 : index
    %c0_106 = arith.constant 0 : index
    %119 = vector.load %arg6[%c0_104, %c0_105, %c0_106] : memref<2x26x94xf32, #tpu.memory_space<vmem>>, vector<2x26x94xf32>
    tpu.vector_store %arg6[%c0_104, %c0_105, %c0_106], %118 {strides = array<i32>} : memref<2x26x94xf32, #tpu.memory_space<vmem>>, vector<2x26x94xf32>,
    %c0_107 = arith.constant 0 : index
    %c5_108 = arith.constant 5 : index
    %c0_109 = arith.constant 0 : index
    %120 = vector.load %arg6[%c0_107, %c5_108, %c0_109] : memref<2x26x94xf32, #tpu.memory_space<vmem>>, vector<2x16x94xf32>
    %cst_110 = arith.constant 0.266011745 : f32
    %121 = vector.broadcast %cst_110 : f32 to vector<2x16x94xf32>
    %122 = arith.mulf %121, %120 : vector<2x16x94xf32>
    %c0_111 = arith.constant 0 : index
    %c0_112 = arith.constant 0 : index
    %c0_113 = arith.constant 0 : index
    %123 = vector.load %arg6[%c0_111, %c0_112, %c0_113] : memref<2x26x94xf32, #tpu.memory_space<vmem>>, vector<2x16x94xf32>
    %c0_114 = arith.constant 0 : index
    %c10 = arith.constant 10 : index
    %c0_115 = arith.constant 0 : index
    %124 = vector.load %arg6[%c0_114, %c10, %c0_115] : memref<2x26x94xf32, #tpu.memory_space<vmem>>, vector<2x16x94xf32>
    %125 = arith.addf %123, %124 : vector<2x16x94xf32>
    %cst_116 = arith.constant 0.00102838024 : f32
    %126 = vector.broadcast %cst_116 : f32 to vector<2x16x94xf32>
    %127 = arith.mulf %126, %125 : vector<2x16x94xf32>
    %128 = arith.addf %122, %127 : vector<2x16x94xf32>
    %c0_117 = arith.constant 0 : index
    %c1_118 = arith.constant 1 : index
    %c0_119 = arith.constant 0 : index
    %129 = vector.load %arg6[%c0_117, %c1_118, %c0_119] : memref<2x26x94xf32, #tpu.memory_space<vmem>>, vector<2x16x94xf32>
    %c0_120 = arith.constant 0 : index
    %c9 = arith.constant 9 : index
    %c0_121 = arith.constant 0 : index
    %130 = vector.load %arg6[%c0_120, %c9, %c0_121] : memref<2x26x94xf32, #tpu.memory_space<vmem>>, vector<2x16x94xf32>
    %131 = arith.addf %129, %130 : vector<2x16x94xf32>
    %cst_122 = arith.constant 0.00759875868 : f32
    %132 = vector.broadcast %cst_122 : f32 to vector<2x16x94xf32>
    %133 = arith.mulf %132, %131 : vector<2x16x94xf32>
    %134 = arith.addf %128, %133 : vector<2x16x94xf32>
    %c0_123 = arith.constant 0 : index
    %c2_124 = arith.constant 2 : index
    %c0_125 = arith.constant 0 : index
    %135 = vector.load %arg6[%c0_123, %c2_124, %c0_125] : memref<2x26x94xf32, #tpu.memory_space<vmem>>, vector<2x16x94xf32>
    %c0_126 = arith.constant 0 : index
    %c8 = arith.constant 8 : index
    %c0_127 = arith.constant 0 : index
    %136 = vector.load %arg6[%c0_126, %c8, %c0_127] : memref<2x26x94xf32, #tpu.memory_space<vmem>>, vector<2x16x94xf32>
    %137 = arith.addf %135, %136 : vector<2x16x94xf32>
    %cst_128 = arith.constant 0.0360007733 : f32
    %138 = vector.broadcast %cst_128 : f32 to vector<2x16x94xf32>
    %139 = arith.mulf %138, %137 : vector<2x16x94xf32>
    %140 = arith.addf %134, %139 : vector<2x16x94xf32>
    %c0_129 = arith.constant 0 : index
    %c3_130 = arith.constant 3 : index
    %c0_131 = arith.constant 0 : index
    %141 = vector.load %arg6[%c0_129, %c3_130, %c0_131] : memref<2x26x94xf32, #tpu.memory_space<vmem>>, vector<2x16x94xf32>
    %c0_132 = arith.constant 0 : index
    %c7_133 = arith.constant 7 : index
    %c0_134 = arith.constant 0 : index
    %142 = vector.load %arg6[%c0_132, %c7_133, %c0_134] : memref<2x26x94xf32, #tpu.memory_space<vmem>>, vector<2x16x94xf32>
    %143 = arith.addf %141, %142 : vector<2x16x94xf32>
    %cst_135 = arith.constant 0.109360695 : f32
    %144 = vector.broadcast %cst_135 : f32 to vector<2x16x94xf32>
    %145 = arith.mulf %144, %143 : vector<2x16x94xf32>
    %146 = arith.addf %140, %145 : vector<2x16x94xf32>
    %c0_136 = arith.constant 0 : index
    %c4_137 = arith.constant 4 : index
    %c0_138 = arith.constant 0 : index
    %147 = vector.load %arg6[%c0_136, %c4_137, %c0_138] : memref<2x26x94xf32, #tpu.memory_space<vmem>>, vector<2x16x94xf32>
    %c0_139 = arith.constant 0 : index
    %c6_140 = arith.constant 6 : index
    %c0_141 = arith.constant 0 : index
    %148 = vector.load %arg6[%c0_139, %c6_140, %c0_141] : memref<2x26x94xf32, #tpu.memory_space<vmem>>, vector<2x16x94xf32>
    %149 = arith.addf %147, %148 : vector<2x16x94xf32>
    %cst_142 = arith.constant 0.213005543 : f32
    %150 = vector.broadcast %cst_142 : f32 to vector<2x16x94xf32>
    %151 = arith.mulf %150, %149 : vector<2x16x94xf32>
    %152 = arith.addf %146, %151 : vector<2x16x94xf32>
    %153 = vector.extract_strided_slice %85 {offsets = [0, 0, 5], sizes = [2, 26, 94], strides = [1, 1, 1]} : vector<2x26x104xf32> to vector<2x26x94xf32>
    %cst_143 = arith.constant 0.266011745 : f32
    %154 = vector.broadcast %cst_143 : f32 to vector<2x26x94xf32>
    %155 = arith.mulf %154, %153 : vector<2x26x94xf32>
    %156 = vector.extract_strided_slice %85 {offsets = [0, 0, 0], sizes = [2, 26, 94], strides = [1, 1, 1]} : vector<2x26x104xf32> to vector<2x26x94xf32>
    %157 = vector.extract_strided_slice %85 {offsets = [0, 0, 10], sizes = [2, 26, 94], strides = [1, 1, 1]} : vector<2x26x104xf32> to vector<2x26x94xf32>
    %158 = arith.addf %156, %157 : vector<2x26x94xf32>
    %cst_144 = arith.constant 0.00102838024 : f32
    %159 = vector.broadcast %cst_144 : f32 to vector<2x26x94xf32>
    %160 = arith.mulf %159, %158 : vector<2x26x94xf32>
    %161 = arith.addf %155, %160 : vector<2x26x94xf32>
    %162 = vector.extract_strided_slice %85 {offsets = [0, 0, 1], sizes = [2, 26, 94], strides = [1, 1, 1]} : vector<2x26x104xf32> to vector<2x26x94xf32>
    %163 = vector.extract_strided_slice %85 {offsets = [0, 0, 9], sizes = [2, 26, 94], strides = [1, 1, 1]} : vector<2x26x104xf32> to vector<2x26x94xf32>
    %164 = arith.addf %162, %163 : vector<2x26x94xf32>
    %cst_145 = arith.constant 0.00759875868 : f32
    %165 = vector.broadcast %cst_145 : f32 to vector<2x26x94xf32>
    %166 = arith.mulf %165, %164 : vector<2x26x94xf32>
    %167 = arith.addf %161, %166 : vector<2x26x94xf32>
    %168 = vector.extract_strided_slice %85 {offsets = [0, 0, 2], sizes = [2, 26, 94], strides = [1, 1, 1]} : vector<2x26x104xf32> to vector<2x26x94xf32>
    %169 = vector.extract_strided_slice %85 {offsets = [0, 0, 8], sizes = [2, 26, 94], strides = [1, 1, 1]} : vector<2x26x104xf32> to vector<2x26x94xf32>
    %170 = arith.addf %168, %169 : vector<2x26x94xf32>
    %cst_146 = arith.constant 0.0360007733 : f32
    %171 = vector.broadcast %cst_146 : f32 to vector<2x26x94xf32>
    %172 = arith.mulf %171, %170 : vector<2x26x94xf32>
    %173 = arith.addf %167, %172 : vector<2x26x94xf32>
    %174 = vector.extract_strided_slice %85 {offsets = [0, 0, 3], sizes = [2, 26, 94], strides = [1, 1, 1]} : vector<2x26x104xf32> to vector<2x26x94xf32>
    %175 = vector.extract_strided_slice %85 {offsets = [0, 0, 7], sizes = [2, 26, 94], strides = [1, 1, 1]} : vector<2x26x104xf32> to vector<2x26x94xf32>
    %176 = arith.addf %174, %175 : vector<2x26x94xf32>
    %cst_147 = arith.constant 0.109360695 : f32
    %177 = vector.broadcast %cst_147 : f32 to vector<2x26x94xf32>
    %178 = arith.mulf %177, %176 : vector<2x26x94xf32>
    %179 = arith.addf %173, %178 : vector<2x26x94xf32>
    %180 = vector.extract_strided_slice %85 {offsets = [0, 0, 4], sizes = [2, 26, 94], strides = [1, 1, 1]} : vector<2x26x104xf32> to vector<2x26x94xf32>
    %181 = vector.extract_strided_slice %85 {offsets = [0, 0, 6], sizes = [2, 26, 94], strides = [1, 1, 1]} : vector<2x26x104xf32> to vector<2x26x94xf32>
    %182 = arith.addf %180, %181 : vector<2x26x94xf32>
    %cst_148 = arith.constant 0.213005543 : f32
    %183 = vector.broadcast %cst_148 : f32 to vector<2x26x94xf32>
    %184 = arith.mulf %183, %182 : vector<2x26x94xf32>
    %185 = arith.addf %179, %184 : vector<2x26x94xf32>
    %c0_149 = arith.constant 0 : index
    %c0_150 = arith.constant 0 : index
    %c0_151 = arith.constant 0 : index
    %186 = vector.load %arg6[%c0_149, %c0_150, %c0_151] : memref<2x26x94xf32, #tpu.memory_space<vmem>>, vector<2x26x94xf32>
    tpu.vector_store %arg6[%c0_149, %c0_150, %c0_151], %185 {strides = array<i32>} : memref<2x26x94xf32, #tpu.memory_space<vmem>>, vector<2x26x94xf32>,
    %c0_152 = arith.constant 0 : index
    %c5_153 = arith.constant 5 : index
    %c0_154 = arith.constant 0 : index
    %187 = vector.load %arg6[%c0_152, %c5_153, %c0_154] : memref<2x26x94xf32, #tpu.memory_space<vmem>>, vector<2x16x94xf32>
    %cst_155 = arith.constant 0.266011745 : f32
    %188 = vector.broadcast %cst_155 : f32 to vector<2x16x94xf32>
    %189 = arith.mulf %188, %187 : vector<2x16x94xf32>
    %c0_156 = arith.constant 0 : index
    %c0_157 = arith.constant 0 : index
    %c0_158 = arith.constant 0 : index
    %190 = vector.load %arg6[%c0_156, %c0_157, %c0_158] : memref<2x26x94xf32, #tpu.memory_space<vmem>>, vector<2x16x94xf32>
    %c0_159 = arith.constant 0 : index
    %c10_160 = arith.constant 10 : index
    %c0_161 = arith.constant 0 : index
    %191 = vector.load %arg6[%c0_159, %c10_160, %c0_161] : memref<2x26x94xf32, #tpu.memory_space<vmem>>, vector<2x16x94xf32>
    %192 = arith.addf %190, %191 : vector<2x16x94xf32>
    %cst_162 = arith.constant 0.00102838024 : f32
    %193 = vector.broadcast %cst_162 : f32 to vector<2x16x94xf32>
    %194 = arith.mulf %193, %192 : vector<2x16x94xf32>
    %195 = arith.addf %189, %194 : vector<2x16x94xf32>
    %c0_163 = arith.constant 0 : index
    %c1_164 = arith.constant 1 : index
    %c0_165 = arith.constant 0 : index
    %196 = vector.load %arg6[%c0_163, %c1_164, %c0_165] : memref<2x26x94xf32, #tpu.memory_space<vmem>>, vector<2x16x94xf32>
    %c0_166 = arith.constant 0 : index
    %c9_167 = arith.constant 9 : index
    %c0_168 = arith.constant 0 : index
    %197 = vector.load %arg6[%c0_166, %c9_167, %c0_168] : memref<2x26x94xf32, #tpu.memory_space<vmem>>, vector<2x16x94xf32>
    %198 = arith.addf %196, %197 : vector<2x16x94xf32>
    %cst_169 = arith.constant 0.00759875868 : f32
    %199 = vector.broadcast %cst_169 : f32 to vector<2x16x94xf32>
    %200 = arith.mulf %199, %198 : vector<2x16x94xf32>
    %201 = arith.addf %195, %200 : vector<2x16x94xf32>
    %c0_170 = arith.constant 0 : index
    %c2_171 = arith.constant 2 : index
    %c0_172 = arith.constant 0 : index
    %202 = vector.load %arg6[%c0_170, %c2_171, %c0_172] : memref<2x26x94xf32, #tpu.memory_space<vmem>>, vector<2x16x94xf32>
    %c0_173 = arith.constant 0 : index
    %c8_174 = arith.constant 8 : index
    %c0_175 = arith.constant 0 : index
    %203 = vector.load %arg6[%c0_173, %c8_174, %c0_175] : memref<2x26x94xf32, #tpu.memory_space<vmem>>, vector<2x16x94xf32>
    %204 = arith.addf %202, %203 : vector<2x16x94xf32>
    %cst_176 = arith.constant 0.0360007733 : f32
    %205 = vector.broadcast %cst_176 : f32 to vector<2x16x94xf32>
    %206 = arith.mulf %205, %204 : vector<2x16x94xf32>
    %207 = arith.addf %201, %206 : vector<2x16x94xf32>
    %c0_177 = arith.constant 0 : index
    %c3_178 = arith.constant 3 : index
    %c0_179 = arith.constant 0 : index
    %208 = vector.load %arg6[%c0_177, %c3_178, %c0_179] : memref<2x26x94xf32, #tpu.memory_space<vmem>>, vector<2x16x94xf32>
    %c0_180 = arith.constant 0 : index
    %c7_181 = arith.constant 7 : index
    %c0_182 = arith.constant 0 : index
    %209 = vector.load %arg6[%c0_180, %c7_181, %c0_182] : memref<2x26x94xf32, #tpu.memory_space<vmem>>, vector<2x16x94xf32>
    %210 = arith.addf %208, %209 : vector<2x16x94xf32>
    %cst_183 = arith.constant 0.109360695 : f32
    %211 = vector.broadcast %cst_183 : f32 to vector<2x16x94xf32>
    %212 = arith.mulf %211, %210 : vector<2x16x94xf32>
    %213 = arith.addf %207, %212 : vector<2x16x94xf32>
    %c0_184 = arith.constant 0 : index
    %c4_185 = arith.constant 4 : index
    %c0_186 = arith.constant 0 : index
    %214 = vector.load %arg6[%c0_184, %c4_185, %c0_186] : memref<2x26x94xf32, #tpu.memory_space<vmem>>, vector<2x16x94xf32>
    %c0_187 = arith.constant 0 : index
    %c6_188 = arith.constant 6 : index
    %c0_189 = arith.constant 0 : index
    %215 = vector.load %arg6[%c0_187, %c6_188, %c0_189] : memref<2x26x94xf32, #tpu.memory_space<vmem>>, vector<2x16x94xf32>
    %216 = arith.addf %214, %215 : vector<2x16x94xf32>
    %cst_190 = arith.constant 0.213005543 : f32
    %217 = vector.broadcast %cst_190 : f32 to vector<2x16x94xf32>
    %218 = arith.mulf %217, %216 : vector<2x16x94xf32>
    %219 = arith.addf %213, %218 : vector<2x16x94xf32>
    %220 = arith.mulf %84, %84 : vector<2x26x104xf32>
    %221 = vector.extract_strided_slice %220 {offsets = [0, 0, 5], sizes = [2, 26, 94], strides = [1, 1, 1]} : vector<2x26x104xf32> to vector<2x26x94xf32>
    %cst_191 = arith.constant 0.266011745 : f32
    %222 = vector.broadcast %cst_191 : f32 to vector<2x26x94xf32>
    %223 = arith.mulf %222, %221 : vector<2x26x94xf32>
    %224 = vector.extract_strided_slice %220 {offsets = [0, 0, 0], sizes = [2, 26, 94], strides = [1, 1, 1]} : vector<2x26x104xf32> to vector<2x26x94xf32>
    %225 = vector.extract_strided_slice %220 {offsets = [0, 0, 10], sizes = [2, 26, 94], strides = [1, 1, 1]} : vector<2x26x104xf32> to vector<2x26x94xf32>
    %226 = arith.addf %224, %225 : vector<2x26x94xf32>
    %cst_192 = arith.constant 0.00102838024 : f32
    %227 = vector.broadcast %cst_192 : f32 to vector<2x26x94xf32>
    %228 = arith.mulf %227, %226 : vector<2x26x94xf32>
    %229 = arith.addf %223, %228 : vector<2x26x94xf32>
    %230 = vector.extract_strided_slice %220 {offsets = [0, 0, 1], sizes = [2, 26, 94], strides = [1, 1, 1]} : vector<2x26x104xf32> to vector<2x26x94xf32>
    %231 = vector.extract_strided_slice %220 {offsets = [0, 0, 9], sizes = [2, 26, 94], strides = [1, 1, 1]} : vector<2x26x104xf32> to vector<2x26x94xf32>
    %232 = arith.addf %230, %231 : vector<2x26x94xf32>
    %cst_193 = arith.constant 0.00759875868 : f32
    %233 = vector.broadcast %cst_193 : f32 to vector<2x26x94xf32>
    %234 = arith.mulf %233, %232 : vector<2x26x94xf32>
    %235 = arith.addf %229, %234 : vector<2x26x94xf32>
    %236 = vector.extract_strided_slice %220 {offsets = [0, 0, 2], sizes = [2, 26, 94], strides = [1, 1, 1]} : vector<2x26x104xf32> to vector<2x26x94xf32>
    %237 = vector.extract_strided_slice %220 {offsets = [0, 0, 8], sizes = [2, 26, 94], strides = [1, 1, 1]} : vector<2x26x104xf32> to vector<2x26x94xf32>
    %238 = arith.addf %236, %237 : vector<2x26x94xf32>
    %cst_194 = arith.constant 0.0360007733 : f32
    %239 = vector.broadcast %cst_194 : f32 to vector<2x26x94xf32>
    %240 = arith.mulf %239, %238 : vector<2x26x94xf32>
    %241 = arith.addf %235, %240 : vector<2x26x94xf32>
    %242 = vector.extract_strided_slice %220 {offsets = [0, 0, 3], sizes = [2, 26, 94], strides = [1, 1, 1]} : vector<2x26x104xf32> to vector<2x26x94xf32>
    %243 = vector.extract_strided_slice %220 {offsets = [0, 0, 7], sizes = [2, 26, 94], strides = [1, 1, 1]} : vector<2x26x104xf32> to vector<2x26x94xf32>
    %244 = arith.addf %242, %243 : vector<2x26x94xf32>
    %cst_195 = arith.constant 0.109360695 : f32
    %245 = vector.broadcast %cst_195 : f32 to vector<2x26x94xf32>
    %246 = arith.mulf %245, %244 : vector<2x26x94xf32>
    %247 = arith.addf %241, %246 : vector<2x26x94xf32>
    %248 = vector.extract_strided_slice %220 {offsets = [0, 0, 4], sizes = [2, 26, 94], strides = [1, 1, 1]} : vector<2x26x104xf32> to vector<2x26x94xf32>
    %249 = vector.extract_strided_slice %220 {offsets = [0, 0, 6], sizes = [2, 26, 94], strides = [1, 1, 1]} : vector<2x26x104xf32> to vector<2x26x94xf32>
    %250 = arith.addf %248, %249 : vector<2x26x94xf32>
    %cst_196 = arith.constant 0.213005543 : f32
    %251 = vector.broadcast %cst_196 : f32 to vector<2x26x94xf32>
    %252 = arith.mulf %251, %250 : vector<2x26x94xf32>
    %253 = arith.addf %247, %252 : vector<2x26x94xf32>
    %c0_197 = arith.constant 0 : index
    %c0_198 = arith.constant 0 : index
    %c0_199 = arith.constant 0 : index
    %254 = vector.load %arg6[%c0_197, %c0_198, %c0_199] : memref<2x26x94xf32, #tpu.memory_space<vmem>>, vector<2x26x94xf32>
    tpu.vector_store %arg6[%c0_197, %c0_198, %c0_199], %253 {strides = array<i32>} : memref<2x26x94xf32, #tpu.memory_space<vmem>>, vector<2x26x94xf32>,
    %c0_200 = arith.constant 0 : index
    %c5_201 = arith.constant 5 : index
    %c0_202 = arith.constant 0 : index
    %255 = vector.load %arg6[%c0_200, %c5_201, %c0_202] : memref<2x26x94xf32, #tpu.memory_space<vmem>>, vector<2x16x94xf32>
    %cst_203 = arith.constant 0.266011745 : f32
    %256 = vector.broadcast %cst_203 : f32 to vector<2x16x94xf32>
    %257 = arith.mulf %256, %255 : vector<2x16x94xf32>
    %c0_204 = arith.constant 0 : index
    %c0_205 = arith.constant 0 : index
    %c0_206 = arith.constant 0 : index
    %258 = vector.load %arg6[%c0_204, %c0_205, %c0_206] : memref<2x26x94xf32, #tpu.memory_space<vmem>>, vector<2x16x94xf32>
    %c0_207 = arith.constant 0 : index
    %c10_208 = arith.constant 10 : index
    %c0_209 = arith.constant 0 : index
    %259 = vector.load %arg6[%c0_207, %c10_208, %c0_209] : memref<2x26x94xf32, #tpu.memory_space<vmem>>, vector<2x16x94xf32>
    %260 = arith.addf %258, %259 : vector<2x16x94xf32>
    %cst_210 = arith.constant 0.00102838024 : f32
    %261 = vector.broadcast %cst_210 : f32 to vector<2x16x94xf32>
    %262 = arith.mulf %261, %260 : vector<2x16x94xf32>
    %263 = arith.addf %257, %262 : vector<2x16x94xf32>
    %c0_211 = arith.constant 0 : index
    %c1_212 = arith.constant 1 : index
    %c0_213 = arith.constant 0 : index
    %264 = vector.load %arg6[%c0_211, %c1_212, %c0_213] : memref<2x26x94xf32, #tpu.memory_space<vmem>>, vector<2x16x94xf32>
    %c0_214 = arith.constant 0 : index
    %c9_215 = arith.constant 9 : index
    %c0_216 = arith.constant 0 : index
    %265 = vector.load %arg6[%c0_214, %c9_215, %c0_216] : memref<2x26x94xf32, #tpu.memory_space<vmem>>, vector<2x16x94xf32>
    %266 = arith.addf %264, %265 : vector<2x16x94xf32>
    %cst_217 = arith.constant 0.00759875868 : f32
    %267 = vector.broadcast %cst_217 : f32 to vector<2x16x94xf32>
    %268 = arith.mulf %267, %266 : vector<2x16x94xf32>
    %269 = arith.addf %263, %268 : vector<2x16x94xf32>
    %c0_218 = arith.constant 0 : index
    %c2_219 = arith.constant 2 : index
    %c0_220 = arith.constant 0 : index
    %270 = vector.load %arg6[%c0_218, %c2_219, %c0_220] : memref<2x26x94xf32, #tpu.memory_space<vmem>>, vector<2x16x94xf32>
    %c0_221 = arith.constant 0 : index
    %c8_222 = arith.constant 8 : index
    %c0_223 = arith.constant 0 : index
    %271 = vector.load %arg6[%c0_221, %c8_222, %c0_223] : memref<2x26x94xf32, #tpu.memory_space<vmem>>, vector<2x16x94xf32>
    %272 = arith.addf %270, %271 : vector<2x16x94xf32>
    %cst_224 = arith.constant 0.0360007733 : f32
    %273 = vector.broadcast %cst_224 : f32 to vector<2x16x94xf32>
    %274 = arith.mulf %273, %272 : vector<2x16x94xf32>
    %275 = arith.addf %269, %274 : vector<2x16x94xf32>
    %c0_225 = arith.constant 0 : index
    %c3_226 = arith.constant 3 : index
    %c0_227 = arith.constant 0 : index
    %276 = vector.load %arg6[%c0_225, %c3_226, %c0_227] : memref<2x26x94xf32, #tpu.memory_space<vmem>>, vector<2x16x94xf32>
    %c0_228 = arith.constant 0 : index
    %c7_229 = arith.constant 7 : index
    %c0_230 = arith.constant 0 : index
    %277 = vector.load %arg6[%c0_228, %c7_229, %c0_230] : memref<2x26x94xf32, #tpu.memory_space<vmem>>, vector<2x16x94xf32>
    %278 = arith.addf %276, %277 : vector<2x16x94xf32>
    %cst_231 = arith.constant 0.109360695 : f32
    %279 = vector.broadcast %cst_231 : f32 to vector<2x16x94xf32>
    %280 = arith.mulf %279, %278 : vector<2x16x94xf32>
    %281 = arith.addf %275, %280 : vector<2x16x94xf32>
    %c0_232 = arith.constant 0 : index
    %c4_233 = arith.constant 4 : index
    %c0_234 = arith.constant 0 : index
    %282 = vector.load %arg6[%c0_232, %c4_233, %c0_234] : memref<2x26x94xf32, #tpu.memory_space<vmem>>, vector<2x16x94xf32>
    %c0_235 = arith.constant 0 : index
    %c6_236 = arith.constant 6 : index
    %c0_237 = arith.constant 0 : index
    %283 = vector.load %arg6[%c0_235, %c6_236, %c0_237] : memref<2x26x94xf32, #tpu.memory_space<vmem>>, vector<2x16x94xf32>
    %284 = arith.addf %282, %283 : vector<2x16x94xf32>
    %cst_238 = arith.constant 0.213005543 : f32
    %285 = vector.broadcast %cst_238 : f32 to vector<2x16x94xf32>
    %286 = arith.mulf %285, %284 : vector<2x16x94xf32>
    %287 = arith.addf %281, %286 : vector<2x16x94xf32>
    %288 = arith.mulf %85, %85 : vector<2x26x104xf32>
    %289 = vector.extract_strided_slice %288 {offsets = [0, 0, 5], sizes = [2, 26, 94], strides = [1, 1, 1]} : vector<2x26x104xf32> to vector<2x26x94xf32>
    %cst_239 = arith.constant 0.266011745 : f32
    %290 = vector.broadcast %cst_239 : f32 to vector<2x26x94xf32>
    %291 = arith.mulf %290, %289 : vector<2x26x94xf32>
    %292 = vector.extract_strided_slice %288 {offsets = [0, 0, 0], sizes = [2, 26, 94], strides = [1, 1, 1]} : vector<2x26x104xf32> to vector<2x26x94xf32>
    %293 = vector.extract_strided_slice %288 {offsets = [0, 0, 10], sizes = [2, 26, 94], strides = [1, 1, 1]} : vector<2x26x104xf32> to vector<2x26x94xf32>
    %294 = arith.addf %292, %293 : vector<2x26x94xf32>
    %cst_240 = arith.constant 0.00102838024 : f32
    %295 = vector.broadcast %cst_240 : f32 to vector<2x26x94xf32>
    %296 = arith.mulf %295, %294 : vector<2x26x94xf32>
    %297 = arith.addf %291, %296 : vector<2x26x94xf32>
    %298 = vector.extract_strided_slice %288 {offsets = [0, 0, 1], sizes = [2, 26, 94], strides = [1, 1, 1]} : vector<2x26x104xf32> to vector<2x26x94xf32>
    %299 = vector.extract_strided_slice %288 {offsets = [0, 0, 9], sizes = [2, 26, 94], strides = [1, 1, 1]} : vector<2x26x104xf32> to vector<2x26x94xf32>
    %300 = arith.addf %298, %299 : vector<2x26x94xf32>
    %cst_241 = arith.constant 0.00759875868 : f32
    %301 = vector.broadcast %cst_241 : f32 to vector<2x26x94xf32>
    %302 = arith.mulf %301, %300 : vector<2x26x94xf32>
    %303 = arith.addf %297, %302 : vector<2x26x94xf32>
    %304 = vector.extract_strided_slice %288 {offsets = [0, 0, 2], sizes = [2, 26, 94], strides = [1, 1, 1]} : vector<2x26x104xf32> to vector<2x26x94xf32>
    %305 = vector.extract_strided_slice %288 {offsets = [0, 0, 8], sizes = [2, 26, 94], strides = [1, 1, 1]} : vector<2x26x104xf32> to vector<2x26x94xf32>
    %306 = arith.addf %304, %305 : vector<2x26x94xf32>
    %cst_242 = arith.constant 0.0360007733 : f32
    %307 = vector.broadcast %cst_242 : f32 to vector<2x26x94xf32>
    %308 = arith.mulf %307, %306 : vector<2x26x94xf32>
    %309 = arith.addf %303, %308 : vector<2x26x94xf32>
    %310 = vector.extract_strided_slice %288 {offsets = [0, 0, 3], sizes = [2, 26, 94], strides = [1, 1, 1]} : vector<2x26x104xf32> to vector<2x26x94xf32>
    %311 = vector.extract_strided_slice %288 {offsets = [0, 0, 7], sizes = [2, 26, 94], strides = [1, 1, 1]} : vector<2x26x104xf32> to vector<2x26x94xf32>
    %312 = arith.addf %310, %311 : vector<2x26x94xf32>
    %cst_243 = arith.constant 0.109360695 : f32
    %313 = vector.broadcast %cst_243 : f32 to vector<2x26x94xf32>
    %314 = arith.mulf %313, %312 : vector<2x26x94xf32>
    %315 = arith.addf %309, %314 : vector<2x26x94xf32>
    %316 = vector.extract_strided_slice %288 {offsets = [0, 0, 4], sizes = [2, 26, 94], strides = [1, 1, 1]} : vector<2x26x104xf32> to vector<2x26x94xf32>
    %317 = vector.extract_strided_slice %288 {offsets = [0, 0, 6], sizes = [2, 26, 94], strides = [1, 1, 1]} : vector<2x26x104xf32> to vector<2x26x94xf32>
    %318 = arith.addf %316, %317 : vector<2x26x94xf32>
    %cst_244 = arith.constant 0.213005543 : f32
    %319 = vector.broadcast %cst_244 : f32 to vector<2x26x94xf32>
    %320 = arith.mulf %319, %318 : vector<2x26x94xf32>
    %321 = arith.addf %315, %320 : vector<2x26x94xf32>
    %c0_245 = arith.constant 0 : index
    %c0_246 = arith.constant 0 : index
    %c0_247 = arith.constant 0 : index
    %322 = vector.load %arg6[%c0_245, %c0_246, %c0_247] : memref<2x26x94xf32, #tpu.memory_space<vmem>>, vector<2x26x94xf32>
    tpu.vector_store %arg6[%c0_245, %c0_246, %c0_247], %321 {strides = array<i32>} : memref<2x26x94xf32, #tpu.memory_space<vmem>>, vector<2x26x94xf32>,
    %c0_248 = arith.constant 0 : index
    %c5_249 = arith.constant 5 : index
    %c0_250 = arith.constant 0 : index
    %323 = vector.load %arg6[%c0_248, %c5_249, %c0_250] : memref<2x26x94xf32, #tpu.memory_space<vmem>>, vector<2x16x94xf32>
    %cst_251 = arith.constant 0.266011745 : f32
    %324 = vector.broadcast %cst_251 : f32 to vector<2x16x94xf32>
    %325 = arith.mulf %324, %323 : vector<2x16x94xf32>
    %c0_252 = arith.constant 0 : index
    %c0_253 = arith.constant 0 : index
    %c0_254 = arith.constant 0 : index
    %326 = vector.load %arg6[%c0_252, %c0_253, %c0_254] : memref<2x26x94xf32, #tpu.memory_space<vmem>>, vector<2x16x94xf32>
    %c0_255 = arith.constant 0 : index
    %c10_256 = arith.constant 10 : index
    %c0_257 = arith.constant 0 : index
    %327 = vector.load %arg6[%c0_255, %c10_256, %c0_257] : memref<2x26x94xf32, #tpu.memory_space<vmem>>, vector<2x16x94xf32>
    %328 = arith.addf %326, %327 : vector<2x16x94xf32>
    %cst_258 = arith.constant 0.00102838024 : f32
    %329 = vector.broadcast %cst_258 : f32 to vector<2x16x94xf32>
    %330 = arith.mulf %329, %328 : vector<2x16x94xf32>
    %331 = arith.addf %325, %330 : vector<2x16x94xf32>
    %c0_259 = arith.constant 0 : index
    %c1_260 = arith.constant 1 : index
    %c0_261 = arith.constant 0 : index
    %332 = vector.load %arg6[%c0_259, %c1_260, %c0_261] : memref<2x26x94xf32, #tpu.memory_space<vmem>>, vector<2x16x94xf32>
    %c0_262 = arith.constant 0 : index
    %c9_263 = arith.constant 9 : index
    %c0_264 = arith.constant 0 : index
    %333 = vector.load %arg6[%c0_262, %c9_263, %c0_264] : memref<2x26x94xf32, #tpu.memory_space<vmem>>, vector<2x16x94xf32>
    %334 = arith.addf %332, %333 : vector<2x16x94xf32>
    %cst_265 = arith.constant 0.00759875868 : f32
    %335 = vector.broadcast %cst_265 : f32 to vector<2x16x94xf32>
    %336 = arith.mulf %335, %334 : vector<2x16x94xf32>
    %337 = arith.addf %331, %336 : vector<2x16x94xf32>
    %c0_266 = arith.constant 0 : index
    %c2_267 = arith.constant 2 : index
    %c0_268 = arith.constant 0 : index
    %338 = vector.load %arg6[%c0_266, %c2_267, %c0_268] : memref<2x26x94xf32, #tpu.memory_space<vmem>>, vector<2x16x94xf32>
    %c0_269 = arith.constant 0 : index
    %c8_270 = arith.constant 8 : index
    %c0_271 = arith.constant 0 : index
    %339 = vector.load %arg6[%c0_269, %c8_270, %c0_271] : memref<2x26x94xf32, #tpu.memory_space<vmem>>, vector<2x16x94xf32>
    %340 = arith.addf %338, %339 : vector<2x16x94xf32>
    %cst_272 = arith.constant 0.0360007733 : f32
    %341 = vector.broadcast %cst_272 : f32 to vector<2x16x94xf32>
    %342 = arith.mulf %341, %340 : vector<2x16x94xf32>
    %343 = arith.addf %337, %342 : vector<2x16x94xf32>
    %c0_273 = arith.constant 0 : index
    %c3_274 = arith.constant 3 : index
    %c0_275 = arith.constant 0 : index
    %344 = vector.load %arg6[%c0_273, %c3_274, %c0_275] : memref<2x26x94xf32, #tpu.memory_space<vmem>>, vector<2x16x94xf32>
    %c0_276 = arith.constant 0 : index
    %c7_277 = arith.constant 7 : index
    %c0_278 = arith.constant 0 : index
    %345 = vector.load %arg6[%c0_276, %c7_277, %c0_278] : memref<2x26x94xf32, #tpu.memory_space<vmem>>, vector<2x16x94xf32>
    %346 = arith.addf %344, %345 : vector<2x16x94xf32>
    %cst_279 = arith.constant 0.109360695 : f32
    %347 = vector.broadcast %cst_279 : f32 to vector<2x16x94xf32>
    %348 = arith.mulf %347, %346 : vector<2x16x94xf32>
    %349 = arith.addf %343, %348 : vector<2x16x94xf32>
    %c0_280 = arith.constant 0 : index
    %c4_281 = arith.constant 4 : index
    %c0_282 = arith.constant 0 : index
    %350 = vector.load %arg6[%c0_280, %c4_281, %c0_282] : memref<2x26x94xf32, #tpu.memory_space<vmem>>, vector<2x16x94xf32>
    %c0_283 = arith.constant 0 : index
    %c6_284 = arith.constant 6 : index
    %c0_285 = arith.constant 0 : index
    %351 = vector.load %arg6[%c0_283, %c6_284, %c0_285] : memref<2x26x94xf32, #tpu.memory_space<vmem>>, vector<2x16x94xf32>
    %352 = arith.addf %350, %351 : vector<2x16x94xf32>
    %cst_286 = arith.constant 0.213005543 : f32
    %353 = vector.broadcast %cst_286 : f32 to vector<2x16x94xf32>
    %354 = arith.mulf %353, %352 : vector<2x16x94xf32>
    %355 = arith.addf %349, %354 : vector<2x16x94xf32>
    %356 = arith.mulf %84, %85 : vector<2x26x104xf32>
    %357 = vector.extract_strided_slice %356 {offsets = [0, 0, 5], sizes = [2, 26, 94], strides = [1, 1, 1]} : vector<2x26x104xf32> to vector<2x26x94xf32>
    %cst_287 = arith.constant 0.266011745 : f32
    %358 = vector.broadcast %cst_287 : f32 to vector<2x26x94xf32>
    %359 = arith.mulf %358, %357 : vector<2x26x94xf32>
    %360 = vector.extract_strided_slice %356 {offsets = [0, 0, 0], sizes = [2, 26, 94], strides = [1, 1, 1]} : vector<2x26x104xf32> to vector<2x26x94xf32>
    %361 = vector.extract_strided_slice %356 {offsets = [0, 0, 10], sizes = [2, 26, 94], strides = [1, 1, 1]} : vector<2x26x104xf32> to vector<2x26x94xf32>
    %362 = arith.addf %360, %361 : vector<2x26x94xf32>
    %cst_288 = arith.constant 0.00102838024 : f32
    %363 = vector.broadcast %cst_288 : f32 to vector<2x26x94xf32>
    %364 = arith.mulf %363, %362 : vector<2x26x94xf32>
    %365 = arith.addf %359, %364 : vector<2x26x94xf32>
    %366 = vector.extract_strided_slice %356 {offsets = [0, 0, 1], sizes = [2, 26, 94], strides = [1, 1, 1]} : vector<2x26x104xf32> to vector<2x26x94xf32>
    %367 = vector.extract_strided_slice %356 {offsets = [0, 0, 9], sizes = [2, 26, 94], strides = [1, 1, 1]} : vector<2x26x104xf32> to vector<2x26x94xf32>
    %368 = arith.addf %366, %367 : vector<2x26x94xf32>
    %cst_289 = arith.constant 0.00759875868 : f32
    %369 = vector.broadcast %cst_289 : f32 to vector<2x26x94xf32>
    %370 = arith.mulf %369, %368 : vector<2x26x94xf32>
    %371 = arith.addf %365, %370 : vector<2x26x94xf32>
    %372 = vector.extract_strided_slice %356 {offsets = [0, 0, 2], sizes = [2, 26, 94], strides = [1, 1, 1]} : vector<2x26x104xf32> to vector<2x26x94xf32>
    %373 = vector.extract_strided_slice %356 {offsets = [0, 0, 8], sizes = [2, 26, 94], strides = [1, 1, 1]} : vector<2x26x104xf32> to vector<2x26x94xf32>
    %374 = arith.addf %372, %373 : vector<2x26x94xf32>
    %cst_290 = arith.constant 0.0360007733 : f32
    %375 = vector.broadcast %cst_290 : f32 to vector<2x26x94xf32>
    %376 = arith.mulf %375, %374 : vector<2x26x94xf32>
    %377 = arith.addf %371, %376 : vector<2x26x94xf32>
    %378 = vector.extract_strided_slice %356 {offsets = [0, 0, 3], sizes = [2, 26, 94], strides = [1, 1, 1]} : vector<2x26x104xf32> to vector<2x26x94xf32>
    %379 = vector.extract_strided_slice %356 {offsets = [0, 0, 7], sizes = [2, 26, 94], strides = [1, 1, 1]} : vector<2x26x104xf32> to vector<2x26x94xf32>
    %380 = arith.addf %378, %379 : vector<2x26x94xf32>
    %cst_291 = arith.constant 0.109360695 : f32
    %381 = vector.broadcast %cst_291 : f32 to vector<2x26x94xf32>
    %382 = arith.mulf %381, %380 : vector<2x26x94xf32>
    %383 = arith.addf %377, %382 : vector<2x26x94xf32>
    %384 = vector.extract_strided_slice %356 {offsets = [0, 0, 4], sizes = [2, 26, 94], strides = [1, 1, 1]} : vector<2x26x104xf32> to vector<2x26x94xf32>
    %385 = vector.extract_strided_slice %356 {offsets = [0, 0, 6], sizes = [2, 26, 94], strides = [1, 1, 1]} : vector<2x26x104xf32> to vector<2x26x94xf32>
    %386 = arith.addf %384, %385 : vector<2x26x94xf32>
    %cst_292 = arith.constant 0.213005543 : f32
    %387 = vector.broadcast %cst_292 : f32 to vector<2x26x94xf32>
    %388 = arith.mulf %387, %386 : vector<2x26x94xf32>
    %389 = arith.addf %383, %388 : vector<2x26x94xf32>
    %c0_293 = arith.constant 0 : index
    %c0_294 = arith.constant 0 : index
    %c0_295 = arith.constant 0 : index
    %390 = vector.load %arg6[%c0_293, %c0_294, %c0_295] : memref<2x26x94xf32, #tpu.memory_space<vmem>>, vector<2x26x94xf32>
    tpu.vector_store %arg6[%c0_293, %c0_294, %c0_295], %389 {strides = array<i32>} : memref<2x26x94xf32, #tpu.memory_space<vmem>>, vector<2x26x94xf32>,
    %c0_296 = arith.constant 0 : index
    %c5_297 = arith.constant 5 : index
    %c0_298 = arith.constant 0 : index
    %391 = vector.load %arg6[%c0_296, %c5_297, %c0_298] : memref<2x26x94xf32, #tpu.memory_space<vmem>>, vector<2x16x94xf32>
    %cst_299 = arith.constant 0.266011745 : f32
    %392 = vector.broadcast %cst_299 : f32 to vector<2x16x94xf32>
    %393 = arith.mulf %392, %391 : vector<2x16x94xf32>
    %c0_300 = arith.constant 0 : index
    %c0_301 = arith.constant 0 : index
    %c0_302 = arith.constant 0 : index
    %394 = vector.load %arg6[%c0_300, %c0_301, %c0_302] : memref<2x26x94xf32, #tpu.memory_space<vmem>>, vector<2x16x94xf32>
    %c0_303 = arith.constant 0 : index
    %c10_304 = arith.constant 10 : index
    %c0_305 = arith.constant 0 : index
    %395 = vector.load %arg6[%c0_303, %c10_304, %c0_305] : memref<2x26x94xf32, #tpu.memory_space<vmem>>, vector<2x16x94xf32>
    %396 = arith.addf %394, %395 : vector<2x16x94xf32>
    %cst_306 = arith.constant 0.00102838024 : f32
    %397 = vector.broadcast %cst_306 : f32 to vector<2x16x94xf32>
    %398 = arith.mulf %397, %396 : vector<2x16x94xf32>
    %399 = arith.addf %393, %398 : vector<2x16x94xf32>
    %c0_307 = arith.constant 0 : index
    %c1_308 = arith.constant 1 : index
    %c0_309 = arith.constant 0 : index
    %400 = vector.load %arg6[%c0_307, %c1_308, %c0_309] : memref<2x26x94xf32, #tpu.memory_space<vmem>>, vector<2x16x94xf32>
    %c0_310 = arith.constant 0 : index
    %c9_311 = arith.constant 9 : index
    %c0_312 = arith.constant 0 : index
    %401 = vector.load %arg6[%c0_310, %c9_311, %c0_312] : memref<2x26x94xf32, #tpu.memory_space<vmem>>, vector<2x16x94xf32>
    %402 = arith.addf %400, %401 : vector<2x16x94xf32>
    %cst_313 = arith.constant 0.00759875868 : f32
    %403 = vector.broadcast %cst_313 : f32 to vector<2x16x94xf32>
    %404 = arith.mulf %403, %402 : vector<2x16x94xf32>
    %405 = arith.addf %399, %404 : vector<2x16x94xf32>
    %c0_314 = arith.constant 0 : index
    %c2_315 = arith.constant 2 : index
    %c0_316 = arith.constant 0 : index
    %406 = vector.load %arg6[%c0_314, %c2_315, %c0_316] : memref<2x26x94xf32, #tpu.memory_space<vmem>>, vector<2x16x94xf32>
    %c0_317 = arith.constant 0 : index
    %c8_318 = arith.constant 8 : index
    %c0_319 = arith.constant 0 : index
    %407 = vector.load %arg6[%c0_317, %c8_318, %c0_319] : memref<2x26x94xf32, #tpu.memory_space<vmem>>, vector<2x16x94xf32>
    %408 = arith.addf %406, %407 : vector<2x16x94xf32>
    %cst_320 = arith.constant 0.0360007733 : f32
    %409 = vector.broadcast %cst_320 : f32 to vector<2x16x94xf32>
    %410 = arith.mulf %409, %408 : vector<2x16x94xf32>
    %411 = arith.addf %405, %410 : vector<2x16x94xf32>
    %c0_321 = arith.constant 0 : index
    %c3_322 = arith.constant 3 : index
    %c0_323 = arith.constant 0 : index
    %412 = vector.load %arg6[%c0_321, %c3_322, %c0_323] : memref<2x26x94xf32, #tpu.memory_space<vmem>>, vector<2x16x94xf32>
    %c0_324 = arith.constant 0 : index
    %c7_325 = arith.constant 7 : index
    %c0_326 = arith.constant 0 : index
    %413 = vector.load %arg6[%c0_324, %c7_325, %c0_326] : memref<2x26x94xf32, #tpu.memory_space<vmem>>, vector<2x16x94xf32>
    %414 = arith.addf %412, %413 : vector<2x16x94xf32>
    %cst_327 = arith.constant 0.109360695 : f32
    %415 = vector.broadcast %cst_327 : f32 to vector<2x16x94xf32>
    %416 = arith.mulf %415, %414 : vector<2x16x94xf32>
    %417 = arith.addf %411, %416 : vector<2x16x94xf32>
    %c0_328 = arith.constant 0 : index
    %c4_329 = arith.constant 4 : index
    %c0_330 = arith.constant 0 : index
    %418 = vector.load %arg6[%c0_328, %c4_329, %c0_330] : memref<2x26x94xf32, #tpu.memory_space<vmem>>, vector<2x16x94xf32>
    %c0_331 = arith.constant 0 : index
    %c6_332 = arith.constant 6 : index
    %c0_333 = arith.constant 0 : index
    %419 = vector.load %arg6[%c0_331, %c6_332, %c0_333] : memref<2x26x94xf32, #tpu.memory_space<vmem>>, vector<2x16x94xf32>
    %420 = arith.addf %418, %419 : vector<2x16x94xf32>
    %cst_334 = arith.constant 0.213005543 : f32
    %421 = vector.broadcast %cst_334 : f32 to vector<2x16x94xf32>
    %422 = arith.mulf %421, %420 : vector<2x16x94xf32>
    %423 = arith.addf %417, %422 : vector<2x16x94xf32>
    %424 = arith.mulf %152, %152 : vector<2x16x94xf32>
    %425 = arith.mulf %219, %219 : vector<2x16x94xf32>
    %426 = arith.mulf %152, %219 : vector<2x16x94xf32>
    %427 = arith.subf %287, %424 : vector<2x16x94xf32>
    %428 = arith.subf %355, %425 : vector<2x16x94xf32>
    %429 = arith.subf %423, %426 : vector<2x16x94xf32>
    %cst_335 = arith.constant 2.000000e+00 : f32
    %430 = vector.broadcast %cst_335 : f32 to vector<2x16x94xf32>
    %431 = arith.mulf %430, %426 : vector<2x16x94xf32>
    %cst_336 = arith.constant 9.99999974E-5 : f32
    %432 = vector.broadcast %cst_336 : f32 to vector<2x16x94xf32>
    %433 = arith.addf %431, %432 : vector<2x16x94xf32>
    %cst_337 = arith.constant 2.000000e+00 : f32
    %434 = vector.broadcast %cst_337 : f32 to vector<2x16x94xf32>
    %435 = arith.mulf %434, %429 : vector<2x16x94xf32>
    %cst_338 = arith.constant 8.99999984E-4 : f32
    %436 = vector.broadcast %cst_338 : f32 to vector<2x16x94xf32>
    %437 = arith.addf %435, %436 : vector<2x16x94xf32>
    %438 = arith.mulf %433, %437 : vector<2x16x94xf32>
    %439 = arith.addf %424, %425 : vector<2x16x94xf32>
    %cst_339 = arith.constant 9.99999974E-5 : f32
    %440 = vector.broadcast %cst_339 : f32 to vector<2x16x94xf32>
    %441 = arith.addf %439, %440 : vector<2x16x94xf32>
    %442 = arith.addf %427, %428 : vector<2x16x94xf32>
    %cst_340 = arith.constant 8.99999984E-4 : f32
    %443 = vector.broadcast %cst_340 : f32 to vector<2x16x94xf32>
    %444 = arith.addf %442, %443 : vector<2x16x94xf32>
    %445 = arith.mulf %441, %444 : vector<2x16x94xf32>
    %446 = tpu.reciprocal %445 : vector<2x16x94xf32> -> vector<2x16x94xf32>
    %447 = arith.mulf %438, %446 : vector<2x16x94xf32>
    %448 = tpu.iota {dimensions = array<i32: 2>} : vector<1x1x94xi32>
    %c16_i32 = arith.constant 16 : i32
    %449 = vector.broadcast %c16_i32 : i32 to vector<1x1x94xi32>
    %450 = arith.cmpi slt, %448, %449 : vector<1x1x94xi32>
    %c26_i32 = arith.constant 26 : i32
    %451 = vector.broadcast %c26_i32 : i32 to vector<1x1x94xi32>
    %452 = arith.cmpi sge, %448, %451 : vector<1x1x94xi32>
    %c42_i32 = arith.constant 42 : i32
    %453 = vector.broadcast %c42_i32 : i32 to vector<1x1x94xi32>
    %454 = arith.cmpi slt, %448, %453 : vector<1x1x94xi32>
    %455 = arith.andi %452, %454 : vector<1x1x94xi1>
    %456 = arith.ori %450, %455 : vector<1x1x94xi1>
    %c52_i32 = arith.constant 52 : i32
    %457 = vector.broadcast %c52_i32 : i32 to vector<1x1x94xi32>
    %458 = arith.cmpi sge, %448, %457 : vector<1x1x94xi32>
    %c68_i32 = arith.constant 68 : i32
    %459 = vector.broadcast %c68_i32 : i32 to vector<1x1x94xi32>
    %460 = arith.cmpi slt, %448, %459 : vector<1x1x94xi32>
    %461 = arith.andi %458, %460 : vector<1x1x94xi1>
    %462 = arith.ori %456, %461 : vector<1x1x94xi1>
    %c78_i32 = arith.constant 78 : i32
    %463 = vector.broadcast %c78_i32 : i32 to vector<1x1x94xi32>
    %464 = arith.cmpi sge, %448, %463 : vector<1x1x94xi32>
    %c94_i32 = arith.constant 94 : i32
    %465 = vector.broadcast %c94_i32 : i32 to vector<1x1x94xi32>
    %466 = arith.cmpi slt, %448, %465 : vector<1x1x94xi32>
    %467 = arith.andi %464, %466 : vector<1x1x94xi1>
    %468 = arith.ori %462, %467 : vector<1x1x94xi1>
    %cst_341 = arith.constant 0.000000e+00 : f32
    %469 = vector.shape_cast %468 : vector<1x1x94xi1> to vector<1x1x94xi1>
    %470 = vector.broadcast %469 : vector<1x1x94xi1> to vector<2x16x94xi1>
    %471 = vector.broadcast %cst_341 : f32 to vector<2x16x94xf32>
    %472 = arith.select %470, %447, %471 : vector<2x16x94xi1>, vector<2x16x94xf32>
    %473 = vector.shape_cast %472 : vector<2x16x94xf32> to vector<1x2x16x94xf32>
    %cst_342 = arith.constant dense<0.000000e+00> : vector<1xf32>
    %474 = vector.multi_reduction <add>, %473, %cst_342 [1, 2, 3] : vector<1x2x16x94xf32> to vector<1xf32>
    %475 = vector.shape_cast %474 : vector<1xf32> to vector<1x1x1x1xf32>
    %476 = vector.extract %475[0, 0, 0, 0] : f32 from vector<1x1x1x1xf32>
    %477 = vector.broadcast %476 : f32 to vector<1x1x1xf32>
    %c0_343 = arith.constant 0 : index
    %c0_344 = arith.constant 0 : index
    %c0_345 = arith.constant 0 : index
    %478 = vector.load %arg3[%c0_343, %c0_344, %c0_345] : memref<1x1x1xf32, #tpu.memory_space<vmem>>, vector<1x1x1xf32>
    tpu.vector_store %arg3[%c0_343, %c0_344, %c0_345], %477 {strides = array<i32>} : memref<1x1x1xf32, #tpu.memory_space<vmem>>, vector<1x1x1xf32>,
    return
  }
  func.func @transform_0(%arg0: i32) -> (i32, i32, i32) {
    %c0_i32 = arith.constant 0 : i32
    %c0_i32_0 = arith.constant 0 : i32
    %c0_i32_1 = arith.constant 0 : i32
    return %arg0, %c0_i32, %c0_i32_0 : i32, i32, i32
  }
  func.func @transform_1(%arg0: i32) -> (i32, i32, i32) {
    %c0_i32 = arith.constant 0 : i32
    %c0_i32_0 = arith.constant 0 : i32
    %c0_i32_1 = arith.constant 0 : i32
    return %arg0, %c0_i32, %c0_i32_0 : i32, i32, i32
  }
  func.func @transform_2(%arg0: i32) -> (i32, i32, i32) {
    %c0_i32 = arith.constant 0 : i32
    %c0_i32_0 = arith.constant 0 : i32
    %c0_i32_1 = arith.constant 0 : i32
    return %arg0, %c0_i32, %c0_i32_0 : i32, i32, i32
  }
}

</mosaic_0001>

<llo_original>
// kernel: tpu_custom_call.1
$region0: #{tpu_custom_call.1}
  #allocation0 [shape = 'u32[]', space=smem, size = 0x4, offset = 0x4, fixed_abs, tag = 'smem constant byte address 0x4 - core index']
  #allocation1 [shape = 'u32[144,128]{1,0:T(1,128)}', space=vmem, size = 0x12000, scoped, tag = 'internal scratch']
  #allocation2 [shape = 'f32[2,26,104]{2,1,0:T(8,128)}', space=vmem, size = 0x8000, scoped, tag = 'scratch operand']
  #allocation3 [shape = 'f32[2,26,104]{2,1,0:T(8,128)}', space=vmem, size = 0x8000, scoped, tag = 'scratch operand']
  #allocation4 [shape = 'f32[2,26,94]{2,1,0:T(8,128)}', space=vmem, size = 0x8000, scoped, tag = 'scratch operand']
  %s0 = inlined_call_operand.hbm [shape: f32[8,16,16], index: 0, kind: input, shape index: {}]
  %s1 = inlined_call_operand.hbm [shape: f32[8,16,16], index: 1, kind: input, shape index: {}]
  %s2 = inlined_call_operand.hbm [shape: f32[1,1,1], index: 2, kind: output, shape index: {}]
  %s3 = sld [smem:[#allocation0]]
  $region26: #{tpu_custom_call.1} parent=0
    _
  %s5 = ssub.s32 1, %s3
  %s6 = scalar_select 0, %s5, %s3
  $region1: #{tpu_custom_call.1} parent=0
    #allocation5 [shape = 'u8[65536]{0}', space=vmem, size = 0x10000, scoped, tag = 'input window, operand 0, single buffered']
    #allocation6 [shape = 's32[1]{0}', space=sflag, size = 0x4, scoped, tag = 'scoped memory for tpu_custom_call.1']
    #allocation7 [shape = 's32[1]{0}', space=sflag, size = 0x4, scoped, tag = 'scoped memory for tpu_custom_call.1']
    #allocation8 [shape = 'u8[65536]{0}', space=vmem, size = 0x10000, scoped, tag = 'input window, operand 1, single buffered']
    #allocation9 [shape = 's32[1]{0}', space=sflag, size = 0x4, scoped, tag = 'scoped memory for tpu_custom_call.1']
    #allocation10 [shape = 'u8[512]{0}', space=vmem, size = 0x400, scoped, tag = 'output window, operand 0, single buffered']
    %7 = vsyncpa [#allocation6], 0
    %8 = vsyncpa [#allocation9], 0
    %9 = vsyncpa [#allocation7], 0
    // Predicated region
    $region2: #{tpu_custom_call.1} parent=1 // pred_check
      _
    $region3: #{tpu_custom_call.1} parent=1 // pred_check_branch
      %11 = sbr.rel (0) target = $region5
    $region4: #{tpu_custom_call.1} parent=1 // pred_region
      %s13 = ssub.s32 2048, 2048
      %14 = vsyncadd [#allocation6], %s13
      %s15 = sshll.u32 [#allocation5], 4
      %s16 = int_to_ptr.vmem [resolvable:$true] %s15
      %21 = dma.hbm_to_vmem [thread:$0]  %s0, 2048, %s16, [#allocation6], 128, 128, 8
    $region5: #{tpu_custom_call.1} parent=1 // pred_fallthru
      _
    // Predicated region
    $region6: #{tpu_custom_call.1} parent=1 // pred_check
      _
    $region7: #{tpu_custom_call.1} parent=1 // pred_check_branch
      %23 = sbr.rel (0) target = $region9
    $region8: #{tpu_custom_call.1} parent=1 // pred_region
      %s25 = ssub.s32 2048, 2048
      %26 = vsyncadd [#allocation9], %s25
      %s27 = sshll.u32 [#allocation8], 4
      %s28 = int_to_ptr.vmem [resolvable:$true] %s27
      %33 = dma.hbm_to_vmem [thread:$0]  %s1, 2048, %s28, [#allocation9], 128, 128, 8
    $region9: #{tpu_custom_call.1} parent=1 // pred_fallthru
      _
    // Predicated region
    $region10: #{tpu_custom_call.1} parent=1 // pred_check
      _
    $region11: #{tpu_custom_call.1} parent=1 // pred_check_branch
      %35 = sbr.rel (0) target = $region13
    $region12: #{tpu_custom_call.1} parent=1 // pred_region
      %36 = dma.done [#allocation6], 2048
    $region13: #{tpu_custom_call.1} parent=1 // pred_fallthru
      _
    // Predicated region
    $region14: #{tpu_custom_call.1} parent=1 // pred_check
      _
    $region15: #{tpu_custom_call.1} parent=1 // pred_check_branch
      %38 = sbr.rel (0) target = $region17
    $region16: #{tpu_custom_call.1} parent=1 // pred_region
      %39 = dma.done [#allocation9], 2048
    $region17: #{tpu_custom_call.1} parent=1 // pred_fallthru
      _
    %vm40 = vcmask 850944
    %41 = vst.msk [vmem:[#allocation2] sm:$0xff] %vm40, 0.0
    %42 = vst.msk [vmem:[#allocation2 + $0x8] sm:$0xff] %vm40, 0.0
    %43 = vst.msk [vmem:[#allocation2 + $0x10] sm:$0xff] %vm40, 0.0
    %vm44 = vcmask 844800
    %45 = vst.msk [vmem:[#allocation2 + $0x18] sm:$0x3] %vm44, 0.0
    %46 = vst.msk [vmem:[#allocation2 + $0x20] sm:$0xff] %vm40, 0.0
    %47 = vst.msk [vmem:[#allocation2 + $0x28] sm:$0xff] %vm40, 0.0
    %48 = vst.msk [vmem:[#allocation2 + $0x30] sm:$0xff] %vm40, 0.0
    %49 = vst.msk [vmem:[#allocation2 + $0x38] sm:$0x3] %vm44, 0.0
    %50 = vst.msk [vmem:[#allocation3] sm:$0xff] %vm40, 0.0
    %51 = vst.msk [vmem:[#allocation3 + $0x8] sm:$0xff] %vm40, 0.0
    %52 = vst.msk [vmem:[#allocation3 + $0x10] sm:$0xff] %vm40, 0.0
    %53 = vst.msk [vmem:[#allocation3 + $0x18] sm:$0x3] %vm44, 0.0
    %54 = vst.msk [vmem:[#allocation3 + $0x20] sm:$0xff] %vm40, 0.0
    %55 = vst.msk [vmem:[#allocation3 + $0x28] sm:$0xff] %vm40, 0.0
    %56 = vst.msk [vmem:[#allocation3 + $0x30] sm:$0xff] %vm40, 0.0
    %57 = vst.msk [vmem:[#allocation3 + $0x38] sm:$0x3] %vm44, 0.0
    %v58 = vld [vmem:[#allocation5] sm:$0xff]
    %v59 = vld [vmem:[#allocation5 + $0x8] sm:$0xff]
    %62 = vrot.lane.b32.xlu0 %v58, 5
    %v63 = vpop.permute.xlu0 %62
    %64 = vrot.lane.b32.xlu0 %v59, 5
    %v65 = vpop.permute.xlu0 %64
    %vm68 = vcmask 171048
    %69 = vst.msk [vmem:[#allocation2 + $0x5] sm:$0xff] %vm68, %v63
    %70 = vst.msk [vmem:[#allocation2 + $0xd] sm:$0xff] %vm68, %v65
    %v71 = vld [vmem:[#allocation8] sm:$0xff]
    %v72 = vld [vmem:[#allocation8 + $0x8] sm:$0xff]
    %75 = vrot.lane.b32.xlu0 %v71, 5
    %v76 = vpop.permute.xlu0 %75
    %77 = vrot.lane.b32.xlu0 %v72, 5
    %v78 = vpop.permute.xlu0 %77
    %81 = vst.msk [vmem:[#allocation3 + $0x5] sm:$0xff] %vm68, %v76
    %82 = vst.msk [vmem:[#allocation3 + $0xd] sm:$0xff] %vm68, %v78
    %s83 = scalar_lea.vmem [#allocation5], 16
    %v84 = vld [vmem:[%s83] sm:$0xff]
    %v85 = vld [vmem:[%s83 + $0x8] sm:$0xff]
    %88 = vrot.lane.b32.xlu0 %v84, 31
    %v89 = vpop.permute.xlu0 %88
    %90 = vrot.lane.b32.xlu0 %v85, 31
    %v91 = vpop.permute.xlu0 %90
    %vm94 = vcmask 384248
    %95 = vst.msk [vmem:[#allocation2 + $0x5] sm:$0xff] %vm94, %v89
    %96 = vst.msk [vmem:[#allocation2 + $0xd] sm:$0xff] %vm94, %v91
    %s97 = scalar_lea.vmem [#allocation8], 16
    %v98 = vld [vmem:[%s97] sm:$0xff]
    %v99 = vld [vmem:[%s97 + $0x8] sm:$0xff]
    %102 = vrot.lane.b32.xlu0 %v98, 31
    %v103 = vpop.permute.xlu0 %102
    %104 = vrot.lane.b32.xlu0 %v99, 31
    %v105 = vpop.permute.xlu0 %104
    %108 = vst.msk [vmem:[#allocation3 + $0x5] sm:$0xff] %vm94, %v103
    %109 = vst.msk [vmem:[#allocation3 + $0xd] sm:$0xff] %vm94, %v105
    %s110 = scalar_lea.vmem [#allocation5], 32
    %v111 = vld [vmem:[%s110] sm:$0xff]
    %v112 = vld [vmem:[%s110 + $0x8] sm:$0xff]
    %115 = vrot.lane.b32.xlu0 %v111, 57
    %v116 = vpop.permute.xlu0 %115
    %117 = vrot.lane.b32.xlu0 %v112, 57
    %v118 = vpop.permute.xlu0 %117
    %vm121 = vcmask 597448
    %122 = vst.msk [vmem:[#allocation2 + $0x5] sm:$0xff] %vm121, %v116
    %123 = vst.msk [vmem:[#allocation2 + $0xd] sm:$0xff] %vm121, %v118
    %s124 = scalar_lea.vmem [#allocation8], 32
    %v125 = vld [vmem:[%s124] sm:$0xff]
    %v126 = vld [vmem:[%s124 + $0x8] sm:$0xff]
    %129 = vrot.lane.b32.xlu0 %v125, 57
    %v130 = vpop.permute.xlu0 %129
    %131 = vrot.lane.b32.xlu0 %v126, 57
    %v132 = vpop.permute.xlu0 %131
    %135 = vst.msk [vmem:[#allocation3 + $0x5] sm:$0xff] %vm121, %v130
    %136 = vst.msk [vmem:[#allocation3 + $0xd] sm:$0xff] %vm121, %v132
    %s137 = scalar_lea.vmem [#allocation5], 48
    %v138 = vld [vmem:[%s137] sm:$0xff]
    %v139 = vld [vmem:[%s137 + $0x8] sm:$0xff]
    %142 = vrot.lane.b32.xlu0 %v138, 83
    %v143 = vpop.permute.xlu0 %142
    %144 = vrot.lane.b32.xlu0 %v139, 83
    %v145 = vpop.permute.xlu0 %144
    %vm148 = vcmask 810648
    %149 = vst.msk [vmem:[#allocation2 + $0x5] sm:$0xff] %vm148, %v143
    %150 = vst.msk [vmem:[#allocation2 + $0xd] sm:$0xff] %vm148, %v145
    %s151 = scalar_lea.vmem [#allocation8], 48
    %v152 = vld [vmem:[%s151] sm:$0xff]
    %v153 = vld [vmem:[%s151 + $0x8] sm:$0xff]
    %156 = vrot.lane.b32.xlu0 %v152, 83
    %v157 = vpop.permute.xlu0 %156
    %158 = vrot.lane.b32.xlu0 %v153, 83
    %v159 = vpop.permute.xlu0 %158
    %162 = vst.msk [vmem:[#allocation3 + $0x5] sm:$0xff] %vm148, %v157
    %163 = vst.msk [vmem:[#allocation3 + $0xd] sm:$0xff] %vm148, %v159
    %s164 = scalar_lea.vmem [#allocation5], 64
    %v165 = vld [vmem:[%s164] sm:$0xff]
    %v166 = vld [vmem:[%s164 + $0x8] sm:$0xff]
    %169 = vrot.lane.b32.xlu0 %v165, 5
    %v170 = vpop.permute.xlu0 %169
    %171 = vrot.lane.b32.xlu0 %v166, 5
    %v172 = vpop.permute.xlu0 %171
    %s175 = scalar_lea.vmem [#allocation2], 32
    %176 = vst.msk [vmem:[%s175 + $0x5] sm:$0xff] %vm68, %v170
    %177 = vst.msk [vmem:[%s175 + $0xd] sm:$0xff] %vm68, %v172
    %s178 = scalar_lea.vmem [#allocation8], 64
    %v179 = vld [vmem:[%s178] sm:$0xff]
    %v180 = vld [vmem:[%s178 + $0x8] sm:$0xff]
    %183 = vrot.lane.b32.xlu0 %v179, 5
    %v184 = vpop.permute.xlu0 %183
    %185 = vrot.lane.b32.xlu0 %v180, 5
    %v186 = vpop.permute.xlu0 %185
    %s189 = scalar_lea.vmem [#allocation3], 32
    %190 = vst.msk [vmem:[%s189 + $0x5] sm:$0xff] %vm68, %v184
    %191 = vst.msk [vmem:[%s189 + $0xd] sm:$0xff] %vm68, %v186
    %s192 = scalar_lea.vmem [#allocation5], 80
    %v193 = vld [vmem:[%s192] sm:$0xff]
    %v194 = vld [vmem:[%s192 + $0x8] sm:$0xff]
    %197 = vrot.lane.b32.xlu0 %v193, 31
    %v198 = vpop.permute.xlu0 %197
    %199 = vrot.lane.b32.xlu0 %v194, 31
    %v200 = vpop.permute.xlu0 %199
    %203 = vst.msk [vmem:[%s175 + $0x5] sm:$0xff] %vm94, %v198
    %204 = vst.msk [vmem:[%s175 + $0xd] sm:$0xff] %vm94, %v200
    %s205 = scalar_lea.vmem [#allocation8], 80
    %v206 = vld [vmem:[%s205] sm:$0xff]
    %v207 = vld [vmem:[%s205 + $0x8] sm:$0xff]
    %210 = vrot.lane.b32.xlu0 %v206, 31
    %v211 = vpop.permute.xlu0 %210
    %212 = vrot.lane.b32.xlu0 %v207, 31
    %v213 = vpop.permute.xlu0 %212
    %216 = vst.msk [vmem:[%s189 + $0x5] sm:$0xff] %vm94, %v211
    %217 = vst.msk [vmem:[%s189 + $0xd] sm:$0xff] %vm94, %v213
    %s218 = scalar_lea.vmem [#allocation5], 96
    %v219 = vld [vmem:[%s218] sm:$0xff]
    %v220 = vld [vmem:[%s218 + $0x8] sm:$0xff]
    %223 = vrot.lane.b32.xlu0 %v219, 57
    %v224 = vpop.permute.xlu0 %223
    %225 = vrot.lane.b32.xlu0 %v220, 57
    %v226 = vpop.permute.xlu0 %225
    %229 = vst.msk [vmem:[%s175 + $0x5] sm:$0xff] %vm121, %v224
    %230 = vst.msk [vmem:[%s175 + $0xd] sm:$0xff] %vm121, %v226
    %s231 = scalar_lea.vmem [#allocation8], 96
    %v232 = vld [vmem:[%s231] sm:$0xff]
    %v233 = vld [vmem:[%s231 + $0x8] sm:$0xff]
    %236 = vrot.lane.b32.xlu0 %v232, 57
    %v237 = vpop.permute.xlu0 %236
    %238 = vrot.lane.b32.xlu0 %v233, 57
    %v239 = vpop.permute.xlu0 %238
    %242 = vst.msk [vmem:[%s189 + $0x5] sm:$0xff] %vm121, %v237
    %243 = vst.msk [vmem:[%s189 + $0xd] sm:$0xff] %vm121, %v239
    %s244 = scalar_lea.vmem [#allocation5], 112
    %v245 = vld [vmem:[%s244] sm:$0xff]
    %v246 = vld [vmem:[%s244 + $0x8] sm:$0xff]
    %249 = vrot.lane.b32.xlu0 %v245, 83
    %v250 = vpop.permute.xlu0 %249
    %251 = vrot.lane.b32.xlu0 %v246, 83
    %v252 = vpop.permute.xlu0 %251
    %255 = vst.msk [vmem:[%s175 + $0x5] sm:$0xff] %vm148, %v250
    %256 = vst.msk [vmem:[%s175 + $0xd] sm:$0xff] %vm148, %v252
    %s257 = scalar_lea.vmem [#allocation8], 112
    %v258 = vld [vmem:[%s257] sm:$0xff]
    %v259 = vld [vmem:[%s257 + $0x8] sm:$0xff]
    %262 = vrot.lane.b32.xlu0 %v258, 83
    %v263 = vpop.permute.xlu0 %262
    %264 = vrot.lane.b32.xlu0 %v259, 83
    %v265 = vpop.permute.xlu0 %264
    %268 = vst.msk [vmem:[%s189 + $0x5] sm:$0xff] %vm148, %v263
    %269 = vst.msk [vmem:[%s189 + $0xd] sm:$0xff] %vm148, %v265
    %v270 = vld [vmem:[#allocation2] sm:$0xff]
    %v271 = vld [vmem:[#allocation2 + $0x8] sm:$0xff]
    %v272 = vld [vmem:[#allocation2 + $0x10] sm:$0xff]
    %v273 = vld [vmem:[#allocation2 + $0x18] sm:$0x3]
    %v274 = vld [vmem:[#allocation2 + $0x20] sm:$0xff]
    %v275 = vld [vmem:[#allocation2 + $0x28] sm:$0xff]
    %v276 = vld [vmem:[#allocation2 + $0x30] sm:$0xff]
    %v277 = vld [vmem:[#allocation2 + $0x38] sm:$0x3]
    %v278 = vld [vmem:[#allocation3] sm:$0xff]
    %v279 = vld [vmem:[#allocation3 + $0x8] sm:$0xff]
    %v280 = vld [vmem:[#allocation3 + $0x10] sm:$0xff]
    %v281 = vld [vmem:[#allocation3 + $0x18] sm:$0x3]
    %v282 = vld [vmem:[#allocation3 + $0x20] sm:$0xff]
    %v283 = vld [vmem:[#allocation3 + $0x28] sm:$0xff]
    %v284 = vld [vmem:[#allocation3 + $0x30] sm:$0xff]
    %v285 = vld [vmem:[#allocation3 + $0x38] sm:$0x3]
    %v286 = vmul.f32 %v270, 0.26601174
    %v287 = vmul.f32 %v271, 0.26601174
    %v288 = vmul.f32 %v272, 0.26601174
    %v289 = vmul.f32 %v273, 0.26601174
    %v290 = vmul.f32 %v274, 0.26601174
    %v291 = vmul.f32 %v275, 0.26601174
    %v292 = vmul.f32 %v276, 0.26601174
    %v293 = vmul.f32 %v277, 0.26601174
    %302 = vrot.lane.b32.xlu0 %v270, 118
    %v303 = vpop.permute.xlu0 %302
    %304 = vrot.lane.b32.xlu0 %v271, 118
    %v305 = vpop.permute.xlu0 %304
    %306 = vrot.lane.b32.xlu0 %v272, 118
    %v307 = vpop.permute.xlu0 %306
    %308 = vrot.lane.b32.xlu0 %v273, 118
    %v309 = vpop.permute.xlu0 %308
    %310 = vrot.lane.b32.xlu0 %v274, 118
    %v311 = vpop.permute.xlu0 %310
    %312 = vrot.lane.b32.xlu0 %v275, 118
    %v313 = vpop.permute.xlu0 %312
    %314 = vrot.lane.b32.xlu0 %v276, 118
    %v315 = vpop.permute.xlu0 %314
    %316 = vrot.lane.b32.xlu0 %v277, 118
    %v317 = vpop.permute.xlu0 %316
    %v326 = vadd.f32 %v270, %v303
    %v327 = vadd.f32 %v271, %v305
    %v328 = vadd.f32 %v272, %v307
    %v329 = vadd.f32 %v273, %v309
    %v330 = vadd.f32 %v274, %v311
    %v331 = vadd.f32 %v275, %v313
    %v332 = vadd.f32 %v276, %v315
    %v333 = vadd.f32 %v277, %v317
    %v334 = vmul.f32 %v326, 0.0010283802
    %v335 = vmul.f32 %v327, 0.0010283802
    %v336 = vmul.f32 %v328, 0.0010283802
    %v337 = vmul.f32 %v329, 0.0010283802
    %v338 = vmul.f32 %v330, 0.0010283802
    %v339 = vmul.f32 %v331, 0.0010283802
    %v340 = vmul.f32 %v332, 0.0010283802
    %v341 = vmul.f32 %v333, 0.0010283802
    %350 = vrot.lane.b32.xlu0 %v334, 5
    %v351 = vpop.permute.xlu0 %350
    %352 = vrot.lane.b32.xlu0 %v335, 5
    %v353 = vpop.permute.xlu0 %352
    %354 = vrot.lane.b32.xlu0 %v336, 5
    %v355 = vpop.permute.xlu0 %354
    %356 = vrot.lane.b32.xlu0 %v337, 5
    %v357 = vpop.permute.xlu0 %356
    %358 = vrot.lane.b32.xlu0 %v338, 5
    %v359 = vpop.permute.xlu0 %358
    %360 = vrot.lane.b32.xlu0 %v339, 5
    %v361 = vpop.permute.xlu0 %360
    %362 = vrot.lane.b32.xlu0 %v340, 5
    %v363 = vpop.permute.xlu0 %362
    %364 = vrot.lane.b32.xlu0 %v341, 5
    %v365 = vpop.permute.xlu0 %364
    %v374 = vadd.f32 %v286, %v351
    %v375 = vadd.f32 %v287, %v353
    %v376 = vadd.f32 %v288, %v355
    %v377 = vadd.f32 %v289, %v357
    %v378 = vadd.f32 %v290, %v359
    %v379 = vadd.f32 %v291, %v361
    %v380 = vadd.f32 %v292, %v363
    %v381 = vadd.f32 %v293, %v365
    %382 = vrot.lane.b32.xlu0 %v270, 120
    %v383 = vpop.permute.xlu0 %382
    %384 = vrot.lane.b32.xlu0 %v271, 120
    %v385 = vpop.permute.xlu0 %384
    %386 = vrot.lane.b32.xlu0 %v272, 120
    %v387 = vpop.permute.xlu0 %386
    %388 = vrot.lane.b32.xlu0 %v273, 120
    %v389 = vpop.permute.xlu0 %388
    %390 = vrot.lane.b32.xlu0 %v274, 120
    %v391 = vpop.permute.xlu0 %390
    %392 = vrot.lane.b32.xlu0 %v275, 120
    %v393 = vpop.permute.xlu0 %392
    %394 = vrot.lane.b32.xlu0 %v276, 120
    %v395 = vpop.permute.xlu0 %394
    %396 = vrot.lane.b32.xlu0 %v277, 120
    %v397 = vpop.permute.xlu0 %396
    %v406 = vadd.f32 %v270, %v383
    %v407 = vadd.f32 %v271, %v385
    %v408 = vadd.f32 %v272, %v387
    %v409 = vadd.f32 %v273, %v389
    %v410 = vadd.f32 %v274, %v391
    %v411 = vadd.f32 %v275, %v393
    %v412 = vadd.f32 %v276, %v395
    %v413 = vadd.f32 %v277, %v397
    %v414 = vmul.f32 %v406, 0.0075987587
    %v415 = vmul.f32 %v407, 0.0075987587
    %v416 = vmul.f32 %v408, 0.0075987587
    %v417 = vmul.f32 %v409, 0.0075987587
    %v418 = vmul.f32 %v410, 0.0075987587
    %v419 = vmul.f32 %v411, 0.0075987587
    %v420 = vmul.f32 %v412, 0.0075987587
    %v421 = vmul.f32 %v413, 0.0075987587
    %430 = vrot.lane.b32.xlu0 %v414, 4
    %v431 = vpop.permute.xlu0 %430
    %432 = vrot.lane.b32.xlu0 %v415, 4
    %v433 = vpop.permute.xlu0 %432
    %434 = vrot.lane.b32.xlu0 %v416, 4
    %v435 = vpop.permute.xlu0 %434
    %436 = vrot.lane.b32.xlu0 %v417, 4
    %v437 = vpop.permute.xlu0 %436
    %438 = vrot.lane.b32.xlu0 %v418, 4
    %v439 = vpop.permute.xlu0 %438
    %440 = vrot.lane.b32.xlu0 %v419, 4
    %v441 = vpop.permute.xlu0 %440
    %442 = vrot.lane.b32.xlu0 %v420, 4
    %v443 = vpop.permute.xlu0 %442
    %444 = vrot.lane.b32.xlu0 %v421, 4
    %v445 = vpop.permute.xlu0 %444
    %v454 = vadd.f32 %v374, %v431
    %v455 = vadd.f32 %v375, %v433
    %v456 = vadd.f32 %v376, %v435
    %v457 = vadd.f32 %v377, %v437
    %v458 = vadd.f32 %v378, %v439
    %v459 = vadd.f32 %v379, %v441
    %v460 = vadd.f32 %v380, %v443
    %v461 = vadd.f32 %v381, %v445
    %462 = vrot.lane.b32.xlu0 %v270, 122
    %v463 = vpop.permute.xlu0 %462
    %464 = vrot.lane.b32.xlu0 %v271, 122
    %v465 = vpop.permute.xlu0 %464
    %466 = vrot.lane.b32.xlu0 %v272, 122
    %v467 = vpop.permute.xlu0 %466
    %468 = vrot.lane.b32.xlu0 %v273, 122
    %v469 = vpop.permute.xlu0 %468
    %470 = vrot.lane.b32.xlu0 %v274, 122
    %v471 = vpop.permute.xlu0 %470
    %472 = vrot.lane.b32.xlu0 %v275, 122
    %v473 = vpop.permute.xlu0 %472
    %474 = vrot.lane.b32.xlu0 %v276, 122
    %v475 = vpop.permute.xlu0 %474
    %476 = vrot.lane.b32.xlu0 %v277, 122
    %v477 = vpop.permute.xlu0 %476
    %v486 = vadd.f32 %v270, %v463
    %v487 = vadd.f32 %v271, %v465
    %v488 = vadd.f32 %v272, %v467
    %v489 = vadd.f32 %v273, %v469
    %v490 = vadd.f32 %v274, %v471
    %v491 = vadd.f32 %v275, %v473
    %v492 = vadd.f32 %v276, %v475
    %v493 = vadd.f32 %v277, %v477
    %v494 = vmul.f32 %v486, 0.036000773
    %v495 = vmul.f32 %v487, 0.036000773
    %v496 = vmul.f32 %v488, 0.036000773
    %v497 = vmul.f32 %v489, 0.036000773
    %v498 = vmul.f32 %v490, 0.036000773
    %v499 = vmul.f32 %v491, 0.036000773
    %v500 = vmul.f32 %v492, 0.036000773
    %v501 = vmul.f32 %v493, 0.036000773
    %510 = vrot.lane.b32.xlu0 %v494, 3
    %v511 = vpop.permute.xlu0 %510
    %512 = vrot.lane.b32.xlu0 %v495, 3
    %v513 = vpop.permute.xlu0 %512
    %514 = vrot.lane.b32.xlu0 %v496, 3
    %v515 = vpop.permute.xlu0 %514
    %516 = vrot.lane.b32.xlu0 %v497, 3
    %v517 = vpop.permute.xlu0 %516
    %518 = vrot.lane.b32.xlu0 %v498, 3
    %v519 = vpop.permute.xlu0 %518
    %520 = vrot.lane.b32.xlu0 %v499, 3
    %v521 = vpop.permute.xlu0 %520
    %522 = vrot.lane.b32.xlu0 %v500, 3
    %v523 = vpop.permute.xlu0 %522
    %524 = vrot.lane.b32.xlu0 %v501, 3
    %v525 = vpop.permute.xlu0 %524
    %v534 = vadd.f32 %v454, %v511
    %v535 = vadd.f32 %v455, %v513
    %v536 = vadd.f32 %v456, %v515
    %v537 = vadd.f32 %v457, %v517
    %v538 = vadd.f32 %v458, %v519
    %v539 = vadd.f32 %v459, %v521
    %v540 = vadd.f32 %v460, %v523
    %v541 = vadd.f32 %v461, %v525
    %542 = vrot.lane.b32.xlu0 %v270, 124
    %v543 = vpop.permute.xlu0 %542
    %544 = vrot.lane.b32.xlu0 %v271, 124
    %v545 = vpop.permute.xlu0 %544
    %546 = vrot.lane.b32.xlu0 %v272, 124
    %v547 = vpop.permute.xlu0 %546
    %548 = vrot.lane.b32.xlu0 %v273, 124
    %v549 = vpop.permute.xlu0 %548
    %550 = vrot.lane.b32.xlu0 %v274, 124
    %v551 = vpop.permute.xlu0 %550
    %552 = vrot.lane.b32.xlu0 %v275, 124
    %v553 = vpop.permute.xlu0 %552
    %554 = vrot.lane.b32.xlu0 %v276, 124
    %v555 = vpop.permute.xlu0 %554
    %556 = vrot.lane.b32.xlu0 %v277, 124
    %v557 = vpop.permute.xlu0 %556
    %v566 = vadd.f32 %v270, %v543
    %v567 = vadd.f32 %v271, %v545
    %v568 = vadd.f32 %v272, %v547
    %v569 = vadd.f32 %v273, %v549
    %v570 = vadd.f32 %v274, %v551
    %v571 = vadd.f32 %v275, %v553
    %v572 = vadd.f32 %v276, %v555
    %v573 = vadd.f32 %v277, %v557
    %v574 = vmul.f32 %v566, 0.109360695
    %v575 = vmul.f32 %v567, 0.109360695
    %v576 = vmul.f32 %v568, 0.109360695
    %v577 = vmul.f32 %v569, 0.109360695
    %v578 = vmul.f32 %v570, 0.109360695
    %v579 = vmul.f32 %v571, 0.109360695
    %v580 = vmul.f32 %v572, 0.109360695
    %v581 = vmul.f32 %v573, 0.109360695
    %590 = vrot.lane.b32.xlu0 %v574, 2
    %v591 = vpop.permute.xlu0 %590
    %592 = vrot.lane.b32.xlu0 %v575, 2
    %v593 = vpop.permute.xlu0 %592
    %594 = vrot.lane.b32.xlu0 %v576, 2
    %v595 = vpop.permute.xlu0 %594
    %596 = vrot.lane.b32.xlu0 %v577, 2
    %v597 = vpop.permute.xlu0 %596
    %598 = vrot.lane.b32.xlu0 %v578, 2
    %v599 = vpop.permute.xlu0 %598
    %600 = vrot.lane.b32.xlu0 %v579, 2
    %v601 = vpop.permute.xlu0 %600
    %602 = vrot.lane.b32.xlu0 %v580, 2
    %v603 = vpop.permute.xlu0 %602
    %604 = vrot.lane.b32.xlu0 %v581, 2
    %v605 = vpop.permute.xlu0 %604
    %v614 = vadd.f32 %v534, %v591
    %v615 = vadd.f32 %v535, %v593
    %v616 = vadd.f32 %v536, %v595
    %v617 = vadd.f32 %v537, %v597
    %v618 = vadd.f32 %v538, %v599
    %v619 = vadd.f32 %v539, %v601
    %v620 = vadd.f32 %v540, %v603
    %v621 = vadd.f32 %v541, %v605
    %622 = vrot.lane.b32.xlu0 %v270, 126
    %v623 = vpop.permute.xlu0 %622
    %624 = vrot.lane.b32.xlu0 %v271, 126
    %v625 = vpop.permute.xlu0 %624
    %626 = vrot.lane.b32.xlu0 %v272, 126
    %v627 = vpop.permute.xlu0 %626
    %628 = vrot.lane.b32.xlu0 %v273, 126
    %v629 = vpop.permute.xlu0 %628
    %630 = vrot.lane.b32.xlu0 %v274, 126
    %v631 = vpop.permute.xlu0 %630
    %632 = vrot.lane.b32.xlu0 %v275, 126
    %v633 = vpop.permute.xlu0 %632
    %634 = vrot.lane.b32.xlu0 %v276, 126
    %v635 = vpop.permute.xlu0 %634
    %636 = vrot.lane.b32.xlu0 %v277, 126
    %v637 = vpop.permute.xlu0 %636
    %v646 = vadd.f32 %v270, %v623
    %v647 = vadd.f32 %v271, %v625
    %v648 = vadd.f32 %v272, %v627
    %v649 = vadd.f32 %v273, %v629
    %v650 = vadd.f32 %v274, %v631
    %v651 = vadd.f32 %v275, %v633
    %v652 = vadd.f32 %v276, %v635
    %v653 = vadd.f32 %v277, %v637
    %v654 = vmul.f32 %v646, 0.21300554
    %v655 = vmul.f32 %v647, 0.21300554
    %v656 = vmul.f32 %v648, 0.21300554
    %v657 = vmul.f32 %v649, 0.21300554
    %v658 = vmul.f32 %v650, 0.21300554
    %v659 = vmul.f32 %v651, 0.21300554
    %v660 = vmul.f32 %v652, 0.21300554
    %v661 = vmul.f32 %v653, 0.21300554
    %670 = vrot.lane.b32.xlu0 %v654, 1
    %v671 = vpop.permute.xlu0 %670
    %672 = vrot.lane.b32.xlu0 %v655, 1
    %v673 = vpop.permute.xlu0 %672
    %674 = vrot.lane.b32.xlu0 %v656, 1
    %v675 = vpop.permute.xlu0 %674
    %676 = vrot.lane.b32.xlu0 %v657, 1
    %v677 = vpop.permute.xlu0 %676
    %678 = vrot.lane.b32.xlu0 %v658, 1
    %v679 = vpop.permute.xlu0 %678
    %680 = vrot.lane.b32.xlu0 %v659, 1
    %v681 = vpop.permute.xlu0 %680
    %682 = vrot.lane.b32.xlu0 %v660, 1
    %v683 = vpop.permute.xlu0 %682
    %684 = vrot.lane.b32.xlu0 %v661, 1
    %v685 = vpop.permute.xlu0 %684
    %v694 = vadd.f32 %v614, %v671
    %v695 = vadd.f32 %v615, %v673
    %v696 = vadd.f32 %v616, %v675
    %v697 = vadd.f32 %v617, %v677
    %v698 = vadd.f32 %v618, %v679
    %v699 = vadd.f32 %v619, %v681
    %v700 = vadd.f32 %v620, %v683
    %v701 = vadd.f32 %v621, %v685
    %710 = vrot.lane.b32.xlu0 %v694, 123
    %v711 = vpop.permute.xlu0 %710
    %712 = vrot.lane.b32.xlu0 %v695, 123
    %v713 = vpop.permute.xlu0 %712
    %714 = vrot.lane.b32.xlu0 %v696, 123
    %v715 = vpop.permute.xlu0 %714
    %716 = vrot.lane.b32.xlu0 %v697, 123
    %v717 = vpop.permute.xlu0 %716
    %718 = vrot.lane.b32.xlu0 %v698, 123
    %v719 = vpop.permute.xlu0 %718
    %720 = vrot.lane.b32.xlu0 %v699, 123
    %v721 = vpop.permute.xlu0 %720
    %722 = vrot.lane.b32.xlu0 %v700, 123
    %v723 = vpop.permute.xlu0 %722
    %724 = vrot.lane.b32.xlu0 %v701, 123
    %v725 = vpop.permute.xlu0 %724
    %vm734 = vcmask 769024
    %735 = vst.msk [vmem:[#allocation4] sm:$0xff] %vm734, %v711
    %736 = vst.msk [vmem:[#allocation4 + $0x8] sm:$0xff] %vm734, %v713
    %737 = vst.msk [vmem:[#allocation4 + $0x10] sm:$0xff] %vm734, %v715
    %vm738 = vcmask 762880
    %739 = vst.msk [vmem:[#allocation4 + $0x18] sm:$0x3] %vm738, %v717
    %740 = vst.msk [vmem:[#allocation4 + $0x20] sm:$0xff] %vm734, %v719
    %741 = vst.msk [vmem:[#allocation4 + $0x28] sm:$0xff] %vm734, %v721
    %742 = vst.msk [vmem:[#allocation4 + $0x30] sm:$0xff] %vm734, %v723
    %743 = vst.msk [vmem:[#allocation4 + $0x38] sm:$0x3] %vm738, %v725
    %v744 = vld [vmem:[#allocation4 + $0x5] sm:$0xff]
    %v745 = vld [vmem:[#allocation4 + $0xd] sm:$0xff]
    %v746 = vld [vmem:[#allocation4 + $0x25] sm:$0xff]
    %v747 = vld [vmem:[#allocation4 + $0x2d] sm:$0xff]
    %v748 = vmul.f32 %v744, 0.26601174
    %v749 = vmul.f32 %v745, 0.26601174
    %v750 = vmul.f32 %v746, 0.26601174
    %v751 = vmul.f32 %v747, 0.26601174
    %v752 = vld [vmem:[#allocation4] sm:$0xff]
    %v753 = vld [vmem:[#allocation4 + $0x8] sm:$0xff]
    %v754 = vld [vmem:[#allocation4 + $0x20] sm:$0xff]
    %v755 = vld [vmem:[#allocation4 + $0x28] sm:$0xff]
    %v756 = vld [vmem:[#allocation4 + $0xa] sm:$0xff]
    %v757 = vld [vmem:[#allocation4 + $0x12] sm:$0xff]
    %v758 = vld [vmem:[#allocation4 + $0x2a] sm:$0xff]
    %v759 = vld [vmem:[#allocation4 + $0x32] sm:$0xff]
    %v760 = vadd.f32 %v752, %v756
    %v761 = vadd.f32 %v753, %v757
    %v762 = vadd.f32 %v754, %v758
    %v763 = vadd.f32 %v755, %v759
    %v764 = vmul.f32 %v760, 0.0010283802
    %v765 = vmul.f32 %v761, 0.0010283802
    %v766 = vmul.f32 %v762, 0.0010283802
    %v767 = vmul.f32 %v763, 0.0010283802
    %v768 = vadd.f32 %v748, %v764
    %v769 = vadd.f32 %v749, %v765
    %v770 = vadd.f32 %v750, %v766
    %v771 = vadd.f32 %v751, %v767
    %v772 = vld [vmem:[#allocation4 + $0x1] sm:$0xff]
    %v773 = vld [vmem:[#allocation4 + $0x9] sm:$0xff]
    %v774 = vld [vmem:[#allocation4 + $0x21] sm:$0xff]
    %v775 = vld [vmem:[#allocation4 + $0x29] sm:$0xff]
    %v776 = vld [vmem:[#allocation4 + $0x11] sm:$0xff]
    %v777 = vld [vmem:[#allocation4 + $0x31] sm:$0xff]
    %v778 = vadd.f32 %v772, %v773
    %v779 = vadd.f32 %v773, %v776
    %v780 = vadd.f32 %v774, %v775
    %v781 = vadd.f32 %v775, %v777
    %v782 = vmul.f32 %v778, 0.0075987587
    %v783 = vmul.f32 %v779, 0.0075987587
    %v784 = vmul.f32 %v780, 0.0075987587
    %v785 = vmul.f32 %v781, 0.0075987587
    %v786 = vadd.f32 %v768, %v782
    %v787 = vadd.f32 %v769, %v783
    %v788 = vadd.f32 %v770, %v784
    %v789 = vadd.f32 %v771, %v785
    %v790 = vld [vmem:[#allocation4 + $0x2] sm:$0xff]
    %v791 = vld [vmem:[#allocation4 + $0x22] sm:$0xff]
    %v792 = vld [vmem:[#allocation4 + $0x10] sm:$0xff]
    %v793 = vld [vmem:[#allocation4 + $0x30] sm:$0xff]
    %v794 = vadd.f32 %v790, %v753
    %v795 = vadd.f32 %v756, %v792
    %v796 = vadd.f32 %v791, %v755
    %v797 = vadd.f32 %v758, %v793
    %v798 = vmul.f32 %v794, 0.036000773
    %v799 = vmul.f32 %v795, 0.036000773
    %v800 = vmul.f32 %v796, 0.036000773
    %v801 = vmul.f32 %v797, 0.036000773
    %v802 = vadd.f32 %v786, %v798
    %v803 = vadd.f32 %v787, %v799
    %v804 = vadd.f32 %v788, %v800
    %v805 = vadd.f32 %v789, %v801
    %v806 = vld [vmem:[#allocation4 + $0x3] sm:$0xff]
    %v807 = vld [vmem:[#allocation4 + $0xb] sm:$0xff]
    %v808 = vld [vmem:[#allocation4 + $0x23] sm:$0xff]
    %v809 = vld [vmem:[#allocation4 + $0x2b] sm:$0xff]
    %v810 = vld [vmem:[#allocation4 + $0x7] sm:$0xff]
    %v811 = vld [vmem:[#allocation4 + $0xf] sm:$0xff]
    %v812 = vld [vmem:[#allocation4 + $0x27] sm:$0xff]
    %v813 = vld [vmem:[#allocation4 + $0x2f] sm:$0xff]
    %v814 = vadd.f32 %v806, %v810
    %v815 = vadd.f32 %v807, %v811
    %v816 = vadd.f32 %v808, %v812
    %v817 = vadd.f32 %v809, %v813
    %v818 = vmul.f32 %v814, 0.109360695
    %v819 = vmul.f32 %v815, 0.109360695
    %v820 = vmul.f32 %v816, 0.109360695
    %v821 = vmul.f32 %v817, 0.109360695
    %v822 = vadd.f32 %v802, %v818
    %v823 = vadd.f32 %v803, %v819
    %v824 = vadd.f32 %v804, %v820
    %v825 = vadd.f32 %v805, %v821
    %v826 = vld [vmem:[#allocation4 + $0x4] sm:$0xff]
    %v827 = vld [vmem:[#allocation4 + $0xc] sm:$0xff]
    %v828 = vld [vmem:[#allocation4 + $0x24] sm:$0xff]
    %v829 = vld [vmem:[#allocation4 + $0x2c] sm:$0xff]
    %v830 = vld [vmem:[#allocation4 + $0x6] sm:$0xff]
    %v831 = vld [vmem:[#allocation4 + $0xe] sm:$0xff]
    %v832 = vld [vmem:[#allocation4 + $0x26] sm:$0xff]
    %v833 = vld [vmem:[#allocation4 + $0x2e] sm:$0xff]
    %v834 = vadd.f32 %v826, %v830
    %v835 = vadd.f32 %v827, %v831
    %v836 = vadd.f32 %v828, %v832
    %v837 = vadd.f32 %v829, %v833
    %v838 = vmul.f32 %v834, 0.21300554
    %v839 = vmul.f32 %v835, 0.21300554
    %v840 = vmul.f32 %v836, 0.21300554
    %v841 = vmul.f32 %v837, 0.21300554
    %v842 = vadd.f32 %v822, %v838
    %v843 = vadd.f32 %v823, %v839
    %v844 = vadd.f32 %v824, %v840
    %v845 = vadd.f32 %v825, %v841
    %v846 = vmul.f32 %v278, 0.26601174
    %v847 = vmul.f32 %v279, 0.26601174
    %v848 = vmul.f32 %v280, 0.26601174
    %v849 = vmul.f32 %v281, 0.26601174
    %v850 = vmul.f32 %v282, 0.26601174
    %v851 = vmul.f32 %v283, 0.26601174
    %v852 = vmul.f32 %v284, 0.26601174
    %v853 = vmul.f32 %v285, 0.26601174
    %862 = vrot.lane.b32.xlu0 %v278, 118
    %v863 = vpop.permute.xlu0 %862
    %864 = vrot.lane.b32.xlu0 %v279, 118
    %v865 = vpop.permute.xlu0 %864
    %866 = vrot.lane.b32.xlu0 %v280, 118
    %v867 = vpop.permute.xlu0 %866
    %868 = vrot.lane.b32.xlu0 %v281, 118
    %v869 = vpop.permute.xlu0 %868
    %870 = vrot.lane.b32.xlu0 %v282, 118
    %v871 = vpop.permute.xlu0 %870
    %872 = vrot.lane.b32.xlu0 %v283, 118
    %v873 = vpop.permute.xlu0 %872
    %874 = vrot.lane.b32.xlu0 %v284, 118
    %v875 = vpop.permute.xlu0 %874
    %876 = vrot.lane.b32.xlu0 %v285, 118
    %v877 = vpop.permute.xlu0 %876
    %v886 = vadd.f32 %v278, %v863
    %v887 = vadd.f32 %v279, %v865
    %v888 = vadd.f32 %v280, %v867
    %v889 = vadd.f32 %v281, %v869
    %v890 = vadd.f32 %v282, %v871
    %v891 = vadd.f32 %v283, %v873
    %v892 = vadd.f32 %v284, %v875
    %v893 = vadd.f32 %v285, %v877
    %v894 = vmul.f32 %v886, 0.0010283802
    %v895 = vmul.f32 %v887, 0.0010283802
    %v896 = vmul.f32 %v888, 0.0010283802
    %v897 = vmul.f32 %v889, 0.0010283802
    %v898 = vmul.f32 %v890, 0.0010283802
    %v899 = vmul.f32 %v891, 0.0010283802
    %v900 = vmul.f32 %v892, 0.0010283802
    %v901 = vmul.f32 %v893, 0.0010283802
    %910 = vrot.lane.b32.xlu0 %v894, 5
    %v911 = vpop.permute.xlu0 %910
    %912 = vrot.lane.b32.xlu0 %v895, 5
    %v913 = vpop.permute.xlu0 %912
    %914 = vrot.lane.b32.xlu0 %v896, 5
    %v915 = vpop.permute.xlu0 %914
    %916 = vrot.lane.b32.xlu0 %v897, 5
    %v917 = vpop.permute.xlu0 %916
    %918 = vrot.lane.b32.xlu0 %v898, 5
    %v919 = vpop.permute.xlu0 %918
    %920 = vrot.lane.b32.xlu0 %v899, 5
    %v921 = vpop.permute.xlu0 %920
    %922 = vrot.lane.b32.xlu0 %v900, 5
    %v923 = vpop.permute.xlu0 %922
    %924 = vrot.lane.b32.xlu0 %v901, 5
    %v925 = vpop.permute.xlu0 %924
    %v934 = vadd.f32 %v846, %v911
    %v935 = vadd.f32 %v847, %v913
    %v936 = vadd.f32 %v848, %v915
    %v937 = vadd.f32 %v849, %v917
    %v938 = vadd.f32 %v850, %v919
    %v939 = vadd.f32 %v851, %v921
    %v940 = vadd.f32 %v852, %v923
    %v941 = vadd.f32 %v853, %v925
    %942 = vrot.lane.b32.xlu0 %v278, 120
    %v943 = vpop.permute.xlu0 %942
    %944 = vrot.lane.b32.xlu0 %v279, 120
    %v945 = vpop.permute.xlu0 %944
    %946 = vrot.lane.b32.xlu0 %v280, 120
    %v947 = vpop.permute.xlu0 %946
    %948 = vrot.lane.b32.xlu0 %v281, 120
    %v949 = vpop.permute.xlu0 %948
    %950 = vrot.lane.b32.xlu0 %v282, 120
    %v951 = vpop.permute.xlu0 %950
    %952 = vrot.lane.b32.xlu0 %v283, 120
    %v953 = vpop.permute.xlu0 %952
    %954 = vrot.lane.b32.xlu0 %v284, 120
    %v955 = vpop.permute.xlu0 %954
    %956 = vrot.lane.b32.xlu0 %v285, 120
    %v957 = vpop.permute.xlu0 %956
    %v966 = vadd.f32 %v278, %v943
    %v967 = vadd.f32 %v279, %v945
    %v968 = vadd.f32 %v280, %v947
    %v969 = vadd.f32 %v281, %v949
    %v970 = vadd.f32 %v282, %v951
    %v971 = vadd.f32 %v283, %v953
    %v972 = vadd.f32 %v284, %v955
    %v973 = vadd.f32 %v285, %v957
    %v974 = vmul.f32 %v966, 0.0075987587
    %v975 = vmul.f32 %v967, 0.0075987587
    %v976 = vmul.f32 %v968, 0.0075987587
    %v977 = vmul.f32 %v969, 0.0075987587
    %v978 = vmul.f32 %v970, 0.0075987587
    %v979 = vmul.f32 %v971, 0.0075987587
    %v980 = vmul.f32 %v972, 0.0075987587
    %v981 = vmul.f32 %v973, 0.0075987587
    %990 = vrot.lane.b32.xlu0 %v974, 4
    %v991 = vpop.permute.xlu0 %990
    %992 = vrot.lane.b32.xlu0 %v975, 4
    %v993 = vpop.permute.xlu0 %992
    %994 = vrot.lane.b32.xlu0 %v976, 4
    %v995 = vpop.permute.xlu0 %994
    %996 = vrot.lane.b32.xlu0 %v977, 4
    %v997 = vpop.permute.xlu0 %996
    %998 = vrot.lane.b32.xlu0 %v978, 4
    %v999 = vpop.permute.xlu0 %998
    %1000 = vrot.lane.b32.xlu0 %v979, 4
    %v1001 = vpop.permute.xlu0 %1000
    %1002 = vrot.lane.b32.xlu0 %v980, 4
    %v1003 = vpop.permute.xlu0 %1002
    %1004 = vrot.lane.b32.xlu0 %v981, 4
    %v1005 = vpop.permute.xlu0 %1004
    %v1014 = vadd.f32 %v934, %v991
    %v1015 = vadd.f32 %v935, %v993
    %v1016 = vadd.f32 %v936, %v995
    %v1017 = vadd.f32 %v937, %v997
    %v1018 = vadd.f32 %v938, %v999
    %v1019 = vadd.f32 %v939, %v1001
    %v1020 = vadd.f32 %v940, %v1003
    %v1021 = vadd.f32 %v941, %v1005
    %1022 = vrot.lane.b32.xlu0 %v278, 122
    %v1023 = vpop.permute.xlu0 %1022
    %1024 = vrot.lane.b32.xlu0 %v279, 122
    %v1025 = vpop.permute.xlu0 %1024
    %1026 = vrot.lane.b32.xlu0 %v280, 122
    %v1027 = vpop.permute.xlu0 %1026
    %1028 = vrot.lane.b32.xlu0 %v281, 122
    %v1029 = vpop.permute.xlu0 %1028
    %1030 = vrot.lane.b32.xlu0 %v282, 122
    %v1031 = vpop.permute.xlu0 %1030
    %1032 = vrot.lane.b32.xlu0 %v283, 122
    %v1033 = vpop.permute.xlu0 %1032
    %1034 = vrot.lane.b32.xlu0 %v284, 122
    %v1035 = vpop.permute.xlu0 %1034
    %1036 = vrot.lane.b32.xlu0 %v285, 122
    %v1037 = vpop.permute.xlu0 %1036
    %v1046 = vadd.f32 %v278, %v1023
    %v1047 = vadd.f32 %v279, %v1025
    %v1048 = vadd.f32 %v280, %v1027
    %v1049 = vadd.f32 %v281, %v1029
    %v1050 = vadd.f32 %v282, %v1031
    %v1051 = vadd.f32 %v283, %v1033
    %v1052 = vadd.f32 %v284, %v1035
    %v1053 = vadd.f32 %v285, %v1037
    %v1054 = vmul.f32 %v1046, 0.036000773
    %v1055 = vmul.f32 %v1047, 0.036000773
    %v1056 = vmul.f32 %v1048, 0.036000773
    %v1057 = vmul.f32 %v1049, 0.036000773
    %v1058 = vmul.f32 %v1050, 0.036000773
    %v1059 = vmul.f32 %v1051, 0.036000773
    %v1060 = vmul.f32 %v1052, 0.036000773
    %v1061 = vmul.f32 %v1053, 0.036000773
    %1070 = vrot.lane.b32.xlu0 %v1054, 3
    %v1071 = vpop.permute.xlu0 %1070
    %1072 = vrot.lane.b32.xlu0 %v1055, 3
    %v1073 = vpop.permute.xlu0 %1072
    %1074 = vrot.lane.b32.xlu0 %v1056, 3
    %v1075 = vpop.permute.xlu0 %1074
    %1076 = vrot.lane.b32.xlu0 %v1057, 3
    %v1077 = vpop.permute.xlu0 %1076
    %1078 = vrot.lane.b32.xlu0 %v1058, 3
    %v1079 = vpop.permute.xlu0 %1078
    %1080 = vrot.lane.b32.xlu0 %v1059, 3
    %v1081 = vpop.permute.xlu0 %1080
    %1082 = vrot.lane.b32.xlu0 %v1060, 3
    %v1083 = vpop.permute.xlu0 %1082
    %1084 = vrot.lane.b32.xlu0 %v1061, 3
    %v1085 = vpop.permute.xlu0 %1084
    %v1094 = vadd.f32 %v1014, %v1071
    %v1095 = vadd.f32 %v1015, %v1073
    %v1096 = vadd.f32 %v1016, %v1075
    %v1097 = vadd.f32 %v1017, %v1077
    %v1098 = vadd.f32 %v1018, %v1079
    %v1099 = vadd.f32 %v1019, %v1081
    %v1100 = vadd.f32 %v1020, %v1083
    %v1101 = vadd.f32 %v1021, %v1085
    %1102 = vrot.lane.b32.xlu0 %v278, 124
    %v1103 = vpop.permute.xlu0 %1102
    %1104 = vrot.lane.b32.xlu0 %v279, 124
    %v1105 = vpop.permute.xlu0 %1104
    %1106 = vrot.lane.b32.xlu0 %v280, 124
    %v1107 = vpop.permute.xlu0 %1106
    %1108 = vrot.lane.b32.xlu0 %v281, 124
    %v1109 = vpop.permute.xlu0 %1108
    %1110 = vrot.lane.b32.xlu0 %v282, 124
    %v1111 = vpop.permute.xlu0 %1110
    %1112 = vrot.lane.b32.xlu0 %v283, 124
    %v1113 = vpop.permute.xlu0 %1112
    %1114 = vrot.lane.b32.xlu0 %v284, 124
    %v1115 = vpop.permute.xlu0 %1114
    %1116 = vrot.lane.b32.xlu0 %v285, 124
    %v1117 = vpop.permute.xlu0 %1116
    %v1126 = vadd.f32 %v278, %v1103
    %v1127 = vadd.f32 %v279, %v1105
    %v1128 = vadd.f32 %v280, %v1107
    %v1129 = vadd.f32 %v281, %v1109
    %v1130 = vadd.f32 %v282, %v1111
    %v1131 = vadd.f32 %v283, %v1113
    %v1132 = vadd.f32 %v284, %v1115
    %v1133 = vadd.f32 %v285, %v1117
    %v1134 = vmul.f32 %v1126, 0.109360695
    %v1135 = vmul.f32 %v1127, 0.109360695
    %v1136 = vmul.f32 %v1128, 0.109360695
    %v1137 = vmul.f32 %v1129, 0.109360695
    %v1138 = vmul.f32 %v1130, 0.109360695
    %v1139 = vmul.f32 %v1131, 0.109360695
    %v1140 = vmul.f32 %v1132, 0.109360695
    %v1141 = vmul.f32 %v1133, 0.109360695
    %1150 = vrot.lane.b32.xlu0 %v1134, 2
    %v1151 = vpop.permute.xlu0 %1150
    %1152 = vrot.lane.b32.xlu0 %v1135, 2
    %v1153 = vpop.permute.xlu0 %1152
    %1154 = vrot.lane.b32.xlu0 %v1136, 2
    %v1155 = vpop.permute.xlu0 %1154
    %1156 = vrot.lane.b32.xlu0 %v1137, 2
    %v1157 = vpop.permute.xlu0 %1156
    %1158 = vrot.lane.b32.xlu0 %v1138, 2
    %v1159 = vpop.permute.xlu0 %1158
    %1160 = vrot.lane.b32.xlu0 %v1139, 2
    %v1161 = vpop.permute.xlu0 %1160
    %1162 = vrot.lane.b32.xlu0 %v1140, 2
    %v1163 = vpop.permute.xlu0 %1162
    %1164 = vrot.lane.b32.xlu0 %v1141, 2
    %v1165 = vpop.permute.xlu0 %1164
    %v1174 = vadd.f32 %v1094, %v1151
    %v1175 = vadd.f32 %v1095, %v1153
    %v1176 = vadd.f32 %v1096, %v1155
    %v1177 = vadd.f32 %v1097, %v1157
    %v1178 = vadd.f32 %v1098, %v1159
    %v1179 = vadd.f32 %v1099, %v1161
    %v1180 = vadd.f32 %v1100, %v1163
    %v1181 = vadd.f32 %v1101, %v1165
    %1182 = vrot.lane.b32.xlu0 %v278, 126
    %v1183 = vpop.permute.xlu0 %1182
    %1184 = vrot.lane.b32.xlu0 %v279, 126
    %v1185 = vpop.permute.xlu0 %1184
    %1186 = vrot.lane.b32.xlu0 %v280, 126
    %v1187 = vpop.permute.xlu0 %1186
    %1188 = vrot.lane.b32.xlu0 %v281, 126
    %v1189 = vpop.permute.xlu0 %1188
    %1190 = vrot.lane.b32.xlu0 %v282, 126
    %v1191 = vpop.permute.xlu0 %1190
    %1192 = vrot.lane.b32.xlu0 %v283, 126
    %v1193 = vpop.permute.xlu0 %1192
    %1194 = vrot.lane.b32.xlu0 %v284, 126
    %v1195 = vpop.permute.xlu0 %1194
    %1196 = vrot.lane.b32.xlu0 %v285, 126
    %v1197 = vpop.permute.xlu0 %1196
    %v1206 = vadd.f32 %v278, %v1183
    %v1207 = vadd.f32 %v279, %v1185
    %v1208 = vadd.f32 %v280, %v1187
    %v1209 = vadd.f32 %v281, %v1189
    %v1210 = vadd.f32 %v282, %v1191
    %v1211 = vadd.f32 %v283, %v1193
    %v1212 = vadd.f32 %v284, %v1195
    %v1213 = vadd.f32 %v285, %v1197
    %v1214 = vmul.f32 %v1206, 0.21300554
    %v1215 = vmul.f32 %v1207, 0.21300554
    %v1216 = vmul.f32 %v1208, 0.21300554
    %v1217 = vmul.f32 %v1209, 0.21300554
    %v1218 = vmul.f32 %v1210, 0.21300554
    %v1219 = vmul.f32 %v1211, 0.21300554
    %v1220 = vmul.f32 %v1212, 0.21300554
    %v1221 = vmul.f32 %v1213, 0.21300554
    %1230 = vrot.lane.b32.xlu0 %v1214, 1
    %v1231 = vpop.permute.xlu0 %1230
    %1232 = vrot.lane.b32.xlu0 %v1215, 1
    %v1233 = vpop.permute.xlu0 %1232
    %1234 = vrot.lane.b32.xlu0 %v1216, 1
    %v1235 = vpop.permute.xlu0 %1234
    %1236 = vrot.lane.b32.xlu0 %v1217, 1
    %v1237 = vpop.permute.xlu0 %1236
    %1238 = vrot.lane.b32.xlu0 %v1218, 1
    %v1239 = vpop.permute.xlu0 %1238
    %1240 = vrot.lane.b32.xlu0 %v1219, 1
    %v1241 = vpop.permute.xlu0 %1240
    %1242 = vrot.lane.b32.xlu0 %v1220, 1
    %v1243 = vpop.permute.xlu0 %1242
    %1244 = vrot.lane.b32.xlu0 %v1221, 1
    %v1245 = vpop.permute.xlu0 %1244
    %v1254 = vadd.f32 %v1174, %v1231
    %v1255 = vadd.f32 %v1175, %v1233
    %v1256 = vadd.f32 %v1176, %v1235
    %v1257 = vadd.f32 %v1177, %v1237
    %v1258 = vadd.f32 %v1178, %v1239
    %v1259 = vadd.f32 %v1179, %v1241
    %v1260 = vadd.f32 %v1180, %v1243
    %v1261 = vadd.f32 %v1181, %v1245
    %1270 = vrot.lane.b32.xlu0 %v1254, 123
    %v1271 = vpop.permute.xlu0 %1270
    %1272 = vrot.lane.b32.xlu0 %v1255, 123
    %v1273 = vpop.permute.xlu0 %1272
    %1274 = vrot.lane.b32.xlu0 %v1256, 123
    %v1275 = vpop.permute.xlu0 %1274
    %1276 = vrot.lane.b32.xlu0 %v1257, 123
    %v1277 = vpop.permute.xlu0 %1276
    %1278 = vrot.lane.b32.xlu0 %v1258, 123
    %v1279 = vpop.permute.xlu0 %1278
    %1280 = vrot.lane.b32.xlu0 %v1259, 123
    %v1281 = vpop.permute.xlu0 %1280
    %1282 = vrot.lane.b32.xlu0 %v1260, 123
    %v1283 = vpop.permute.xlu0 %1282
    %1284 = vrot.lane.b32.xlu0 %v1261, 123
    %v1285 = vpop.permute.xlu0 %1284
    %1294 = vst.msk [vmem:[#allocation4] sm:$0xff] %vm734, %v1271
    %1295 = vst.msk [vmem:[#allocation4 + $0x8] sm:$0xff] %vm734, %v1273
    %1296 = vst.msk [vmem:[#allocation4 + $0x10] sm:$0xff] %vm734, %v1275
    %1297 = vst.msk [vmem:[#allocation4 + $0x18] sm:$0x3] %vm738, %v1277
    %1298 = vst.msk [vmem:[#allocation4 + $0x20] sm:$0xff] %vm734, %v1279
    %1299 = vst.msk [vmem:[#allocation4 + $0x28] sm:$0xff] %vm734, %v1281
    %1300 = vst.msk [vmem:[#allocation4 + $0x30] sm:$0xff] %vm734, %v1283
    %1301 = vst.msk [vmem:[#allocation4 + $0x38] sm:$0x3] %vm738, %v1285
    %v1302 = vld [vmem:[#allocation4 + $0x5] sm:$0xff]
    %v1303 = vld [vmem:[#allocation4 + $0xd] sm:$0xff]
    %v1304 = vld [vmem:[#allocation4 + $0x25] sm:$0xff]
    %v1305 = vld [vmem:[#allocation4 + $0x2d] sm:$0xff]
    %v1306 = vmul.f32 %v1302, 0.26601174
    %v1307 = vmul.f32 %v1303, 0.26601174
    %v1308 = vmul.f32 %v1304, 0.26601174
    %v1309 = vmul.f32 %v1305, 0.26601174
    %v1310 = vld [vmem:[#allocation4] sm:$0xff]
    %v1311 = vld [vmem:[#allocation4 + $0x8] sm:$0xff]
    %v1312 = vld [vmem:[#allocation4 + $0x20] sm:$0xff]
    %v1313 = vld [vmem:[#allocation4 + $0x28] sm:$0xff]
    %v1314 = vld [vmem:[#allocation4 + $0xa] sm:$0xff]
    %v1315 = vld [vmem:[#allocation4 + $0x12] sm:$0xff]
    %v1316 = vld [vmem:[#allocation4 + $0x2a] sm:$0xff]
    %v1317 = vld [vmem:[#allocation4 + $0x32] sm:$0xff]
    %v1318 = vadd.f32 %v1310, %v1314
    %v1319 = vadd.f32 %v1311, %v1315
    %v1320 = vadd.f32 %v1312, %v1316
    %v1321 = vadd.f32 %v1313, %v1317
    %v1322 = vmul.f32 %v1318, 0.0010283802
    %v1323 = vmul.f32 %v1319, 0.0010283802
    %v1324 = vmul.f32 %v1320, 0.0010283802
    %v1325 = vmul.f32 %v1321, 0.0010283802
    %v1326 = vadd.f32 %v1306, %v1322
    %v1327 = vadd.f32 %v1307, %v1323
    %v1328 = vadd.f32 %v1308, %v1324
    %v1329 = vadd.f32 %v1309, %v1325
    %v1330 = vld [vmem:[#allocation4 + $0x1] sm:$0xff]
    %v1331 = vld [vmem:[#allocation4 + $0x9] sm:$0xff]
    %v1332 = vld [vmem:[#allocation4 + $0x21] sm:$0xff]
    %v1333 = vld [vmem:[#allocation4 + $0x29] sm:$0xff]
    %v1334 = vld [vmem:[#allocation4 + $0x11] sm:$0xff]
    %v1335 = vld [vmem:[#allocation4 + $0x31] sm:$0xff]
    %v1336 = vadd.f32 %v1330, %v1331
    %v1337 = vadd.f32 %v1331, %v1334
    %v1338 = vadd.f32 %v1332, %v1333
    %v1339 = vadd.f32 %v1333, %v1335
    %v1340 = vmul.f32 %v1336, 0.0075987587
    %v1341 = vmul.f32 %v1337, 0.0075987587
    %v1342 = vmul.f32 %v1338, 0.0075987587
    %v1343 = vmul.f32 %v1339, 0.0075987587
    %v1344 = vadd.f32 %v1326, %v1340
    %v1345 = vadd.f32 %v1327, %v1341
    %v1346 = vadd.f32 %v1328, %v1342
    %v1347 = vadd.f32 %v1329, %v1343
    %v1348 = vld [vmem:[#allocation4 + $0x2] sm:$0xff]
    %v1349 = vld [vmem:[#allocation4 + $0x22] sm:$0xff]
    %v1350 = vld [vmem:[#allocation4 + $0x10] sm:$0xff]
    %v1351 = vld [vmem:[#allocation4 + $0x30] sm:$0xff]
    %v1352 = vadd.f32 %v1348, %v1311
    %v1353 = vadd.f32 %v1314, %v1350
    %v1354 = vadd.f32 %v1349, %v1313
    %v1355 = vadd.f32 %v1316, %v1351
    %v1356 = vmul.f32 %v1352, 0.036000773
    %v1357 = vmul.f32 %v1353, 0.036000773
    %v1358 = vmul.f32 %v1354, 0.036000773
    %v1359 = vmul.f32 %v1355, 0.036000773
    %v1360 = vadd.f32 %v1344, %v1356
    %v1361 = vadd.f32 %v1345, %v1357
    %v1362 = vadd.f32 %v1346, %v1358
    %v1363 = vadd.f32 %v1347, %v1359
    %v1364 = vld [vmem:[#allocation4 + $0x3] sm:$0xff]
    %v1365 = vld [vmem:[#allocation4 + $0xb] sm:$0xff]
    %v1366 = vld [vmem:[#allocation4 + $0x23] sm:$0xff]
    %v1367 = vld [vmem:[#allocation4 + $0x2b] sm:$0xff]
    %v1368 = vld [vmem:[#allocation4 + $0x7] sm:$0xff]
    %v1369 = vld [vmem:[#allocation4 + $0xf] sm:$0xff]
    %v1370 = vld [vmem:[#allocation4 + $0x27] sm:$0xff]
    %v1371 = vld [vmem:[#allocation4 + $0x2f] sm:$0xff]
    %v1372 = vadd.f32 %v1364, %v1368
    %v1373 = vadd.f32 %v1365, %v1369
    %v1374 = vadd.f32 %v1366, %v1370
    %v1375 = vadd.f32 %v1367, %v1371
    %v1376 = vmul.f32 %v1372, 0.109360695
    %v1377 = vmul.f32 %v1373, 0.109360695
    %v1378 = vmul.f32 %v1374, 0.109360695
    %v1379 = vmul.f32 %v1375, 0.109360695
    %v1380 = vadd.f32 %v1360, %v1376
    %v1381 = vadd.f32 %v1361, %v1377
    %v1382 = vadd.f32 %v1362, %v1378
    %v1383 = vadd.f32 %v1363, %v1379
    %v1384 = vld [vmem:[#allocation4 + $0x4] sm:$0xff]
    %v1385 = vld [vmem:[#allocation4 + $0xc] sm:$0xff]
    %v1386 = vld [vmem:[#allocation4 + $0x24] sm:$0xff]
    %v1387 = vld [vmem:[#allocation4 + $0x2c] sm:$0xff]
    %v1388 = vld [vmem:[#allocation4 + $0x6] sm:$0xff]
    %v1389 = vld [vmem:[#allocation4 + $0xe] sm:$0xff]
    %v1390 = vld [vmem:[#allocation4 + $0x26] sm:$0xff]
    %v1391 = vld [vmem:[#allocation4 + $0x2e] sm:$0xff]
    %v1392 = vadd.f32 %v1384, %v1388
    %v1393 = vadd.f32 %v1385, %v1389
    %v1394 = vadd.f32 %v1386, %v1390
    %v1395 = vadd.f32 %v1387, %v1391
    %v1396 = vmul.f32 %v1392, 0.21300554
    %v1397 = vmul.f32 %v1393, 0.21300554
    %v1398 = vmul.f32 %v1394, 0.21300554
    %v1399 = vmul.f32 %v1395, 0.21300554
    %v1400 = vadd.f32 %v1380, %v1396
    %v1401 = vadd.f32 %v1381, %v1397
    %v1402 = vadd.f32 %v1382, %v1398
    %v1403 = vadd.f32 %v1383, %v1399
    %v1404 = vmul.f32 %v270, %v270
    %v1405 = vmul.f32 %v271, %v271
    %v1406 = vmul.f32 %v272, %v272
    %v1407 = vmul.f32 %v273, %v273
    %v1408 = vmul.f32 %v274, %v274
    %v1409 = vmul.f32 %v275, %v275
    %v1410 = vmul.f32 %v276, %v276
    %v1411 = vmul.f32 %v277, %v277
    %v1412 = vmul.f32 %v1404, 0.26601174
    %v1413 = vmul.f32 %v1405, 0.26601174
    %v1414 = vmul.f32 %v1406, 0.26601174
    %v1415 = vmul.f32 %v1407, 0.26601174
    %v1416 = vmul.f32 %v1408, 0.26601174
    %v1417 = vmul.f32 %v1409, 0.26601174
    %v1418 = vmul.f32 %v1410, 0.26601174
    %v1419 = vmul.f32 %v1411, 0.26601174
    %1428 = vrot.lane.b32.xlu0 %v1404, 118
    %v1429 = vpop.permute.xlu0 %1428
    %1430 = vrot.lane.b32.xlu0 %v1405, 118
    %v1431 = vpop.permute.xlu0 %1430
    %1432 = vrot.lane.b32.xlu0 %v1406, 118
    %v1433 = vpop.permute.xlu0 %1432
    %1434 = vrot.lane.b32.xlu0 %v1407, 118
    %v1435 = vpop.permute.xlu0 %1434
    %1436 = vrot.lane.b32.xlu0 %v1408, 118
    %v1437 = vpop.permute.xlu0 %1436
    %1438 = vrot.lane.b32.xlu0 %v1409, 118
    %v1439 = vpop.permute.xlu0 %1438
    %1440 = vrot.lane.b32.xlu0 %v1410, 118
    %v1441 = vpop.permute.xlu0 %1440
    %1442 = vrot.lane.b32.xlu0 %v1411, 118
    %v1443 = vpop.permute.xlu0 %1442
    %v1452 = vadd.f32 %v1404, %v1429
    %v1453 = vadd.f32 %v1405, %v1431
    %v1454 = vadd.f32 %v1406, %v1433
    %v1455 = vadd.f32 %v1407, %v1435
    %v1456 = vadd.f32 %v1408, %v1437
    %v1457 = vadd.f32 %v1409, %v1439
    %v1458 = vadd.f32 %v1410, %v1441
    %v1459 = vadd.f32 %v1411, %v1443
    %v1460 = vmul.f32 %v1452, 0.0010283802
    %v1461 = vmul.f32 %v1453, 0.0010283802
    %v1462 = vmul.f32 %v1454, 0.0010283802
    %v1463 = vmul.f32 %v1455, 0.0010283802
    %v1464 = vmul.f32 %v1456, 0.0010283802
    %v1465 = vmul.f32 %v1457, 0.0010283802
    %v1466 = vmul.f32 %v1458, 0.0010283802
    %v1467 = vmul.f32 %v1459, 0.0010283802
    %1476 = vrot.lane.b32.xlu0 %v1460, 5
    %v1477 = vpop.permute.xlu0 %1476
    %1478 = vrot.lane.b32.xlu0 %v1461, 5
    %v1479 = vpop.permute.xlu0 %1478
    %1480 = vrot.lane.b32.xlu0 %v1462, 5
    %v1481 = vpop.permute.xlu0 %1480
    %1482 = vrot.lane.b32.xlu0 %v1463, 5
    %v1483 = vpop.permute.xlu0 %1482
    %1484 = vrot.lane.b32.xlu0 %v1464, 5
    %v1485 = vpop.permute.xlu0 %1484
    %1486 = vrot.lane.b32.xlu0 %v1465, 5
    %v1487 = vpop.permute.xlu0 %1486
    %1488 = vrot.lane.b32.xlu0 %v1466, 5
    %v1489 = vpop.permute.xlu0 %1488
    %1490 = vrot.lane.b32.xlu0 %v1467, 5
    %v1491 = vpop.permute.xlu0 %1490
    %v1500 = vadd.f32 %v1412, %v1477
    %v1501 = vadd.f32 %v1413, %v1479
    %v1502 = vadd.f32 %v1414, %v1481
    %v1503 = vadd.f32 %v1415, %v1483
    %v1504 = vadd.f32 %v1416, %v1485
    %v1505 = vadd.f32 %v1417, %v1487
    %v1506 = vadd.f32 %v1418, %v1489
    %v1507 = vadd.f32 %v1419, %v1491
    %1508 = vrot.lane.b32.xlu0 %v1404, 120
    %v1509 = vpop.permute.xlu0 %1508
    %1510 = vrot.lane.b32.xlu0 %v1405, 120
    %v1511 = vpop.permute.xlu0 %1510
    %1512 = vrot.lane.b32.xlu0 %v1406, 120
    %v1513 = vpop.permute.xlu0 %1512
    %1514 = vrot.lane.b32.xlu0 %v1407, 120
    %v1515 = vpop.permute.xlu0 %1514
    %1516 = vrot.lane.b32.xlu0 %v1408, 120
    %v1517 = vpop.permute.xlu0 %1516
    %1518 = vrot.lane.b32.xlu0 %v1409, 120
    %v1519 = vpop.permute.xlu0 %1518
    %1520 = vrot.lane.b32.xlu0 %v1410, 120
    %v1521 = vpop.permute.xlu0 %1520
    %1522 = vrot.lane.b32.xlu0 %v1411, 120
    %v1523 = vpop.permute.xlu0 %1522
    %v1532 = vadd.f32 %v1404, %v1509
    %v1533 = vadd.f32 %v1405, %v1511
    %v1534 = vadd.f32 %v1406, %v1513
    %v1535 = vadd.f32 %v1407, %v1515
    %v1536 = vadd.f32 %v1408, %v1517
    %v1537 = vadd.f32 %v1409, %v1519
    %v1538 = vadd.f32 %v1410, %v1521
    %v1539 = vadd.f32 %v1411, %v1523
    %v1540 = vmul.f32 %v1532, 0.0075987587
    %v1541 = vmul.f32 %v1533, 0.0075987587
    %v1542 = vmul.f32 %v1534, 0.0075987587
    %v1543 = vmul.f32 %v1535, 0.0075987587
    %v1544 = vmul.f32 %v1536, 0.0075987587
    %v1545 = vmul.f32 %v1537, 0.0075987587
    %v1546 = vmul.f32 %v1538, 0.0075987587
    %v1547 = vmul.f32 %v1539, 0.0075987587
    %1556 = vrot.lane.b32.xlu0 %v1540, 4
    %v1557 = vpop.permute.xlu0 %1556
    %1558 = vrot.lane.b32.xlu0 %v1541, 4
    %v1559 = vpop.permute.xlu0 %1558
    %1560 = vrot.lane.b32.xlu0 %v1542, 4
    %v1561 = vpop.permute.xlu0 %1560
    %1562 = vrot.lane.b32.xlu0 %v1543, 4
    %v1563 = vpop.permute.xlu0 %1562
    %1564 = vrot.lane.b32.xlu0 %v1544, 4
    %v1565 = vpop.permute.xlu0 %1564
    %1566 = vrot.lane.b32.xlu0 %v1545, 4
    %v1567 = vpop.permute.xlu0 %1566
    %1568 = vrot.lane.b32.xlu0 %v1546, 4
    %v1569 = vpop.permute.xlu0 %1568
    %1570 = vrot.lane.b32.xlu0 %v1547, 4
    %v1571 = vpop.permute.xlu0 %1570
    %v1580 = vadd.f32 %v1500, %v1557
    %v1581 = vadd.f32 %v1501, %v1559
    %v1582 = vadd.f32 %v1502, %v1561
    %v1583 = vadd.f32 %v1503, %v1563
    %v1584 = vadd.f32 %v1504, %v1565
    %v1585 = vadd.f32 %v1505, %v1567
    %v1586 = vadd.f32 %v1506, %v1569
    %v1587 = vadd.f32 %v1507, %v1571
    %1588 = vrot.lane.b32.xlu0 %v1404, 122
    %v1589 = vpop.permute.xlu0 %1588
    %1590 = vrot.lane.b32.xlu0 %v1405, 122
    %v1591 = vpop.permute.xlu0 %1590
    %1592 = vrot.lane.b32.xlu0 %v1406, 122
    %v1593 = vpop.permute.xlu0 %1592
    %1594 = vrot.lane.b32.xlu0 %v1407, 122
    %v1595 = vpop.permute.xlu0 %1594
    %1596 = vrot.lane.b32.xlu0 %v1408, 122
    %v1597 = vpop.permute.xlu0 %1596
    %1598 = vrot.lane.b32.xlu0 %v1409, 122
    %v1599 = vpop.permute.xlu0 %1598
    %1600 = vrot.lane.b32.xlu0 %v1410, 122
    %v1601 = vpop.permute.xlu0 %1600
    %1602 = vrot.lane.b32.xlu0 %v1411, 122
    %v1603 = vpop.permute.xlu0 %1602
    %v1612 = vadd.f32 %v1404, %v1589
    %v1613 = vadd.f32 %v1405, %v1591
    %v1614 = vadd.f32 %v1406, %v1593
    %v1615 = vadd.f32 %v1407, %v1595
    %v1616 = vadd.f32 %v1408, %v1597
    %v1617 = vadd.f32 %v1409, %v1599
    %v1618 = vadd.f32 %v1410, %v1601
    %v1619 = vadd.f32 %v1411, %v1603
    %v1620 = vmul.f32 %v1612, 0.036000773
    %v1621 = vmul.f32 %v1613, 0.036000773
    %v1622 = vmul.f32 %v1614, 0.036000773
    %v1623 = vmul.f32 %v1615, 0.036000773
    %v1624 = vmul.f32 %v1616, 0.036000773
    %v1625 = vmul.f32 %v1617, 0.036000773
    %v1626 = vmul.f32 %v1618, 0.036000773
    %v1627 = vmul.f32 %v1619, 0.036000773
    %1636 = vrot.lane.b32.xlu0 %v1620, 3
    %v1637 = vpop.permute.xlu0 %1636
    %1638 = vrot.lane.b32.xlu0 %v1621, 3
    %v1639 = vpop.permute.xlu0 %1638
    %1640 = vrot.lane.b32.xlu0 %v1622, 3
    %v1641 = vpop.permute.xlu0 %1640
    %1642 = vrot.lane.b32.xlu0 %v1623, 3
    %v1643 = vpop.permute.xlu0 %1642
    %1644 = vrot.lane.b32.xlu0 %v1624, 3
    %v1645 = vpop.permute.xlu0 %1644
    %1646 = vrot.lane.b32.xlu0 %v1625, 3
    %v1647 = vpop.permute.xlu0 %1646
    %1648 = vrot.lane.b32.xlu0 %v1626, 3
    %v1649 = vpop.permute.xlu0 %1648
    %1650 = vrot.lane.b32.xlu0 %v1627, 3
    %v1651 = vpop.permute.xlu0 %1650
    %v1660 = vadd.f32 %v1580, %v1637
    %v1661 = vadd.f32 %v1581, %v1639
    %v1662 = vadd.f32 %v1582, %v1641
    %v1663 = vadd.f32 %v1583, %v1643
    %v1664 = vadd.f32 %v1584, %v1645
    %v1665 = vadd.f32 %v1585, %v1647
    %v1666 = vadd.f32 %v1586, %v1649
    %v1667 = vadd.f32 %v1587, %v1651
    %1668 = vrot.lane.b32.xlu0 %v1404, 124
    %v1669 = vpop.permute.xlu0 %1668
    %1670 = vrot.lane.b32.xlu0 %v1405, 124
    %v1671 = vpop.permute.xlu0 %1670
    %1672 = vrot.lane.b32.xlu0 %v1406, 124
    %v1673 = vpop.permute.xlu0 %1672
    %1674 = vrot.lane.b32.xlu0 %v1407, 124
    %v1675 = vpop.permute.xlu0 %1674
    %1676 = vrot.lane.b32.xlu0 %v1408, 124
    %v1677 = vpop.permute.xlu0 %1676
    %1678 = vrot.lane.b32.xlu0 %v1409, 124
    %v1679 = vpop.permute.xlu0 %1678
    %1680 = vrot.lane.b32.xlu0 %v1410, 124
    %v1681 = vpop.permute.xlu0 %1680
    %1682 = vrot.lane.b32.xlu0 %v1411, 124
    %v1683 = vpop.permute.xlu0 %1682
    %v1692 = vadd.f32 %v1404, %v1669
    %v1693 = vadd.f32 %v1405, %v1671
    %v1694 = vadd.f32 %v1406, %v1673
    %v1695 = vadd.f32 %v1407, %v1675
    %v1696 = vadd.f32 %v1408, %v1677
    %v1697 = vadd.f32 %v1409, %v1679
    %v1698 = vadd.f32 %v1410, %v1681
    %v1699 = vadd.f32 %v1411, %v1683
    %v1700 = vmul.f32 %v1692, 0.109360695
    %v1701 = vmul.f32 %v1693, 0.109360695
    %v1702 = vmul.f32 %v1694, 0.109360695
    %v1703 = vmul.f32 %v1695, 0.109360695
    %v1704 = vmul.f32 %v1696, 0.109360695
    %v1705 = vmul.f32 %v1697, 0.109360695
    %v1706 = vmul.f32 %v1698, 0.109360695
    %v1707 = vmul.f32 %v1699, 0.109360695
    %1716 = vrot.lane.b32.xlu0 %v1700, 2
    %v1717 = vpop.permute.xlu0 %1716
    %1718 = vrot.lane.b32.xlu0 %v1701, 2
    %v1719 = vpop.permute.xlu0 %1718
    %1720 = vrot.lane.b32.xlu0 %v1702, 2
    %v1721 = vpop.permute.xlu0 %1720
    %1722 = vrot.lane.b32.xlu0 %v1703, 2
    %v1723 = vpop.permute.xlu0 %1722
    %1724 = vrot.lane.b32.xlu0 %v1704, 2
    %v1725 = vpop.permute.xlu0 %1724
    %1726 = vrot.lane.b32.xlu0 %v1705, 2
    %v1727 = vpop.permute.xlu0 %1726
    %1728 = vrot.lane.b32.xlu0 %v1706, 2
    %v1729 = vpop.permute.xlu0 %1728
    %1730 = vrot.lane.b32.xlu0 %v1707, 2
    %v1731 = vpop.permute.xlu0 %1730
    %v1740 = vadd.f32 %v1660, %v1717
    %v1741 = vadd.f32 %v1661, %v1719
    %v1742 = vadd.f32 %v1662, %v1721
    %v1743 = vadd.f32 %v1663, %v1723
    %v1744 = vadd.f32 %v1664, %v1725
    %v1745 = vadd.f32 %v1665, %v1727
    %v1746 = vadd.f32 %v1666, %v1729
    %v1747 = vadd.f32 %v1667, %v1731
    %1748 = vrot.lane.b32.xlu0 %v1404, 126
    %v1749 = vpop.permute.xlu0 %1748
    %1750 = vrot.lane.b32.xlu0 %v1405, 126
    %v1751 = vpop.permute.xlu0 %1750
    %1752 = vrot.lane.b32.xlu0 %v1406, 126
    %v1753 = vpop.permute.xlu0 %1752
    %1754 = vrot.lane.b32.xlu0 %v1407, 126
    %v1755 = vpop.permute.xlu0 %1754
    %1756 = vrot.lane.b32.xlu0 %v1408, 126
    %v1757 = vpop.permute.xlu0 %1756
    %1758 = vrot.lane.b32.xlu0 %v1409, 126
    %v1759 = vpop.permute.xlu0 %1758
    %1760 = vrot.lane.b32.xlu0 %v1410, 126
    %v1761 = vpop.permute.xlu0 %1760
    %1762 = vrot.lane.b32.xlu0 %v1411, 126
    %v1763 = vpop.permute.xlu0 %1762
    %v1772 = vadd.f32 %v1404, %v1749
    %v1773 = vadd.f32 %v1405, %v1751
    %v1774 = vadd.f32 %v1406, %v1753
    %v1775 = vadd.f32 %v1407, %v1755
    %v1776 = vadd.f32 %v1408, %v1757
    %v1777 = vadd.f32 %v1409, %v1759
    %v1778 = vadd.f32 %v1410, %v1761
    %v1779 = vadd.f32 %v1411, %v1763
    %v1780 = vmul.f32 %v1772, 0.21300554
    %v1781 = vmul.f32 %v1773, 0.21300554
    %v1782 = vmul.f32 %v1774, 0.21300554
    %v1783 = vmul.f32 %v1775, 0.21300554
    %v1784 = vmul.f32 %v1776, 0.21300554
    %v1785 = vmul.f32 %v1777, 0.21300554
    %v1786 = vmul.f32 %v1778, 0.21300554
    %v1787 = vmul.f32 %v1779, 0.21300554
    %1796 = vrot.lane.b32.xlu0 %v1780, 1
    %v1797 = vpop.permute.xlu0 %1796
    %1798 = vrot.lane.b32.xlu0 %v1781, 1
    %v1799 = vpop.permute.xlu0 %1798
    %1800 = vrot.lane.b32.xlu0 %v1782, 1
    %v1801 = vpop.permute.xlu0 %1800
    %1802 = vrot.lane.b32.xlu0 %v1783, 1
    %v1803 = vpop.permute.xlu0 %1802
    %1804 = vrot.lane.b32.xlu0 %v1784, 1
    %v1805 = vpop.permute.xlu0 %1804
    %1806 = vrot.lane.b32.xlu0 %v1785, 1
    %v1807 = vpop.permute.xlu0 %1806
    %1808 = vrot.lane.b32.xlu0 %v1786, 1
    %v1809 = vpop.permute.xlu0 %1808
    %1810 = vrot.lane.b32.xlu0 %v1787, 1
    %v1811 = vpop.permute.xlu0 %1810
    %v1820 = vadd.f32 %v1740, %v1797
    %v1821 = vadd.f32 %v1741, %v1799
    %v1822 = vadd.f32 %v1742, %v1801
    %v1823 = vadd.f32 %v1743, %v1803
    %v1824 = vadd.f32 %v1744, %v1805
    %v1825 = vadd.f32 %v1745, %v1807
    %v1826 = vadd.f32 %v1746, %v1809
    %v1827 = vadd.f32 %v1747, %v1811
    %1836 = vrot.lane.b32.xlu0 %v1820, 123
    %v1837 = vpop.permute.xlu0 %1836
    %1838 = vrot.lane.b32.xlu0 %v1821, 123
    %v1839 = vpop.permute.xlu0 %1838
    %1840 = vrot.lane.b32.xlu0 %v1822, 123
    %v1841 = vpop.permute.xlu0 %1840
    %1842 = vrot.lane.b32.xlu0 %v1823, 123
    %v1843 = vpop.permute.xlu0 %1842
    %1844 = vrot.lane.b32.xlu0 %v1824, 123
    %v1845 = vpop.permute.xlu0 %1844
    %1846 = vrot.lane.b32.xlu0 %v1825, 123
    %v1847 = vpop.permute.xlu0 %1846
    %1848 = vrot.lane.b32.xlu0 %v1826, 123
    %v1849 = vpop.permute.xlu0 %1848
    %1850 = vrot.lane.b32.xlu0 %v1827, 123
    %v1851 = vpop.permute.xlu0 %1850
    %1860 = vst.msk [vmem:[#allocation4] sm:$0xff] %vm734, %v1837
    %1861 = vst.msk [vmem:[#allocation4 + $0x8] sm:$0xff] %vm734, %v1839
    %1862 = vst.msk [vmem:[#allocation4 + $0x10] sm:$0xff] %vm734, %v1841
    %1863 = vst.msk [vmem:[#allocation4 + $0x18] sm:$0x3] %vm738, %v1843
    %1864 = vst.msk [vmem:[#allocation4 + $0x20] sm:$0xff] %vm734, %v1845
    %1865 = vst.msk [vmem:[#allocation4 + $0x28] sm:$0xff] %vm734, %v1847
    %1866 = vst.msk [vmem:[#allocation4 + $0x30] sm:$0xff] %vm734, %v1849
    %1867 = vst.msk [vmem:[#allocation4 + $0x38] sm:$0x3] %vm738, %v1851
    %v1868 = vld [vmem:[#allocation4 + $0x5] sm:$0xff]
    %v1869 = vld [vmem:[#allocation4 + $0xd] sm:$0xff]
    %v1870 = vld [vmem:[#allocation4 + $0x25] sm:$0xff]
    %v1871 = vld [vmem:[#allocation4 + $0x2d] sm:$0xff]
    %v1872 = vmul.f32 %v1868, 0.26601174
    %v1873 = vmul.f32 %v1869, 0.26601174
    %v1874 = vmul.f32 %v1870, 0.26601174
    %v1875 = vmul.f32 %v1871, 0.26601174
    %v1876 = vld [vmem:[#allocation4] sm:$0xff]
    %v1877 = vld [vmem:[#allocation4 + $0x8] sm:$0xff]
    %v1878 = vld [vmem:[#allocation4 + $0x20] sm:$0xff]
    %v1879 = vld [vmem:[#allocation4 + $0x28] sm:$0xff]
    %v1880 = vld [vmem:[#allocation4 + $0xa] sm:$0xff]
    %v1881 = vld [vmem:[#allocation4 + $0x12] sm:$0xff]
    %v1882 = vld [vmem:[#allocation4 + $0x2a] sm:$0xff]
    %v1883 = vld [vmem:[#allocation4 + $0x32] sm:$0xff]
    %v1884 = vadd.f32 %v1876, %v1880
    %v1885 = vadd.f32 %v1877, %v1881
    %v1886 = vadd.f32 %v1878, %v1882
    %v1887 = vadd.f32 %v1879, %v1883
    %v1888 = vmul.f32 %v1884, 0.0010283802
    %v1889 = vmul.f32 %v1885, 0.0010283802
    %v1890 = vmul.f32 %v1886, 0.0010283802
    %v1891 = vmul.f32 %v1887, 0.0010283802
    %v1892 = vadd.f32 %v1872, %v1888
    %v1893 = vadd.f32 %v1873, %v1889
    %v1894 = vadd.f32 %v1874, %v1890
    %v1895 = vadd.f32 %v1875, %v1891
    %v1896 = vld [vmem:[#allocation4 + $0x1] sm:$0xff]
    %v1897 = vld [vmem:[#allocation4 + $0x9] sm:$0xff]
    %v1898 = vld [vmem:[#allocation4 + $0x21] sm:$0xff]
    %v1899 = vld [vmem:[#allocation4 + $0x29] sm:$0xff]
    %v1900 = vld [vmem:[#allocation4 + $0x11] sm:$0xff]
    %v1901 = vld [vmem:[#allocation4 + $0x31] sm:$0xff]
    %v1902 = vadd.f32 %v1896, %v1897
    %v1903 = vadd.f32 %v1897, %v1900
    %v1904 = vadd.f32 %v1898, %v1899
    %v1905 = vadd.f32 %v1899, %v1901
    %v1906 = vmul.f32 %v1902, 0.0075987587
    %v1907 = vmul.f32 %v1903, 0.0075987587
    %v1908 = vmul.f32 %v1904, 0.0075987587
    %v1909 = vmul.f32 %v1905, 0.0075987587
    %v1910 = vadd.f32 %v1892, %v1906
    %v1911 = vadd.f32 %v1893, %v1907
    %v1912 = vadd.f32 %v1894, %v1908
    %v1913 = vadd.f32 %v1895, %v1909
    %v1914 = vld [vmem:[#allocation4 + $0x2] sm:$0xff]
    %v1915 = vld [vmem:[#allocation4 + $0x22] sm:$0xff]
    %v1916 = vld [vmem:[#allocation4 + $0x10] sm:$0xff]
    %v1917 = vld [vmem:[#allocation4 + $0x30] sm:$0xff]
    %v1918 = vadd.f32 %v1914, %v1877
    %v1919 = vadd.f32 %v1880, %v1916
    %v1920 = vadd.f32 %v1915, %v1879
    %v1921 = vadd.f32 %v1882, %v1917
    %v1922 = vmul.f32 %v1918, 0.036000773
    %v1923 = vmul.f32 %v1919, 0.036000773
    %v1924 = vmul.f32 %v1920, 0.036000773
    %v1925 = vmul.f32 %v1921, 0.036000773
    %v1926 = vadd.f32 %v1910, %v1922
    %v1927 = vadd.f32 %v1911, %v1923
    %v1928 = vadd.f32 %v1912, %v1924
    %v1929 = vadd.f32 %v1913, %v1925
    %v1930 = vld [vmem:[#allocation4 + $0x3] sm:$0xff]
    %v1931 = vld [vmem:[#allocation4 + $0xb] sm:$0xff]
    %v1932 = vld [vmem:[#allocation4 + $0x23] sm:$0xff]
    %v1933 = vld [vmem:[#allocation4 + $0x2b] sm:$0xff]
    %v1934 = vld [vmem:[#allocation4 + $0x7] sm:$0xff]
    %v1935 = vld [vmem:[#allocation4 + $0xf] sm:$0xff]
    %v1936 = vld [vmem:[#allocation4 + $0x27] sm:$0xff]
    %v1937 = vld [vmem:[#allocation4 + $0x2f] sm:$0xff]
    %v1938 = vadd.f32 %v1930, %v1934
    %v1939 = vadd.f32 %v1931, %v1935
    %v1940 = vadd.f32 %v1932, %v1936
    %v1941 = vadd.f32 %v1933, %v1937
    %v1942 = vmul.f32 %v1938, 0.109360695
    %v1943 = vmul.f32 %v1939, 0.109360695
    %v1944 = vmul.f32 %v1940, 0.109360695
    %v1945 = vmul.f32 %v1941, 0.109360695
    %v1946 = vadd.f32 %v1926, %v1942
    %v1947 = vadd.f32 %v1927, %v1943
    %v1948 = vadd.f32 %v1928, %v1944
    %v1949 = vadd.f32 %v1929, %v1945
    %v1950 = vld [vmem:[#allocation4 + $0x4] sm:$0xff]
    %v1951 = vld [vmem:[#allocation4 + $0xc] sm:$0xff]
    %v1952 = vld [vmem:[#allocation4 + $0x24] sm:$0xff]
    %v1953 = vld [vmem:[#allocation4 + $0x2c] sm:$0xff]
    %v1954 = vld [vmem:[#allocation4 + $0x6] sm:$0xff]
    %v1955 = vld [vmem:[#allocation4 + $0xe] sm:$0xff]
    %v1956 = vld [vmem:[#allocation4 + $0x26] sm:$0xff]
    %v1957 = vld [vmem:[#allocation4 + $0x2e] sm:$0xff]
    %v1958 = vadd.f32 %v1950, %v1954
    %v1959 = vadd.f32 %v1951, %v1955
    %v1960 = vadd.f32 %v1952, %v1956
    %v1961 = vadd.f32 %v1953, %v1957
    %v1962 = vmul.f32 %v1958, 0.21300554
    %v1963 = vmul.f32 %v1959, 0.21300554
    %v1964 = vmul.f32 %v1960, 0.21300554
    %v1965 = vmul.f32 %v1961, 0.21300554
    %v1966 = vadd.f32 %v1946, %v1962
    %v1967 = vadd.f32 %v1947, %v1963
    %v1968 = vadd.f32 %v1948, %v1964
    %v1969 = vadd.f32 %v1949, %v1965
    %v1970 = vmul.f32 %v278, %v278
    %v1971 = vmul.f32 %v279, %v279
    %v1972 = vmul.f32 %v280, %v280
    %v1973 = vmul.f32 %v281, %v281
    %v1974 = vmul.f32 %v282, %v282
    %v1975 = vmul.f32 %v283, %v283
    %v1976 = vmul.f32 %v284, %v284
    %v1977 = vmul.f32 %v285, %v285
    %v1978 = vmul.f32 %v1970, 0.26601174
    %v1979 = vmul.f32 %v1971, 0.26601174
    %v1980 = vmul.f32 %v1972, 0.26601174
    %v1981 = vmul.f32 %v1973, 0.26601174
    %v1982 = vmul.f32 %v1974, 0.26601174
    %v1983 = vmul.f32 %v1975, 0.26601174
    %v1984 = vmul.f32 %v1976, 0.26601174
    %v1985 = vmul.f32 %v1977, 0.26601174
    %1994 = vrot.lane.b32.xlu0 %v1970, 118
    %v1995 = vpop.permute.xlu0 %1994
    %1996 = vrot.lane.b32.xlu0 %v1971, 118
    %v1997 = vpop.permute.xlu0 %1996
    %1998 = vrot.lane.b32.xlu0 %v1972, 118
    %v1999 = vpop.permute.xlu0 %1998
    %2000 = vrot.lane.b32.xlu0 %v1973, 118
    %v2001 = vpop.permute.xlu0 %2000
    %2002 = vrot.lane.b32.xlu0 %v1974, 118
    %v2003 = vpop.permute.xlu0 %2002
    %2004 = vrot.lane.b32.xlu0 %v1975, 118
    %v2005 = vpop.permute.xlu0 %2004
    %2006 = vrot.lane.b32.xlu0 %v1976, 118
    %v2007 = vpop.permute.xlu0 %2006
    %2008 = vrot.lane.b32.xlu0 %v1977, 118
    %v2009 = vpop.permute.xlu0 %2008
    %v2018 = vadd.f32 %v1970, %v1995
    %v2019 = vadd.f32 %v1971, %v1997
    %v2020 = vadd.f32 %v1972, %v1999
    %v2021 = vadd.f32 %v1973, %v2001
    %v2022 = vadd.f32 %v1974, %v2003
    %v2023 = vadd.f32 %v1975, %v2005
    %v2024 = vadd.f32 %v1976, %v2007
    %v2025 = vadd.f32 %v1977, %v2009
    %v2026 = vmul.f32 %v2018, 0.0010283802
    %v2027 = vmul.f32 %v2019, 0.0010283802
    %v2028 = vmul.f32 %v2020, 0.0010283802
    %v2029 = vmul.f32 %v2021, 0.0010283802
    %v2030 = vmul.f32 %v2022, 0.0010283802
    %v2031 = vmul.f32 %v2023, 0.0010283802
    %v2032 = vmul.f32 %v2024, 0.0010283802
    %v2033 = vmul.f32 %v2025, 0.0010283802
    %2042 = vrot.lane.b32.xlu0 %v2026, 5
    %v2043 = vpop.permute.xlu0 %2042
    %2044 = vrot.lane.b32.xlu0 %v2027, 5
    %v2045 = vpop.permute.xlu0 %2044
    %2046 = vrot.lane.b32.xlu0 %v2028, 5
    %v2047 = vpop.permute.xlu0 %2046
    %2048 = vrot.lane.b32.xlu0 %v2029, 5
    %v2049 = vpop.permute.xlu0 %2048
    %2050 = vrot.lane.b32.xlu0 %v2030, 5
    %v2051 = vpop.permute.xlu0 %2050
    %2052 = vrot.lane.b32.xlu0 %v2031, 5
    %v2053 = vpop.permute.xlu0 %2052
    %2054 = vrot.lane.b32.xlu0 %v2032, 5
    %v2055 = vpop.permute.xlu0 %2054
    %2056 = vrot.lane.b32.xlu0 %v2033, 5
    %v2057 = vpop.permute.xlu0 %2056
    %v2066 = vadd.f32 %v1978, %v2043
    %v2067 = vadd.f32 %v1979, %v2045
    %v2068 = vadd.f32 %v1980, %v2047
    %v2069 = vadd.f32 %v1981, %v2049
    %v2070 = vadd.f32 %v1982, %v2051
    %v2071 = vadd.f32 %v1983, %v2053
    %v2072 = vadd.f32 %v1984, %v2055
    %v2073 = vadd.f32 %v1985, %v2057
    %2074 = vrot.lane.b32.xlu0 %v1970, 120
    %v2075 = vpop.permute.xlu0 %2074
    %2076 = vrot.lane.b32.xlu0 %v1971, 120
    %v2077 = vpop.permute.xlu0 %2076
    %2078 = vrot.lane.b32.xlu0 %v1972, 120
    %v2079 = vpop.permute.xlu0 %2078
    %2080 = vrot.lane.b32.xlu0 %v1973, 120
    %v2081 = vpop.permute.xlu0 %2080
    %2082 = vrot.lane.b32.xlu0 %v1974, 120
    %v2083 = vpop.permute.xlu0 %2082
    %2084 = vrot.lane.b32.xlu0 %v1975, 120
    %v2085 = vpop.permute.xlu0 %2084
    %2086 = vrot.lane.b32.xlu0 %v1976, 120
    %v2087 = vpop.permute.xlu0 %2086
    %2088 = vrot.lane.b32.xlu0 %v1977, 120
    %v2089 = vpop.permute.xlu0 %2088
    %v2098 = vadd.f32 %v1970, %v2075
    %v2099 = vadd.f32 %v1971, %v2077
    %v2100 = vadd.f32 %v1972, %v2079
    %v2101 = vadd.f32 %v1973, %v2081
    %v2102 = vadd.f32 %v1974, %v2083
    %v2103 = vadd.f32 %v1975, %v2085
    %v2104 = vadd.f32 %v1976, %v2087
    %v2105 = vadd.f32 %v1977, %v2089
    %v2106 = vmul.f32 %v2098, 0.0075987587
    %v2107 = vmul.f32 %v2099, 0.0075987587
    %v2108 = vmul.f32 %v2100, 0.0075987587
    %v2109 = vmul.f32 %v2101, 0.0075987587
    %v2110 = vmul.f32 %v2102, 0.0075987587
    %v2111 = vmul.f32 %v2103, 0.0075987587
    %v2112 = vmul.f32 %v2104, 0.0075987587
    %v2113 = vmul.f32 %v2105, 0.0075987587
    %2122 = vrot.lane.b32.xlu0 %v2106, 4
    %v2123 = vpop.permute.xlu0 %2122
    %2124 = vrot.lane.b32.xlu0 %v2107, 4
    %v2125 = vpop.permute.xlu0 %2124
    %2126 = vrot.lane.b32.xlu0 %v2108, 4
    %v2127 = vpop.permute.xlu0 %2126
    %2128 = vrot.lane.b32.xlu0 %v2109, 4
    %v2129 = vpop.permute.xlu0 %2128
    %2130 = vrot.lane.b32.xlu0 %v2110, 4
    %v2131 = vpop.permute.xlu0 %2130
    %2132 = vrot.lane.b32.xlu0 %v2111, 4
    %v2133 = vpop.permute.xlu0 %2132
    %2134 = vrot.lane.b32.xlu0 %v2112, 4
    %v2135 = vpop.permute.xlu0 %2134
    %2136 = vrot.lane.b32.xlu0 %v2113, 4
    %v2137 = vpop.permute.xlu0 %2136
    %v2146 = vadd.f32 %v2066, %v2123
    %v2147 = vadd.f32 %v2067, %v2125
    %v2148 = vadd.f32 %v2068, %v2127
    %v2149 = vadd.f32 %v2069, %v2129
    %v2150 = vadd.f32 %v2070, %v2131
    %v2151 = vadd.f32 %v2071, %v2133
    %v2152 = vadd.f32 %v2072, %v2135
    %v2153 = vadd.f32 %v2073, %v2137
    %2154 = vrot.lane.b32.xlu0 %v1970, 122
    %v2155 = vpop.permute.xlu0 %2154
    %2156 = vrot.lane.b32.xlu0 %v1971, 122
    %v2157 = vpop.permute.xlu0 %2156
    %2158 = vrot.lane.b32.xlu0 %v1972, 122
    %v2159 = vpop.permute.xlu0 %2158
    %2160 = vrot.lane.b32.xlu0 %v1973, 122
    %v2161 = vpop.permute.xlu0 %2160
    %2162 = vrot.lane.b32.xlu0 %v1974, 122
    %v2163 = vpop.permute.xlu0 %2162
    %2164 = vrot.lane.b32.xlu0 %v1975, 122
    %v2165 = vpop.permute.xlu0 %2164
    %2166 = vrot.lane.b32.xlu0 %v1976, 122
    %v2167 = vpop.permute.xlu0 %2166
    %2168 = vrot.lane.b32.xlu0 %v1977, 122
    %v2169 = vpop.permute.xlu0 %2168
    %v2178 = vadd.f32 %v1970, %v2155
    %v2179 = vadd.f32 %v1971, %v2157
    %v2180 = vadd.f32 %v1972, %v2159
    %v2181 = vadd.f32 %v1973, %v2161
    %v2182 = vadd.f32 %v1974, %v2163
    %v2183 = vadd.f32 %v1975, %v2165
    %v2184 = vadd.f32 %v1976, %v2167
    %v2185 = vadd.f32 %v1977, %v2169
    %v2186 = vmul.f32 %v2178, 0.036000773
    %v2187 = vmul.f32 %v2179, 0.036000773
    %v2188 = vmul.f32 %v2180, 0.036000773
    %v2189 = vmul.f32 %v2181, 0.036000773
    %v2190 = vmul.f32 %v2182, 0.036000773
    %v2191 = vmul.f32 %v2183, 0.036000773
    %v2192 = vmul.f32 %v2184, 0.036000773
    %v2193 = vmul.f32 %v2185, 0.036000773
    %2202 = vrot.lane.b32.xlu0 %v2186, 3
    %v2203 = vpop.permute.xlu0 %2202
    %2204 = vrot.lane.b32.xlu0 %v2187, 3
    %v2205 = vpop.permute.xlu0 %2204
    %2206 = vrot.lane.b32.xlu0 %v2188, 3
    %v2207 = vpop.permute.xlu0 %2206
    %2208 = vrot.lane.b32.xlu0 %v2189, 3
    %v2209 = vpop.permute.xlu0 %2208
    %2210 = vrot.lane.b32.xlu0 %v2190, 3
    %v2211 = vpop.permute.xlu0 %2210
    %2212 = vrot.lane.b32.xlu0 %v2191, 3
    %v2213 = vpop.permute.xlu0 %2212
    %2214 = vrot.lane.b32.xlu0 %v2192, 3
    %v2215 = vpop.permute.xlu0 %2214
    %2216 = vrot.lane.b32.xlu0 %v2193, 3
    %v2217 = vpop.permute.xlu0 %2216
    %v2226 = vadd.f32 %v2146, %v2203
    %v2227 = vadd.f32 %v2147, %v2205
    %v2228 = vadd.f32 %v2148, %v2207
    %v2229 = vadd.f32 %v2149, %v2209
    %v2230 = vadd.f32 %v2150, %v2211
    %v2231 = vadd.f32 %v2151, %v2213
    %v2232 = vadd.f32 %v2152, %v2215
    %v2233 = vadd.f32 %v2153, %v2217
    %2234 = vrot.lane.b32.xlu0 %v1970, 124
    %v2235 = vpop.permute.xlu0 %2234
    %2236 = vrot.lane.b32.xlu0 %v1971, 124
    %v2237 = vpop.permute.xlu0 %2236
    %2238 = vrot.lane.b32.xlu0 %v1972, 124
    %v2239 = vpop.permute.xlu0 %2238
    %2240 = vrot.lane.b32.xlu0 %v1973, 124
    %v2241 = vpop.permute.xlu0 %2240
    %2242 = vrot.lane.b32.xlu0 %v1974, 124
    %v2243 = vpop.permute.xlu0 %2242
    %2244 = vrot.lane.b32.xlu0 %v1975, 124
    %v2245 = vpop.permute.xlu0 %2244
    %2246 = vrot.lane.b32.xlu0 %v1976, 124
    %v2247 = vpop.permute.xlu0 %2246
    %2248 = vrot.lane.b32.xlu0 %v1977, 124
    %v2249 = vpop.permute.xlu0 %2248
    %v2258 = vadd.f32 %v1970, %v2235
    %v2259 = vadd.f32 %v1971, %v2237
    %v2260 = vadd.f32 %v1972, %v2239
    %v2261 = vadd.f32 %v1973, %v2241
    %v2262 = vadd.f32 %v1974, %v2243
    %v2263 = vadd.f32 %v1975, %v2245
    %v2264 = vadd.f32 %v1976, %v2247
    %v2265 = vadd.f32 %v1977, %v2249
    %v2266 = vmul.f32 %v2258, 0.109360695
    %v2267 = vmul.f32 %v2259, 0.109360695
    %v2268 = vmul.f32 %v2260, 0.109360695
    %v2269 = vmul.f32 %v2261, 0.109360695
    %v2270 = vmul.f32 %v2262, 0.109360695
    %v2271 = vmul.f32 %v2263, 0.109360695
    %v2272 = vmul.f32 %v2264, 0.109360695
    %v2273 = vmul.f32 %v2265, 0.109360695
    %2282 = vrot.lane.b32.xlu0 %v2266, 2
    %v2283 = vpop.permute.xlu0 %2282
    %2284 = vrot.lane.b32.xlu0 %v2267, 2
    %v2285 = vpop.permute.xlu0 %2284
    %2286 = vrot.lane.b32.xlu0 %v2268, 2
    %v2287 = vpop.permute.xlu0 %2286
    %2288 = vrot.lane.b32.xlu0 %v2269, 2
    %v2289 = vpop.permute.xlu0 %2288
    %2290 = vrot.lane.b32.xlu0 %v2270, 2
    %v2291 = vpop.permute.xlu0 %2290
    %2292 = vrot.lane.b32.xlu0 %v2271, 2
    %v2293 = vpop.permute.xlu0 %2292
    %2294 = vrot.lane.b32.xlu0 %v2272, 2
    %v2295 = vpop.permute.xlu0 %2294
    %2296 = vrot.lane.b32.xlu0 %v2273, 2
    %v2297 = vpop.permute.xlu0 %2296
    %v2306 = vadd.f32 %v2226, %v2283
    %v2307 = vadd.f32 %v2227, %v2285
    %v2308 = vadd.f32 %v2228, %v2287
    %v2309 = vadd.f32 %v2229, %v2289
    %v2310 = vadd.f32 %v2230, %v2291
    %v2311 = vadd.f32 %v2231, %v2293
    %v2312 = vadd.f32 %v2232, %v2295
    %v2313 = vadd.f32 %v2233, %v2297
    %2314 = vrot.lane.b32.xlu0 %v1970, 126
    %v2315 = vpop.permute.xlu0 %2314
    %2316 = vrot.lane.b32.xlu0 %v1971, 126
    %v2317 = vpop.permute.xlu0 %2316
    %2318 = vrot.lane.b32.xlu0 %v1972, 126
    %v2319 = vpop.permute.xlu0 %2318
    %2320 = vrot.lane.b32.xlu0 %v1973, 126
    %v2321 = vpop.permute.xlu0 %2320
    %2322 = vrot.lane.b32.xlu0 %v1974, 126
    %v2323 = vpop.permute.xlu0 %2322
    %2324 = vrot.lane.b32.xlu0 %v1975, 126
    %v2325 = vpop.permute.xlu0 %2324
    %2326 = vrot.lane.b32.xlu0 %v1976, 126
    %v2327 = vpop.permute.xlu0 %2326
    %2328 = vrot.lane.b32.xlu0 %v1977, 126
    %v2329 = vpop.permute.xlu0 %2328
    %v2338 = vadd.f32 %v1970, %v2315
    %v2339 = vadd.f32 %v1971, %v2317
    %v2340 = vadd.f32 %v1972, %v2319
    %v2341 = vadd.f32 %v1973, %v2321
    %v2342 = vadd.f32 %v1974, %v2323
    %v2343 = vadd.f32 %v1975, %v2325
    %v2344 = vadd.f32 %v1976, %v2327
    %v2345 = vadd.f32 %v1977, %v2329
    %v2346 = vmul.f32 %v2338, 0.21300554
    %v2347 = vmul.f32 %v2339, 0.21300554
    %v2348 = vmul.f32 %v2340, 0.21300554
    %v2349 = vmul.f32 %v2341, 0.21300554
    %v2350 = vmul.f32 %v2342, 0.21300554
    %v2351 = vmul.f32 %v2343, 0.21300554
    %v2352 = vmul.f32 %v2344, 0.21300554
    %v2353 = vmul.f32 %v2345, 0.21300554
    %2362 = vrot.lane.b32.xlu0 %v2346, 1
    %v2363 = vpop.permute.xlu0 %2362
    %2364 = vrot.lane.b32.xlu0 %v2347, 1
    %v2365 = vpop.permute.xlu0 %2364
    %2366 = vrot.lane.b32.xlu0 %v2348, 1
    %v2367 = vpop.permute.xlu0 %2366
    %2368 = vrot.lane.b32.xlu0 %v2349, 1
    %v2369 = vpop.permute.xlu0 %2368
    %2370 = vrot.lane.b32.xlu0 %v2350, 1
    %v2371 = vpop.permute.xlu0 %2370
    %2372 = vrot.lane.b32.xlu0 %v2351, 1
    %v2373 = vpop.permute.xlu0 %2372
    %2374 = vrot.lane.b32.xlu0 %v2352, 1
    %v2375 = vpop.permute.xlu0 %2374
    %2376 = vrot.lane.b32.xlu0 %v2353, 1
    %v2377 = vpop.permute.xlu0 %2376
    %v2386 = vadd.f32 %v2306, %v2363
    %v2387 = vadd.f32 %v2307, %v2365
    %v2388 = vadd.f32 %v2308, %v2367
    %v2389 = vadd.f32 %v2309, %v2369
    %v2390 = vadd.f32 %v2310, %v2371
    %v2391 = vadd.f32 %v2311, %v2373
    %v2392 = vadd.f32 %v2312, %v2375
    %v2393 = vadd.f32 %v2313, %v2377
    %2402 = vrot.lane.b32.xlu0 %v2386, 123
    %v2403 = vpop.permute.xlu0 %2402
    %2404 = vrot.lane.b32.xlu0 %v2387, 123
    %v2405 = vpop.permute.xlu0 %2404
    %2406 = vrot.lane.b32.xlu0 %v2388, 123
    %v2407 = vpop.permute.xlu0 %2406
    %2408 = vrot.lane.b32.xlu0 %v2389, 123
    %v2409 = vpop.permute.xlu0 %2408
    %2410 = vrot.lane.b32.xlu0 %v2390, 123
    %v2411 = vpop.permute.xlu0 %2410
    %2412 = vrot.lane.b32.xlu0 %v2391, 123
    %v2413 = vpop.permute.xlu0 %2412
    %2414 = vrot.lane.b32.xlu0 %v2392, 123
    %v2415 = vpop.permute.xlu0 %2414
    %2416 = vrot.lane.b32.xlu0 %v2393, 123
    %v2417 = vpop.permute.xlu0 %2416
    %2426 = vst.msk [vmem:[#allocation4] sm:$0xff] %vm734, %v2403
    %2427 = vst.msk [vmem:[#allocation4 + $0x8] sm:$0xff] %vm734, %v2405
    %2428 = vst.msk [vmem:[#allocation4 + $0x10] sm:$0xff] %vm734, %v2407
    %2429 = vst.msk [vmem:[#allocation4 + $0x18] sm:$0x3] %vm738, %v2409
    %2430 = vst.msk [vmem:[#allocation4 + $0x20] sm:$0xff] %vm734, %v2411
    %2431 = vst.msk [vmem:[#allocation4 + $0x28] sm:$0xff] %vm734, %v2413
    %2432 = vst.msk [vmem:[#allocation4 + $0x30] sm:$0xff] %vm734, %v2415
    %2433 = vst.msk [vmem:[#allocation4 + $0x38] sm:$0x3] %vm738, %v2417
    %v2434 = vld [vmem:[#allocation4 + $0x5] sm:$0xff]
    %v2435 = vld [vmem:[#allocation4 + $0xd] sm:$0xff]
    %v2436 = vld [vmem:[#allocation4 + $0x25] sm:$0xff]
    %v2437 = vld [vmem:[#allocation4 + $0x2d] sm:$0xff]
    %v2438 = vmul.f32 %v2434, 0.26601174
    %v2439 = vmul.f32 %v2435, 0.26601174
    %v2440 = vmul.f32 %v2436, 0.26601174
    %v2441 = vmul.f32 %v2437, 0.26601174
    %v2442 = vld [vmem:[#allocation4] sm:$0xff]
    %v2443 = vld [vmem:[#allocation4 + $0x8] sm:$0xff]
    %v2444 = vld [vmem:[#allocation4 + $0x20] sm:$0xff]
    %v2445 = vld [vmem:[#allocation4 + $0x28] sm:$0xff]
    %v2446 = vld [vmem:[#allocation4 + $0xa] sm:$0xff]
    %v2447 = vld [vmem:[#allocation4 + $0x12] sm:$0xff]
    %v2448 = vld [vmem:[#allocation4 + $0x2a] sm:$0xff]
    %v2449 = vld [vmem:[#allocation4 + $0x32] sm:$0xff]
    %v2450 = vadd.f32 %v2442, %v2446
    %v2451 = vadd.f32 %v2443, %v2447
    %v2452 = vadd.f32 %v2444, %v2448
    %v2453 = vadd.f32 %v2445, %v2449
    %v2454 = vmul.f32 %v2450, 0.0010283802
    %v2455 = vmul.f32 %v2451, 0.0010283802
    %v2456 = vmul.f32 %v2452, 0.0010283802
    %v2457 = vmul.f32 %v2453, 0.0010283802
    %v2458 = vadd.f32 %v2438, %v2454
    %v2459 = vadd.f32 %v2439, %v2455
    %v2460 = vadd.f32 %v2440, %v2456
    %v2461 = vadd.f32 %v2441, %v2457
    %v2462 = vld [vmem:[#allocation4 + $0x1] sm:$0xff]
    %v2463 = vld [vmem:[#allocation4 + $0x9] sm:$0xff]
    %v2464 = vld [vmem:[#allocation4 + $0x21] sm:$0xff]
    %v2465 = vld [vmem:[#allocation4 + $0x29] sm:$0xff]
    %v2466 = vld [vmem:[#allocation4 + $0x11] sm:$0xff]
    %v2467 = vld [vmem:[#allocation4 + $0x31] sm:$0xff]
    %v2468 = vadd.f32 %v2462, %v2463
    %v2469 = vadd.f32 %v2463, %v2466
    %v2470 = vadd.f32 %v2464, %v2465
    %v2471 = vadd.f32 %v2465, %v2467
    %v2472 = vmul.f32 %v2468, 0.0075987587
    %v2473 = vmul.f32 %v2469, 0.0075987587
    %v2474 = vmul.f32 %v2470, 0.0075987587
    %v2475 = vmul.f32 %v2471, 0.0075987587
    %v2476 = vadd.f32 %v2458, %v2472
    %v2477 = vadd.f32 %v2459, %v2473
    %v2478 = vadd.f32 %v2460, %v2474
    %v2479 = vadd.f32 %v2461, %v2475
    %v2480 = vld [vmem:[#allocation4 + $0x2] sm:$0xff]
    %v2481 = vld [vmem:[#allocation4 + $0x22] sm:$0xff]
    %v2482 = vld [vmem:[#allocation4 + $0x10] sm:$0xff]
    %v2483 = vld [vmem:[#allocation4 + $0x30] sm:$0xff]
    %v2484 = vadd.f32 %v2480, %v2443
    %v2485 = vadd.f32 %v2446, %v2482
    %v2486 = vadd.f32 %v2481, %v2445
    %v2487 = vadd.f32 %v2448, %v2483
    %v2488 = vmul.f32 %v2484, 0.036000773
    %v2489 = vmul.f32 %v2485, 0.036000773
    %v2490 = vmul.f32 %v2486, 0.036000773
    %v2491 = vmul.f32 %v2487, 0.036000773
    %v2492 = vadd.f32 %v2476, %v2488
    %v2493 = vadd.f32 %v2477, %v2489
    %v2494 = vadd.f32 %v2478, %v2490
    %v2495 = vadd.f32 %v2479, %v2491
    %v2496 = vld [vmem:[#allocation4 + $0x3] sm:$0xff]
    %v2497 = vld [vmem:[#allocation4 + $0xb] sm:$0xff]
    %v2498 = vld [vmem:[#allocation4 + $0x23] sm:$0xff]
    %v2499 = vld [vmem:[#allocation4 + $0x2b] sm:$0xff]
    %v2500 = vld [vmem:[#allocation4 + $0x7] sm:$0xff]
    %v2501 = vld [vmem:[#allocation4 + $0xf] sm:$0xff]
    %v2502 = vld [vmem:[#allocation4 + $0x27] sm:$0xff]
    %v2503 = vld [vmem:[#allocation4 + $0x2f] sm:$0xff]
    %v2504 = vadd.f32 %v2496, %v2500
    %v2505 = vadd.f32 %v2497, %v2501
    %v2506 = vadd.f32 %v2498, %v2502
    %v2507 = vadd.f32 %v2499, %v2503
    %v2508 = vmul.f32 %v2504, 0.109360695
    %v2509 = vmul.f32 %v2505, 0.109360695
    %v2510 = vmul.f32 %v2506, 0.109360695
    %v2511 = vmul.f32 %v2507, 0.109360695
    %v2512 = vadd.f32 %v2492, %v2508
    %v2513 = vadd.f32 %v2493, %v2509
    %v2514 = vadd.f32 %v2494, %v2510
    %v2515 = vadd.f32 %v2495, %v2511
    %v2516 = vld [vmem:[#allocation4 + $0x4] sm:$0xff]
    %v2517 = vld [vmem:[#allocation4 + $0xc] sm:$0xff]
    %v2518 = vld [vmem:[#allocation4 + $0x24] sm:$0xff]
    %v2519 = vld [vmem:[#allocation4 + $0x2c] sm:$0xff]
    %v2520 = vld [vmem:[#allocation4 + $0x6] sm:$0xff]
    %v2521 = vld [vmem:[#allocation4 + $0xe] sm:$0xff]
    %v2522 = vld [vmem:[#allocation4 + $0x26] sm:$0xff]
    %v2523 = vld [vmem:[#allocation4 + $0x2e] sm:$0xff]
    %v2524 = vadd.f32 %v2516, %v2520
    %v2525 = vadd.f32 %v2517, %v2521
    %v2526 = vadd.f32 %v2518, %v2522
    %v2527 = vadd.f32 %v2519, %v2523
    %v2528 = vmul.f32 %v2524, 0.21300554
    %v2529 = vmul.f32 %v2525, 0.21300554
    %v2530 = vmul.f32 %v2526, 0.21300554
    %v2531 = vmul.f32 %v2527, 0.21300554
    %v2532 = vadd.f32 %v2512, %v2528
    %v2533 = vadd.f32 %v2513, %v2529
    %v2534 = vadd.f32 %v2514, %v2530
    %v2535 = vadd.f32 %v2515, %v2531
    %v2536 = vmul.f32 %v270, %v278
    %v2537 = vmul.f32 %v271, %v279
    %v2538 = vmul.f32 %v272, %v280
    %v2539 = vmul.f32 %v273, %v281
    %v2540 = vmul.f32 %v274, %v282
    %v2541 = vmul.f32 %v275, %v283
    %v2542 = vmul.f32 %v276, %v284
    %v2543 = vmul.f32 %v277, %v285
    %v2544 = vmul.f32 %v2536, 0.26601174
    %v2545 = vmul.f32 %v2537, 0.26601174
    %v2546 = vmul.f32 %v2538, 0.26601174
    %v2547 = vmul.f32 %v2539, 0.26601174
    %v2548 = vmul.f32 %v2540, 0.26601174
    %v2549 = vmul.f32 %v2541, 0.26601174
    %v2550 = vmul.f32 %v2542, 0.26601174
    %v2551 = vmul.f32 %v2543, 0.26601174
    %2560 = vrot.lane.b32.xlu0 %v2536, 118
    %v2561 = vpop.permute.xlu0 %2560
    %2562 = vrot.lane.b32.xlu0 %v2537, 118
    %v2563 = vpop.permute.xlu0 %2562
    %2564 = vrot.lane.b32.xlu0 %v2538, 118
    %v2565 = vpop.permute.xlu0 %2564
    %2566 = vrot.lane.b32.xlu0 %v2539, 118
    %v2567 = vpop.permute.xlu0 %2566
    %2568 = vrot.lane.b32.xlu0 %v2540, 118
    %v2569 = vpop.permute.xlu0 %2568
    %2570 = vrot.lane.b32.xlu0 %v2541, 118
    %v2571 = vpop.permute.xlu0 %2570
    %2572 = vrot.lane.b32.xlu0 %v2542, 118
    %v2573 = vpop.permute.xlu0 %2572
    %2574 = vrot.lane.b32.xlu0 %v2543, 118
    %v2575 = vpop.permute.xlu0 %2574
    %v2584 = vadd.f32 %v2536, %v2561
    %v2585 = vadd.f32 %v2537, %v2563
    %v2586 = vadd.f32 %v2538, %v2565
    %v2587 = vadd.f32 %v2539, %v2567
    %v2588 = vadd.f32 %v2540, %v2569
    %v2589 = vadd.f32 %v2541, %v2571
    %v2590 = vadd.f32 %v2542, %v2573
    %v2591 = vadd.f32 %v2543, %v2575
    %v2592 = vmul.f32 %v2584, 0.0010283802
    %v2593 = vmul.f32 %v2585, 0.0010283802
    %v2594 = vmul.f32 %v2586, 0.0010283802
    %v2595 = vmul.f32 %v2587, 0.0010283802
    %v2596 = vmul.f32 %v2588, 0.0010283802
    %v2597 = vmul.f32 %v2589, 0.0010283802
    %v2598 = vmul.f32 %v2590, 0.0010283802
    %v2599 = vmul.f32 %v2591, 0.0010283802
    %2608 = vrot.lane.b32.xlu0 %v2592, 5
    %v2609 = vpop.permute.xlu0 %2608
    %2610 = vrot.lane.b32.xlu0 %v2593, 5
    %v2611 = vpop.permute.xlu0 %2610
    %2612 = vrot.lane.b32.xlu0 %v2594, 5
    %v2613 = vpop.permute.xlu0 %2612
    %2614 = vrot.lane.b32.xlu0 %v2595, 5
    %v2615 = vpop.permute.xlu0 %2614
    %2616 = vrot.lane.b32.xlu0 %v2596, 5
    %v2617 = vpop.permute.xlu0 %2616
    %2618 = vrot.lane.b32.xlu0 %v2597, 5
    %v2619 = vpop.permute.xlu0 %2618
    %2620 = vrot.lane.b32.xlu0 %v2598, 5
    %v2621 = vpop.permute.xlu0 %2620
    %2622 = vrot.lane.b32.xlu0 %v2599, 5
    %v2623 = vpop.permute.xlu0 %2622
    %v2632 = vadd.f32 %v2544, %v2609
    %v2633 = vadd.f32 %v2545, %v2611
    %v2634 = vadd.f32 %v2546, %v2613
    %v2635 = vadd.f32 %v2547, %v2615
    %v2636 = vadd.f32 %v2548, %v2617
    %v2637 = vadd.f32 %v2549, %v2619
    %v2638 = vadd.f32 %v2550, %v2621
    %v2639 = vadd.f32 %v2551, %v2623
    %2640 = vrot.lane.b32.xlu0 %v2536, 120
    %v2641 = vpop.permute.xlu0 %2640
    %2642 = vrot.lane.b32.xlu0 %v2537, 120
    %v2643 = vpop.permute.xlu0 %2642
    %2644 = vrot.lane.b32.xlu0 %v2538, 120
    %v2645 = vpop.permute.xlu0 %2644
    %2646 = vrot.lane.b32.xlu0 %v2539, 120
    %v2647 = vpop.permute.xlu0 %2646
    %2648 = vrot.lane.b32.xlu0 %v2540, 120
    %v2649 = vpop.permute.xlu0 %2648
    %2650 = vrot.lane.b32.xlu0 %v2541, 120
    %v2651 = vpop.permute.xlu0 %2650
    %2652 = vrot.lane.b32.xlu0 %v2542, 120
    %v2653 = vpop.permute.xlu0 %2652
    %2654 = vrot.lane.b32.xlu0 %v2543, 120
    %v2655 = vpop.permute.xlu0 %2654
    %v2664 = vadd.f32 %v2536, %v2641
    %v2665 = vadd.f32 %v2537, %v2643
    %v2666 = vadd.f32 %v2538, %v2645
    %v2667 = vadd.f32 %v2539, %v2647
    %v2668 = vadd.f32 %v2540, %v2649
    %v2669 = vadd.f32 %v2541, %v2651
    %v2670 = vadd.f32 %v2542, %v2653
    %v2671 = vadd.f32 %v2543, %v2655
    %v2672 = vmul.f32 %v2664, 0.0075987587
    %v2673 = vmul.f32 %v2665, 0.0075987587
    %v2674 = vmul.f32 %v2666, 0.0075987587
    %v2675 = vmul.f32 %v2667, 0.0075987587
    %v2676 = vmul.f32 %v2668, 0.0075987587
    %v2677 = vmul.f32 %v2669, 0.0075987587
    %v2678 = vmul.f32 %v2670, 0.0075987587
    %v2679 = vmul.f32 %v2671, 0.0075987587
    %2688 = vrot.lane.b32.xlu0 %v2672, 4
    %v2689 = vpop.permute.xlu0 %2688
    %2690 = vrot.lane.b32.xlu0 %v2673, 4
    %v2691 = vpop.permute.xlu0 %2690
    %2692 = vrot.lane.b32.xlu0 %v2674, 4
    %v2693 = vpop.permute.xlu0 %2692
    %2694 = vrot.lane.b32.xlu0 %v2675, 4
    %v2695 = vpop.permute.xlu0 %2694
    %2696 = vrot.lane.b32.xlu0 %v2676, 4
    %v2697 = vpop.permute.xlu0 %2696
    %2698 = vrot.lane.b32.xlu0 %v2677, 4
    %v2699 = vpop.permute.xlu0 %2698
    %2700 = vrot.lane.b32.xlu0 %v2678, 4
    %v2701 = vpop.permute.xlu0 %2700
    %2702 = vrot.lane.b32.xlu0 %v2679, 4
    %v2703 = vpop.permute.xlu0 %2702
    %v2712 = vadd.f32 %v2632, %v2689
    %v2713 = vadd.f32 %v2633, %v2691
    %v2714 = vadd.f32 %v2634, %v2693
    %v2715 = vadd.f32 %v2635, %v2695
    %v2716 = vadd.f32 %v2636, %v2697
    %v2717 = vadd.f32 %v2637, %v2699
    %v2718 = vadd.f32 %v2638, %v2701
    %v2719 = vadd.f32 %v2639, %v2703
    %2720 = vrot.lane.b32.xlu0 %v2536, 122
    %v2721 = vpop.permute.xlu0 %2720
    %2722 = vrot.lane.b32.xlu0 %v2537, 122
    %v2723 = vpop.permute.xlu0 %2722
    %2724 = vrot.lane.b32.xlu0 %v2538, 122
    %v2725 = vpop.permute.xlu0 %2724
    %2726 = vrot.lane.b32.xlu0 %v2539, 122
    %v2727 = vpop.permute.xlu0 %2726
    %2728 = vrot.lane.b32.xlu0 %v2540, 122
    %v2729 = vpop.permute.xlu0 %2728
    %2730 = vrot.lane.b32.xlu0 %v2541, 122
    %v2731 = vpop.permute.xlu0 %2730
    %2732 = vrot.lane.b32.xlu0 %v2542, 122
    %v2733 = vpop.permute.xlu0 %2732
    %2734 = vrot.lane.b32.xlu0 %v2543, 122
    %v2735 = vpop.permute.xlu0 %2734
    %v2744 = vadd.f32 %v2536, %v2721
    %v2745 = vadd.f32 %v2537, %v2723
    %v2746 = vadd.f32 %v2538, %v2725
    %v2747 = vadd.f32 %v2539, %v2727
    %v2748 = vadd.f32 %v2540, %v2729
    %v2749 = vadd.f32 %v2541, %v2731
    %v2750 = vadd.f32 %v2542, %v2733
    %v2751 = vadd.f32 %v2543, %v2735
    %v2752 = vmul.f32 %v2744, 0.036000773
    %v2753 = vmul.f32 %v2745, 0.036000773
    %v2754 = vmul.f32 %v2746, 0.036000773
    %v2755 = vmul.f32 %v2747, 0.036000773
    %v2756 = vmul.f32 %v2748, 0.036000773
    %v2757 = vmul.f32 %v2749, 0.036000773
    %v2758 = vmul.f32 %v2750, 0.036000773
    %v2759 = vmul.f32 %v2751, 0.036000773
    %2768 = vrot.lane.b32.xlu0 %v2752, 3
    %v2769 = vpop.permute.xlu0 %2768
    %2770 = vrot.lane.b32.xlu0 %v2753, 3
    %v2771 = vpop.permute.xlu0 %2770
    %2772 = vrot.lane.b32.xlu0 %v2754, 3
    %v2773 = vpop.permute.xlu0 %2772
    %2774 = vrot.lane.b32.xlu0 %v2755, 3
    %v2775 = vpop.permute.xlu0 %2774
    %2776 = vrot.lane.b32.xlu0 %v2756, 3
    %v2777 = vpop.permute.xlu0 %2776
    %2778 = vrot.lane.b32.xlu0 %v2757, 3
    %v2779 = vpop.permute.xlu0 %2778
    %2780 = vrot.lane.b32.xlu0 %v2758, 3
    %v2781 = vpop.permute.xlu0 %2780
    %2782 = vrot.lane.b32.xlu0 %v2759, 3
    %v2783 = vpop.permute.xlu0 %2782
    %v2792 = vadd.f32 %v2712, %v2769
    %v2793 = vadd.f32 %v2713, %v2771
    %v2794 = vadd.f32 %v2714, %v2773
    %v2795 = vadd.f32 %v2715, %v2775
    %v2796 = vadd.f32 %v2716, %v2777
    %v2797 = vadd.f32 %v2717, %v2779
    %v2798 = vadd.f32 %v2718, %v2781
    %v2799 = vadd.f32 %v2719, %v2783
    %2800 = vrot.lane.b32.xlu0 %v2536, 124
    %v2801 = vpop.permute.xlu0 %2800
    %2802 = vrot.lane.b32.xlu0 %v2537, 124
    %v2803 = vpop.permute.xlu0 %2802
    %2804 = vrot.lane.b32.xlu0 %v2538, 124
    %v2805 = vpop.permute.xlu0 %2804
    %2806 = vrot.lane.b32.xlu0 %v2539, 124
    %v2807 = vpop.permute.xlu0 %2806
    %2808 = vrot.lane.b32.xlu0 %v2540, 124
    %v2809 = vpop.permute.xlu0 %2808
    %2810 = vrot.lane.b32.xlu0 %v2541, 124
    %v2811 = vpop.permute.xlu0 %2810
    %2812 = vrot.lane.b32.xlu0 %v2542, 124
    %v2813 = vpop.permute.xlu0 %2812
    %2814 = vrot.lane.b32.xlu0 %v2543, 124
    %v2815 = vpop.permute.xlu0 %2814
    %v2824 = vadd.f32 %v2536, %v2801
    %v2825 = vadd.f32 %v2537, %v2803
    %v2826 = vadd.f32 %v2538, %v2805
    %v2827 = vadd.f32 %v2539, %v2807
    %v2828 = vadd.f32 %v2540, %v2809
    %v2829 = vadd.f32 %v2541, %v2811
    %v2830 = vadd.f32 %v2542, %v2813
    %v2831 = vadd.f32 %v2543, %v2815
    %v2832 = vmul.f32 %v2824, 0.109360695
    %v2833 = vmul.f32 %v2825, 0.109360695
    %v2834 = vmul.f32 %v2826, 0.109360695
    %v2835 = vmul.f32 %v2827, 0.109360695
    %v2836 = vmul.f32 %v2828, 0.109360695
    %v2837 = vmul.f32 %v2829, 0.109360695
    %v2838 = vmul.f32 %v2830, 0.109360695
    %v2839 = vmul.f32 %v2831, 0.109360695
    %2848 = vrot.lane.b32.xlu0 %v2832, 2
    %v2849 = vpop.permute.xlu0 %2848
    %2850 = vrot.lane.b32.xlu0 %v2833, 2
    %v2851 = vpop.permute.xlu0 %2850
    %2852 = vrot.lane.b32.xlu0 %v2834, 2
    %v2853 = vpop.permute.xlu0 %2852
    %2854 = vrot.lane.b32.xlu0 %v2835, 2
    %v2855 = vpop.permute.xlu0 %2854
    %2856 = vrot.lane.b32.xlu0 %v2836, 2
    %v2857 = vpop.permute.xlu0 %2856
    %2858 = vrot.lane.b32.xlu0 %v2837, 2
    %v2859 = vpop.permute.xlu0 %2858
    %2860 = vrot.lane.b32.xlu0 %v2838, 2
    %v2861 = vpop.permute.xlu0 %2860
    %2862 = vrot.lane.b32.xlu0 %v2839, 2
    %v2863 = vpop.permute.xlu0 %2862
    %v2872 = vadd.f32 %v2792, %v2849
    %v2873 = vadd.f32 %v2793, %v2851
    %v2874 = vadd.f32 %v2794, %v2853
    %v2875 = vadd.f32 %v2795, %v2855
    %v2876 = vadd.f32 %v2796, %v2857
    %v2877 = vadd.f32 %v2797, %v2859
    %v2878 = vadd.f32 %v2798, %v2861
    %v2879 = vadd.f32 %v2799, %v2863
    %2880 = vrot.lane.b32.xlu0 %v2536, 126
    %v2881 = vpop.permute.xlu0 %2880
    %2882 = vrot.lane.b32.xlu0 %v2537, 126
    %v2883 = vpop.permute.xlu0 %2882
    %2884 = vrot.lane.b32.xlu0 %v2538, 126
    %v2885 = vpop.permute.xlu0 %2884
    %2886 = vrot.lane.b32.xlu0 %v2539, 126
    %v2887 = vpop.permute.xlu0 %2886
    %2888 = vrot.lane.b32.xlu0 %v2540, 126
    %v2889 = vpop.permute.xlu0 %2888
    %2890 = vrot.lane.b32.xlu0 %v2541, 126
    %v2891 = vpop.permute.xlu0 %2890
    %2892 = vrot.lane.b32.xlu0 %v2542, 126
    %v2893 = vpop.permute.xlu0 %2892
    %2894 = vrot.lane.b32.xlu0 %v2543, 126
    %v2895 = vpop.permute.xlu0 %2894
    %v2904 = vadd.f32 %v2536, %v2881
    %v2905 = vadd.f32 %v2537, %v2883
    %v2906 = vadd.f32 %v2538, %v2885
    %v2907 = vadd.f32 %v2539, %v2887
    %v2908 = vadd.f32 %v2540, %v2889
    %v2909 = vadd.f32 %v2541, %v2891
    %v2910 = vadd.f32 %v2542, %v2893
    %v2911 = vadd.f32 %v2543, %v2895
    %v2912 = vmul.f32 %v2904, 0.21300554
    %v2913 = vmul.f32 %v2905, 0.21300554
    %v2914 = vmul.f32 %v2906, 0.21300554
    %v2915 = vmul.f32 %v2907, 0.21300554
    %v2916 = vmul.f32 %v2908, 0.21300554
    %v2917 = vmul.f32 %v2909, 0.21300554
    %v2918 = vmul.f32 %v2910, 0.21300554
    %v2919 = vmul.f32 %v2911, 0.21300554
    %2928 = vrot.lane.b32.xlu0 %v2912, 1
    %v2929 = vpop.permute.xlu0 %2928
    %2930 = vrot.lane.b32.xlu0 %v2913, 1
    %v2931 = vpop.permute.xlu0 %2930
    %2932 = vrot.lane.b32.xlu0 %v2914, 1
    %v2933 = vpop.permute.xlu0 %2932
    %2934 = vrot.lane.b32.xlu0 %v2915, 1
    %v2935 = vpop.permute.xlu0 %2934
    %2936 = vrot.lane.b32.xlu0 %v2916, 1
    %v2937 = vpop.permute.xlu0 %2936
    %2938 = vrot.lane.b32.xlu0 %v2917, 1
    %v2939 = vpop.permute.xlu0 %2938
    %2940 = vrot.lane.b32.xlu0 %v2918, 1
    %v2941 = vpop.permute.xlu0 %2940
    %2942 = vrot.lane.b32.xlu0 %v2919, 1
    %v2943 = vpop.permute.xlu0 %2942
    %v2952 = vadd.f32 %v2872, %v2929
    %v2953 = vadd.f32 %v2873, %v2931
    %v2954 = vadd.f32 %v2874, %v2933
    %v2955 = vadd.f32 %v2875, %v2935
    %v2956 = vadd.f32 %v2876, %v2937
    %v2957 = vadd.f32 %v2877, %v2939
    %v2958 = vadd.f32 %v2878, %v2941
    %v2959 = vadd.f32 %v2879, %v2943
    %2968 = vrot.lane.b32.xlu0 %v2952, 123
    %v2969 = vpop.permute.xlu0 %2968
    %2970 = vrot.lane.b32.xlu0 %v2953, 123
    %v2971 = vpop.permute.xlu0 %2970
    %2972 = vrot.lane.b32.xlu0 %v2954, 123
    %v2973 = vpop.permute.xlu0 %2972
    %2974 = vrot.lane.b32.xlu0 %v2955, 123
    %v2975 = vpop.permute.xlu0 %2974
    %2976 = vrot.lane.b32.xlu0 %v2956, 123
    %v2977 = vpop.permute.xlu0 %2976
    %2978 = vrot.lane.b32.xlu0 %v2957, 123
    %v2979 = vpop.permute.xlu0 %2978
    %2980 = vrot.lane.b32.xlu0 %v2958, 123
    %v2981 = vpop.permute.xlu0 %2980
    %2982 = vrot.lane.b32.xlu0 %v2959, 123
    %v2983 = vpop.permute.xlu0 %2982
    %2992 = vst.msk [vmem:[#allocation4] sm:$0xff] %vm734, %v2969
    %2993 = vst.msk [vmem:[#allocation4 + $0x8] sm:$0xff] %vm734, %v2971
    %2994 = vst.msk [vmem:[#allocation4 + $0x10] sm:$0xff] %vm734, %v2973
    %2995 = vst.msk [vmem:[#allocation4 + $0x18] sm:$0x3] %vm738, %v2975
    %2996 = vst.msk [vmem:[#allocation4 + $0x20] sm:$0xff] %vm734, %v2977
    %2997 = vst.msk [vmem:[#allocation4 + $0x28] sm:$0xff] %vm734, %v2979
    %2998 = vst.msk [vmem:[#allocation4 + $0x30] sm:$0xff] %vm734, %v2981
    %2999 = vst.msk [vmem:[#allocation4 + $0x38] sm:$0x3] %vm738, %v2983
    %v3000 = vld [vmem:[#allocation4 + $0x5] sm:$0xff]
    %v3001 = vld [vmem:[#allocation4 + $0xd] sm:$0xff]
    %v3002 = vld [vmem:[#allocation4 + $0x25] sm:$0xff]
    %v3003 = vld [vmem:[#allocation4 + $0x2d] sm:$0xff]
    %v3004 = vmul.f32 %v3000, 0.26601174
    %v3005 = vmul.f32 %v3001, 0.26601174
    %v3006 = vmul.f32 %v3002, 0.26601174
    %v3007 = vmul.f32 %v3003, 0.26601174
    %v3008 = vld [vmem:[#allocation4] sm:$0xff]
    %v3009 = vld [vmem:[#allocation4 + $0x8] sm:$0xff]
    %v3010 = vld [vmem:[#allocation4 + $0x20] sm:$0xff]
    %v3011 = vld [vmem:[#allocation4 + $0x28] sm:$0xff]
    %v3012 = vld [vmem:[#allocation4 + $0xa] sm:$0xff]
    %v3013 = vld [vmem:[#allocation4 + $0x12] sm:$0xff]
    %v3014 = vld [vmem:[#allocation4 + $0x2a] sm:$0xff]
    %v3015 = vld [vmem:[#allocation4 + $0x32] sm:$0xff]
    %v3016 = vadd.f32 %v3008, %v3012
    %v3017 = vadd.f32 %v3009, %v3013
    %v3018 = vadd.f32 %v3010, %v3014
    %v3019 = vadd.f32 %v3011, %v3015
    %v3020 = vmul.f32 %v3016, 0.0010283802
    %v3021 = vmul.f32 %v3017, 0.0010283802
    %v3022 = vmul.f32 %v3018, 0.0010283802
    %v3023 = vmul.f32 %v3019, 0.0010283802
    %v3024 = vadd.f32 %v3004, %v3020
    %v3025 = vadd.f32 %v3005, %v3021
    %v3026 = vadd.f32 %v3006, %v3022
    %v3027 = vadd.f32 %v3007, %v3023
    %v3028 = vld [vmem:[#allocation4 + $0x1] sm:$0xff]
    %v3029 = vld [vmem:[#allocation4 + $0x9] sm:$0xff]
    %v3030 = vld [vmem:[#allocation4 + $0x21] sm:$0xff]
    %v3031 = vld [vmem:[#allocation4 + $0x29] sm:$0xff]
    %v3032 = vld [vmem:[#allocation4 + $0x11] sm:$0xff]
    %v3033 = vld [vmem:[#allocation4 + $0x31] sm:$0xff]
    %v3034 = vadd.f32 %v3028, %v3029
    %v3035 = vadd.f32 %v3029, %v3032
    %v3036 = vadd.f32 %v3030, %v3031
    %v3037 = vadd.f32 %v3031, %v3033
    %v3038 = vmul.f32 %v3034, 0.0075987587
    %v3039 = vmul.f32 %v3035, 0.0075987587
    %v3040 = vmul.f32 %v3036, 0.0075987587
    %v3041 = vmul.f32 %v3037, 0.0075987587
    %v3042 = vadd.f32 %v3024, %v3038
    %v3043 = vadd.f32 %v3025, %v3039
    %v3044 = vadd.f32 %v3026, %v3040
    %v3045 = vadd.f32 %v3027, %v3041
    %v3046 = vld [vmem:[#allocation4 + $0x2] sm:$0xff]
    %v3047 = vld [vmem:[#allocation4 + $0x22] sm:$0xff]
    %v3048 = vld [vmem:[#allocation4 + $0x10] sm:$0xff]
    %v3049 = vld [vmem:[#allocation4 + $0x30] sm:$0xff]
    %v3050 = vadd.f32 %v3046, %v3009
    %v3051 = vadd.f32 %v3012, %v3048
    %v3052 = vadd.f32 %v3047, %v3011
    %v3053 = vadd.f32 %v3014, %v3049
    %v3054 = vmul.f32 %v3050, 0.036000773
    %v3055 = vmul.f32 %v3051, 0.036000773
    %v3056 = vmul.f32 %v3052, 0.036000773
    %v3057 = vmul.f32 %v3053, 0.036000773
    %v3058 = vadd.f32 %v3042, %v3054
    %v3059 = vadd.f32 %v3043, %v3055
    %v3060 = vadd.f32 %v3044, %v3056
    %v3061 = vadd.f32 %v3045, %v3057
    %v3062 = vld [vmem:[#allocation4 + $0x3] sm:$0xff]
    %v3063 = vld [vmem:[#allocation4 + $0xb] sm:$0xff]
    %v3064 = vld [vmem:[#allocation4 + $0x23] sm:$0xff]
    %v3065 = vld [vmem:[#allocation4 + $0x2b] sm:$0xff]
    %v3066 = vld [vmem:[#allocation4 + $0x7] sm:$0xff]
    %v3067 = vld [vmem:[#allocation4 + $0xf] sm:$0xff]
    %v3068 = vld [vmem:[#allocation4 + $0x27] sm:$0xff]
    %v3069 = vld [vmem:[#allocation4 + $0x2f] sm:$0xff]
    %v3070 = vadd.f32 %v3062, %v3066
    %v3071 = vadd.f32 %v3063, %v3067
    %v3072 = vadd.f32 %v3064, %v3068
    %v3073 = vadd.f32 %v3065, %v3069
    %v3074 = vmul.f32 %v3070, 0.109360695
    %v3075 = vmul.f32 %v3071, 0.109360695
    %v3076 = vmul.f32 %v3072, 0.109360695
    %v3077 = vmul.f32 %v3073, 0.109360695
    %v3078 = vadd.f32 %v3058, %v3074
    %v3079 = vadd.f32 %v3059, %v3075
    %v3080 = vadd.f32 %v3060, %v3076
    %v3081 = vadd.f32 %v3061, %v3077
    %v3082 = vld [vmem:[#allocation4 + $0x4] sm:$0xff]
    %v3083 = vld [vmem:[#allocation4 + $0xc] sm:$0xff]
    %v3084 = vld [vmem:[#allocation4 + $0x24] sm:$0xff]
    %v3085 = vld [vmem:[#allocation4 + $0x2c] sm:$0xff]
    %v3086 = vld [vmem:[#allocation4 + $0x6] sm:$0xff]
    %v3087 = vld [vmem:[#allocation4 + $0xe] sm:$0xff]
    %v3088 = vld [vmem:[#allocation4 + $0x26] sm:$0xff]
    %v3089 = vld [vmem:[#allocation4 + $0x2e] sm:$0xff]
    %v3090 = vadd.f32 %v3082, %v3086
    %v3091 = vadd.f32 %v3083, %v3087
    %v3092 = vadd.f32 %v3084, %v3088
    %v3093 = vadd.f32 %v3085, %v3089
    %v3094 = vmul.f32 %v3090, 0.21300554
    %v3095 = vmul.f32 %v3091, 0.21300554
    %v3096 = vmul.f32 %v3092, 0.21300554
    %v3097 = vmul.f32 %v3093, 0.21300554
    %v3098 = vadd.f32 %v3078, %v3094
    %v3099 = vadd.f32 %v3079, %v3095
    %v3100 = vadd.f32 %v3080, %v3096
    %v3101 = vadd.f32 %v3081, %v3097
    %v3102 = vmul.f32 %v842, %v842
    %v3103 = vmul.f32 %v843, %v843
    %v3104 = vmul.f32 %v844, %v844
    %v3105 = vmul.f32 %v845, %v845
    %v3106 = vmul.f32 %v1400, %v1400
    %v3107 = vmul.f32 %v1401, %v1401
    %v3108 = vmul.f32 %v1402, %v1402
    %v3109 = vmul.f32 %v1403, %v1403
    %v3110 = vmul.f32 %v842, %v1400
    %v3111 = vmul.f32 %v843, %v1401
    %v3112 = vmul.f32 %v844, %v1402
    %v3113 = vmul.f32 %v845, %v1403
    %v3114 = vsub.f32 %v1966, %v3102
    %v3115 = vsub.f32 %v1967, %v3103
    %v3116 = vsub.f32 %v1968, %v3104
    %v3117 = vsub.f32 %v1969, %v3105
    %v3118 = vsub.f32 %v2532, %v3106
    %v3119 = vsub.f32 %v2533, %v3107
    %v3120 = vsub.f32 %v2534, %v3108
    %v3121 = vsub.f32 %v2535, %v3109
    %v3122 = vsub.f32 %v3098, %v3110
    %v3123 = vsub.f32 %v3099, %v3111
    %v3124 = vsub.f32 %v3100, %v3112
    %v3125 = vsub.f32 %v3101, %v3113
    %v3126 = vmul.f32 %v3110, 2.0
    %v3127 = vmul.f32 %v3111, 2.0
    %v3128 = vmul.f32 %v3112, 2.0
    %v3129 = vmul.f32 %v3113, 2.0
    %v3130 = vadd.f32 %v3126, 0.0001
    %v3131 = vadd.f32 %v3127, 0.0001
    %v3132 = vadd.f32 %v3128, 0.0001
    %v3133 = vadd.f32 %v3129, 0.0001
    %v3134 = vmul.f32 %v3122, 2.0
    %v3135 = vmul.f32 %v3123, 2.0
    %v3136 = vmul.f32 %v3124, 2.0
    %v3137 = vmul.f32 %v3125, 2.0
    %v3138 = vadd.f32 %v3134, 0.0009
    %v3139 = vadd.f32 %v3135, 0.0009
    %v3140 = vadd.f32 %v3136, 0.0009
    %v3141 = vadd.f32 %v3137, 0.0009
    %v3142 = vmul.f32 %v3130, %v3138
    %v3143 = vmul.f32 %v3131, %v3139
    %v3144 = vmul.f32 %v3132, %v3140
    %v3145 = vmul.f32 %v3133, %v3141
    %v3146 = vadd.f32 %v3102, %v3106
    %v3147 = vadd.f32 %v3103, %v3107
    %v3148 = vadd.f32 %v3104, %v3108
    %v3149 = vadd.f32 %v3105, %v3109
    %v3150 = vadd.f32 %v3146, 0.0001
    %v3151 = vadd.f32 %v3147, 0.0001
    %v3152 = vadd.f32 %v3148, 0.0001
    %v3153 = vadd.f32 %v3149, 0.0001
    %v3154 = vadd.f32 %v3114, %v3118
    %v3155 = vadd.f32 %v3115, %v3119
    %v3156 = vadd.f32 %v3116, %v3120
    %v3157 = vadd.f32 %v3117, %v3121
    %v3158 = vadd.f32 %v3154, 0.0009
    %v3159 = vadd.f32 %v3155, 0.0009
    %v3160 = vadd.f32 %v3156, 0.0009
    %v3161 = vadd.f32 %v3157, 0.0009
    %v3162 = vmul.f32 %v3150, %v3158
    %v3163 = vmul.f32 %v3151, %v3159
    %v3164 = vmul.f32 %v3152, %v3160
    %v3165 = vmul.f32 %v3153, %v3161
    %v3166 = vrcp.pop %v3162
    %v3167 = vrcp.pop %v3163
    %v3168 = vrcp.pop %v3164
    %v3169 = vrcp.pop %v3165
    %v3170 = vmul.f32 %v3142, %v3166
    %v3171 = vmul.f32 %v3143, %v3167
    %v3172 = vmul.f32 %v3144, %v3168
    %v3173 = vmul.f32 %v3145, %v3169
    %v3174 = vlaneseq
    %v3175 = vand.u32 %v3174, 127
    %vm3176 = vcmp.lt.s32.totalorder %v3175, 16
    %vm3177 = vcmp.ge.s32.totalorder %v3175, 26
    %vm3178 = vcmp.lt.s32.totalorder %v3175, 42
    %vm3179 = vmand %vm3177, %vm3178
    %vm3180 = vmor %vm3176, %vm3179
    %vm3181 = vcmp.ge.s32.totalorder %v3175, 52
    %vm3182 = vcmp.lt.s32.totalorder %v3175, 68
    %vm3183 = vmand %vm3181, %vm3182
    %vm3184 = vmor %vm3180, %vm3183
    %vm3185 = vcmp.ge.s32.totalorder %v3175, 78
    %vm3186 = vcmp.lt.s32.totalorder %v3175, 94
    %vm3187 = vmand %vm3185, %vm3186
    %vm3188 = vmor %vm3184, %vm3187
    %v3189 = vsel %vm3188, 1, 0
    %vm3190 = vcmp.eq.s32.totalorder %v3189, 1
    %v3191 = vsel %vm3190, %v3170, 0.0
    %v3192 = vsel %vm3190, %v3171, 0.0
    %v3193 = vsel %vm3190, %v3172, 0.0
    %v3194 = vsel %vm3190, %v3173, 0.0
    %v3195 = vsel %vm734, %v3191, 0.0
    %v3196 = vsel %vm734, %v3192, 0.0
    %v3197 = vadd.f32 %v3195, %v3196
    %v3198 = vsel %vm734, %v3193, 0.0
    %v3199 = vadd.f32 %v3197, %v3198
    %v3200 = vsel %vm734, %v3194, 0.0
    %v3201 = vadd.f32 %v3199, %v3200
    %3202 = vadd.xlane.f32.xlu0 %v3201
    %v3203 = vpop.xlane.xlu0 %3202
    %v3204 = vrot.slane %v3203, 4
    %v3205 = vadd.f32 %v3203, %v3204
    %v3206 = vrot.slane %v3205, 2
    %v3207 = vadd.f32 %v3205, %v3206
    %v3208 = vrot.slane %v3207, 1
    %v3209 = vadd.f32 %v3207, %v3208
    %s3210 = vtos %v3209
    %v3211 = vstv %s3210
    %vm3212 = vcmask 0
    %3213 = vst.msk [vmem:[#allocation10] sm:$0x1] %vm3212, %v3211
    // Predicated region
    $region18: #{tpu_custom_call.1} parent=1 // pred_check
      _
    $region19: #{tpu_custom_call.1} parent=1 // pred_check_branch
      %3215 = sbr.rel (0) target = $region21
    $region20: #{tpu_custom_call.1} parent=1 // pred_region
      %s3217 = ssub.s32 16, 16
      %3218 = vsyncadd [#allocation7], %s3217
      %s3220 = sshll.u32 [#allocation10], 4
      %s3221 = int_to_ptr.vmem [resolvable:$true] %s3220
      %3223 = dma.vmem_to_hbm [thread:$0]  %s3221, 16, %s2, [#allocation7]
    $region21: #{tpu_custom_call.1} parent=1 // pred_fallthru
      _
    // Predicated region
    $region22: #{tpu_custom_call.1} parent=1 // pred_check
      _
    $region23: #{tpu_custom_call.1} parent=1 // pred_check_branch
      %3225 = sbr.rel (0) target = $region25
    $region24: #{tpu_custom_call.1} parent=1 // pred_region
      %3226 = dma.done [#allocation7], 16
    $region25: #{tpu_custom_call.1} parent=1 // pred_fallthru
      _
    %3227 = vsyncpa [#allocation6], 1
    %3228 = vsyncpa [#allocation9], 1
    %3229 = vsyncpa [#allocation7], 1

</llo_original>
